<compile_context>
chip_gen: v7x
topology: tpu7x:2x2x1
jax: 0.10.0
libtpu: 0.0.40
codegen_flags: <defaults>
</compile_context>

<pallas_src>
import functools

import jax
import jax.numpy as jnp
from jax.experimental import pallas as pl
from jax.experimental.pallas import tpu as pltpu


DIMS = [697, 512, 256, 128, 100]   # original layer dims
F_IN_PAD = 768                     # 697 padded to a lane-aligned multiple of 128
F_OUT_PAD = 128                    # last layer 100 padded to 128
LN_EPS = 1e-5


def _layer(x, w_ref, b_ref, g_ref, be_ref, n_valid):
    """One Linear -> ReLU -> LayerNorm stage, all in vregs.

    x: (B, Fin) bf16, w_ref: (Fin, Fout) bf16, b/g/be: (1, Fout) f32.
    LN statistics are computed over the first `n_valid` output columns only
    (identical to unmasked when n_valid == Fout).
    """
    y = jnp.dot(x, w_ref[...], preferred_element_type=jnp.float32)  # bf16 MXU, f32 acc
    y = y + b_ref[...]
    y = jnp.maximum(y, 0.0)

    n_total = y.shape[-1]
    inv_n = 1.0 / float(n_valid)
    if n_valid == n_total:
        mean = jnp.sum(y, axis=-1, keepdims=True) * inv_n
        c = y - mean
    else:
        mask = (jax.lax.broadcasted_iota(jnp.int32, y.shape, 1) < n_valid
                ).astype(jnp.float32)
        mean = jnp.sum(y * mask, axis=-1, keepdims=True) * inv_n
        c = (y - mean) * mask
    var = jnp.sum(c * c, axis=-1, keepdims=True) * inv_n
    normed = c * jax.lax.rsqrt(var + LN_EPS)          # EUP rsqrt, XLU reductions
    return normed * g_ref[...] + be_ref[...]


def _branch_kernel(x_ref,
                   w1_ref, b1_ref, g1_ref, be1_ref,
                   w2_ref, b2_ref, g2_ref, be2_ref,
                   w3_ref, b3_ref, g3_ref, be3_ref,
                   w4_ref, b4_ref, g4_ref, be4_ref,
                   o_ref):
    """Whole 4-layer branch for grid step i (i = 0: Exp, i = 1: Var)."""
    x = x_ref[...]                                               # (B, 768) bf16
    h = _layer(x, w1_ref, b1_ref, g1_ref, be1_ref, DIMS[1])      # (B, 512) f32
    h = _layer(h.astype(jnp.bfloat16), w2_ref, b2_ref, g2_ref, be2_ref, DIMS[2])
    h = _layer(h.astype(jnp.bfloat16), w3_ref, b3_ref, g3_ref, be3_ref, DIMS[3])
    h = _layer(h.astype(jnp.bfloat16), w4_ref, b4_ref, g4_ref, be4_ref, DIMS[4])
    o_ref[...] = h.astype(o_ref.dtype)                           # (B, 128) lane-dense store


def init_linear_params(key, fan_in, fan_out):
    """Deterministic init mimicking torch.nn.Linear default (uniform +/- 1/sqrt(fan_in))."""
    kw, kb = jax.random.split(key)
    bound = 1.0 / jnp.sqrt(jnp.float32(fan_in))
    w = jax.random.uniform(kw, (fan_in, fan_out), jnp.float32, -bound, bound)
    b = jax.random.uniform(kb, (fan_out,), jnp.float32, -bound, bound)
    return w, b


def init_cell_line_graph_params(seed=0):
    """Returns a list of 4 layer tuples, each (w, b, gamma, beta) stacked over
    the two branches and padded to the kernel's aligned shapes:
       w:    (2, Fin_pad, Fout_pad) bf16
       b/g/beta: (2, 1, Fout_pad)   f32
    """
    key = jax.random.PRNGKey(seed)
    per_branch = {"exp": [], "var": []}
    for branch in ("exp", "var"):
        for i in range(4):
            key, sub = jax.random.split(key)
            w, b = init_linear_params(sub, DIMS[i], DIMS[i + 1])
            g = jnp.ones((DIMS[i + 1],), jnp.float32)
            be = jnp.zeros((DIMS[i + 1],), jnp.float32)
            per_branch[branch].append((w, b, g, be))

    pad_in = [F_IN_PAD, DIMS[1], DIMS[2], DIMS[3]]
    pad_out = [DIMS[1], DIMS[2], DIMS[3], F_OUT_PAD]

    layers = []
    for i in range(4):
        ws, bs, gs, bes = [], [], [], []
        for branch in ("exp", "var"):
            w, b, g, be = per_branch[branch][i]
            fin, fout = w.shape
            ws.append(jnp.pad(w, ((0, pad_in[i] - fin), (0, pad_out[i] - fout))))
            bs.append(jnp.pad(b, (0, pad_out[i] - fout)))
            gs.append(jnp.pad(g, (0, pad_out[i] - fout)))
            bes.append(jnp.pad(be, (0, pad_out[i] - fout)))
        layers.append((
            jnp.stack(ws).astype(jnp.bfloat16),     # (2, Fin_pad, Fout_pad)
            jnp.stack(bs)[:, None, :],              # (2, 1, Fout_pad) f32
            jnp.stack(gs)[:, None, :],
            jnp.stack(bes)[:, None, :],
        ))
    return layers


def _param_spec(fin, fout):
    return pl.BlockSpec((None, fin, fout), lambda i: (i, 0, 0))


def _bias_spec(fout):
    return pl.BlockSpec((None, 1, fout), lambda i: (i, 0, 0))


@jax.jit
def cell_line_graph_forward(cell_line, params):
    """cell_line: (B, 697, 2) float32 -> (B, 200) float32."""
    B = cell_line.shape[0]

    # Contiguous per-branch slabs: (2, B, 697), then pad features 697 -> 768.
    x = jnp.transpose(cell_line, (2, 0, 1))
    x = jnp.pad(x, ((0, 0), (0, 0), (0, F_IN_PAD - DIMS[0])))
    x = x.astype(jnp.bfloat16)

    pad_in = [F_IN_PAD, DIMS[1], DIMS[2], DIMS[3]]
    pad_out = [DIMS[1], DIMS[2], DIMS[3], F_OUT_PAD]

    in_specs = [pl.BlockSpec((None, B, F_IN_PAD), lambda i: (i, 0, 0))]
    flat_params = []
    for li, (w, b, g, be) in enumerate(params):
        in_specs += [
            _param_spec(pad_in[li], pad_out[li]),
            _bias_spec(pad_out[li]),
            _bias_spec(pad_out[li]),
            _bias_spec(pad_out[li]),
        ]
        flat_params += [w, b, g, be]

    out = pl.pallas_call(
        _branch_kernel,
        out_shape=jax.ShapeDtypeStruct((2, B, F_OUT_PAD), jnp.float32),
        grid=(2,),
        in_specs=in_specs,
        out_specs=pl.BlockSpec((None, B, F_OUT_PAD), lambda i: (i, 0, 0)),
        compiler_params=pltpu.CompilerParams(
            dimension_semantics=("parallel",),   # branch axis -> 2 TCs on v7x
        ),
    )(x, *flat_params)

    exp = out[0, :, :DIMS[4]]   # (B, 100)
    var = out[1, :, :DIMS[4]]   # (B, 100)
    return jnp.concatenate([exp, var], axis=1)  # (B, 200)


if __name__ == "__main__":
    key = jax.random.PRNGKey(0)
    B = 2
    cell_line = jax.random.normal(key, (B, 697, 2), jnp.float32)

    params = init_cell_line_graph_params(seed=0)

    out = cell_line_graph_forward(cell_line, params)
    out = jax.block_until_ready(out)

    assert out.shape == (B, 200), out.shape
    assert out.dtype == jnp.float32, out.dtype
    assert bool(jnp.all(jnp.isfinite(out))), "non-finite output"

    print("KERNEL_OK")
</pallas_src>

<mosaic_0001>
module attributes {stable_mosaic.version = 11 : i64} {
  func.func @_branch_kernel(%arg0: i32, %arg1: memref<1x2x768xbf16, #tpu.memory_space<vmem>>, %arg2: memref<1x768x512xbf16, #tpu.memory_space<vmem>>, %arg3: memref<1x1x512xf32, #tpu.memory_space<vmem>>, %arg4: memref<1x1x512xf32, #tpu.memory_space<vmem>>, %arg5: memref<1x1x512xf32, #tpu.memory_space<vmem>>, %arg6: memref<1x512x256xbf16, #tpu.memory_space<vmem>>, %arg7: memref<1x1x256xf32, #tpu.memory_space<vmem>>, %arg8: memref<1x1x256xf32, #tpu.memory_space<vmem>>, %arg9: memref<1x1x256xf32, #tpu.memory_space<vmem>>, %arg10: memref<1x256x128xbf16, #tpu.memory_space<vmem>>, %arg11: memref<1x1x128xf32, #tpu.memory_space<vmem>>, %arg12: memref<1x1x128xf32, #tpu.memory_space<vmem>>, %arg13: memref<1x1x128xf32, #tpu.memory_space<vmem>>, %arg14: memref<1x128x128xbf16, #tpu.memory_space<vmem>>, %arg15: memref<1x1x128xf32, #tpu.memory_space<vmem>>, %arg16: memref<1x1x128xf32, #tpu.memory_space<vmem>>, %arg17: memref<1x1x128xf32, #tpu.memory_space<vmem>>, %arg18: memref<1x2x128xf32, #tpu.memory_space<vmem>>) attributes {dimension_semantics = [#tpu.dimension_semantics<parallel>], iteration_bounds = array<i64: 2>, scalar_prefetch = 0 : i64, scratch_operands = 0 : i64, tpu.core_type = #tpu.core_type<tc>, window_params = [{transform_indices = @transform_0, window_bounds = array<i64: 1, 2, 768>}, {transform_indices = @transform_1, window_bounds = array<i64: 1, 768, 512>}, {transform_indices = @transform_2, window_bounds = array<i64: 1, 1, 512>}, {transform_indices = @transform_3, window_bounds = array<i64: 1, 1, 512>}, {transform_indices = @transform_4, window_bounds = array<i64: 1, 1, 512>}, {transform_indices = @transform_5, window_bounds = array<i64: 1, 512, 256>}, {transform_indices = @transform_6, window_bounds = array<i64: 1, 1, 256>}, {transform_indices = @transform_7, window_bounds = array<i64: 1, 1, 256>}, {transform_indices = @transform_8, window_bounds = array<i64: 1, 1, 256>}, {transform_indices = @transform_9, window_bounds = array<i64: 1, 256, 128>}, {transform_indices = @transform_10, window_bounds = array<i64: 1, 1, 128>}, {transform_indices = @transform_11, window_bounds = array<i64: 1, 1, 128>}, {transform_indices = @transform_12, window_bounds = array<i64: 1, 1, 128>}, {transform_indices = @transform_13, window_bounds = array<i64: 1, 128, 128>}, {transform_indices = @transform_14, window_bounds = array<i64: 1, 1, 128>}, {transform_indices = @transform_15, window_bounds = array<i64: 1, 1, 128>}, {transform_indices = @transform_16, window_bounds = array<i64: 1, 1, 128>}, {transform_indices = @transform_17, window_bounds = array<i64: 1, 2, 128>}]} {
    %c0 = arith.constant 0 : index
    %c0_0 = arith.constant 0 : index
    %c0_1 = arith.constant 0 : index
    %0 = vector.load %arg1[%c0, %c0_0, %c0_1] : memref<1x2x768xbf16, #tpu.memory_space<vmem>>, vector<1x2x768xbf16>
    %1 = vector.shape_cast %0 : vector<1x2x768xbf16> to vector<2x768xbf16>
    %c0_2 = arith.constant 0 : index
    %c0_3 = arith.constant 0 : index
    %c0_4 = arith.constant 0 : index
    %2 = vector.load %arg2[%c0_2, %c0_3, %c0_4] : memref<1x768x512xbf16, #tpu.memory_space<vmem>>, vector<1x768x512xbf16>
    %3 = vector.shape_cast %2 : vector<1x768x512xbf16> to vector<768x512xbf16>
    %cst = arith.constant dense<0.000000e+00> : vector<2x512xf32>
    %4 = tpu.matmul %1, %3, %cst {dimension_numbers = #tpu.dot_dimension_numbers<[1], [0], [0], [1], [0, 0, 1, 1], [], []>} : vector<2x768xbf16>, vector<768x512xbf16>, vector<2x512xf32> -> vector<2x512xf32>
    %c0_5 = arith.constant 0 : index
    %c0_6 = arith.constant 0 : index
    %c0_7 = arith.constant 0 : index
    %5 = vector.load %arg3[%c0_5, %c0_6, %c0_7] : memref<1x1x512xf32, #tpu.memory_space<vmem>>, vector<1x1x512xf32>
    %6 = vector.shape_cast %5 : vector<1x1x512xf32> to vector<1x512xf32>
    %7 = vector.broadcast %6 : vector<1x512xf32> to vector<2x512xf32>
    %8 = arith.addf %4, %7 : vector<2x512xf32>
    %cst_8 = arith.constant 0.000000e+00 : f32
    %9 = vector.broadcast %cst_8 : f32 to vector<2x512xf32>
    %10 = arith.maximumf %8, %9 : vector<2x512xf32>
    %cst_9 = arith.constant dense<0.000000e+00> : vector<2xf32>
    %11 = vector.multi_reduction <add>, %10, %cst_9 [1] : vector<2x512xf32> to vector<2xf32>
    %12 = vector.shape_cast %11 : vector<2xf32> to vector<2x1xf32>
    %cst_10 = arith.constant 0.001953125 : f32
    %13 = vector.broadcast %cst_10 : f32 to vector<2x1xf32>
    %14 = arith.mulf %12, %13 : vector<2x1xf32>
    %15 = vector.broadcast %14 : vector<2x1xf32> to vector<2x512xf32>
    %16 = arith.subf %10, %15 : vector<2x512xf32>
    %17 = arith.mulf %16, %16 : vector<2x512xf32>
    %cst_11 = arith.constant dense<0.000000e+00> : vector<2xf32>
    %18 = vector.multi_reduction <add>, %17, %cst_11 [1] : vector<2x512xf32> to vector<2xf32>
    %19 = vector.shape_cast %18 : vector<2xf32> to vector<2x1xf32>
    %cst_12 = arith.constant 0.001953125 : f32
    %20 = vector.broadcast %cst_12 : f32 to vector<2x1xf32>
    %21 = arith.mulf %19, %20 : vector<2x1xf32>
    %cst_13 = arith.constant 9.99999974E-6 : f32
    %22 = vector.broadcast %cst_13 : f32 to vector<2x1xf32>
    %23 = arith.addf %21, %22 : vector<2x1xf32>
    %24 = math.rsqrt %23 : vector<2x1xf32>
    %25 = vector.broadcast %24 : vector<2x1xf32> to vector<2x512xf32>
    %26 = arith.mulf %16, %25 : vector<2x512xf32>
    %c0_14 = arith.constant 0 : index
    %c0_15 = arith.constant 0 : index
    %c0_16 = arith.constant 0 : index
    %27 = vector.load %arg4[%c0_14, %c0_15, %c0_16] : memref<1x1x512xf32, #tpu.memory_space<vmem>>, vector<1x1x512xf32>
    %28 = vector.shape_cast %27 : vector<1x1x512xf32> to vector<1x512xf32>
    %29 = vector.broadcast %28 : vector<1x512xf32> to vector<2x512xf32>
    %30 = arith.mulf %26, %29 : vector<2x512xf32>
    %c0_17 = arith.constant 0 : index
    %c0_18 = arith.constant 0 : index
    %c0_19 = arith.constant 0 : index
    %31 = vector.load %arg5[%c0_17, %c0_18, %c0_19] : memref<1x1x512xf32, #tpu.memory_space<vmem>>, vector<1x1x512xf32>
    %32 = vector.shape_cast %31 : vector<1x1x512xf32> to vector<1x512xf32>
    %33 = vector.broadcast %32 : vector<1x512xf32> to vector<2x512xf32>
    %34 = arith.addf %30, %33 : vector<2x512xf32>
    %35 = arith.truncf %34 : vector<2x512xf32> to vector<2x512xbf16>
    %c0_20 = arith.constant 0 : index
    %c0_21 = arith.constant 0 : index
    %c0_22 = arith.constant 0 : index
    %36 = vector.load %arg6[%c0_20, %c0_21, %c0_22] : memref<1x512x256xbf16, #tpu.memory_space<vmem>>, vector<1x512x256xbf16>
    %37 = vector.shape_cast %36 : vector<1x512x256xbf16> to vector<512x256xbf16>
    %cst_23 = arith.constant dense<0.000000e+00> : vector<2x256xf32>
    %38 = tpu.matmul %35, %37, %cst_23 {dimension_numbers = #tpu.dot_dimension_numbers<[1], [0], [0], [1], [0, 0, 1, 1], [], []>} : vector<2x512xbf16>, vector<512x256xbf16>, vector<2x256xf32> -> vector<2x256xf32>
    %c0_24 = arith.constant 0 : index
    %c0_25 = arith.constant 0 : index
    %c0_26 = arith.constant 0 : index
    %39 = vector.load %arg7[%c0_24, %c0_25, %c0_26] : memref<1x1x256xf32, #tpu.memory_space<vmem>>, vector<1x1x256xf32>
    %40 = vector.shape_cast %39 : vector<1x1x256xf32> to vector<1x256xf32>
    %41 = vector.broadcast %40 : vector<1x256xf32> to vector<2x256xf32>
    %42 = arith.addf %38, %41 : vector<2x256xf32>
    %cst_27 = arith.constant 0.000000e+00 : f32
    %43 = vector.broadcast %cst_27 : f32 to vector<2x256xf32>
    %44 = arith.maximumf %42, %43 : vector<2x256xf32>
    %cst_28 = arith.constant dense<0.000000e+00> : vector<2xf32>
    %45 = vector.multi_reduction <add>, %44, %cst_28 [1] : vector<2x256xf32> to vector<2xf32>
    %46 = vector.shape_cast %45 : vector<2xf32> to vector<2x1xf32>
    %cst_29 = arith.constant 3.906250e-03 : f32
    %47 = vector.broadcast %cst_29 : f32 to vector<2x1xf32>
    %48 = arith.mulf %46, %47 : vector<2x1xf32>
    %49 = vector.broadcast %48 : vector<2x1xf32> to vector<2x256xf32>
    %50 = arith.subf %44, %49 : vector<2x256xf32>
    %51 = arith.mulf %50, %50 : vector<2x256xf32>
    %cst_30 = arith.constant dense<0.000000e+00> : vector<2xf32>
    %52 = vector.multi_reduction <add>, %51, %cst_30 [1] : vector<2x256xf32> to vector<2xf32>
    %53 = vector.shape_cast %52 : vector<2xf32> to vector<2x1xf32>
    %cst_31 = arith.constant 3.906250e-03 : f32
    %54 = vector.broadcast %cst_31 : f32 to vector<2x1xf32>
    %55 = arith.mulf %53, %54 : vector<2x1xf32>
    %cst_32 = arith.constant 9.99999974E-6 : f32
    %56 = vector.broadcast %cst_32 : f32 to vector<2x1xf32>
    %57 = arith.addf %55, %56 : vector<2x1xf32>
    %58 = math.rsqrt %57 : vector<2x1xf32>
    %59 = vector.broadcast %58 : vector<2x1xf32> to vector<2x256xf32>
    %60 = arith.mulf %50, %59 : vector<2x256xf32>
    %c0_33 = arith.constant 0 : index
    %c0_34 = arith.constant 0 : index
    %c0_35 = arith.constant 0 : index
    %61 = vector.load %arg8[%c0_33, %c0_34, %c0_35] : memref<1x1x256xf32, #tpu.memory_space<vmem>>, vector<1x1x256xf32>
    %62 = vector.shape_cast %61 : vector<1x1x256xf32> to vector<1x256xf32>
    %63 = vector.broadcast %62 : vector<1x256xf32> to vector<2x256xf32>
    %64 = arith.mulf %60, %63 : vector<2x256xf32>
    %c0_36 = arith.constant 0 : index
    %c0_37 = arith.constant 0 : index
    %c0_38 = arith.constant 0 : index
    %65 = vector.load %arg9[%c0_36, %c0_37, %c0_38] : memref<1x1x256xf32, #tpu.memory_space<vmem>>, vector<1x1x256xf32>
    %66 = vector.shape_cast %65 : vector<1x1x256xf32> to vector<1x256xf32>
    %67 = vector.broadcast %66 : vector<1x256xf32> to vector<2x256xf32>
    %68 = arith.addf %64, %67 : vector<2x256xf32>
    %69 = arith.truncf %68 : vector<2x256xf32> to vector<2x256xbf16>
    %c0_39 = arith.constant 0 : index
    %c0_40 = arith.constant 0 : index
    %c0_41 = arith.constant 0 : index
    %70 = vector.load %arg10[%c0_39, %c0_40, %c0_41] : memref<1x256x128xbf16, #tpu.memory_space<vmem>>, vector<1x256x128xbf16>
    %71 = vector.shape_cast %70 : vector<1x256x128xbf16> to vector<256x128xbf16>
    %cst_42 = arith.constant dense<0.000000e+00> : vector<2x128xf32>
    %72 = tpu.matmul %69, %71, %cst_42 {dimension_numbers = #tpu.dot_dimension_numbers<[1], [0], [0], [1], [0, 0, 1, 1], [], []>} : vector<2x256xbf16>, vector<256x128xbf16>, vector<2x128xf32> -> vector<2x128xf32>
    %c0_43 = arith.constant 0 : index
    %c0_44 = arith.constant 0 : index
    %c0_45 = arith.constant 0 : index
    %73 = vector.load %arg11[%c0_43, %c0_44, %c0_45] : memref<1x1x128xf32, #tpu.memory_space<vmem>>, vector<1x1x128xf32>
    %74 = vector.shape_cast %73 : vector<1x1x128xf32> to vector<1x128xf32>
    %75 = vector.broadcast %74 : vector<1x128xf32> to vector<2x128xf32>
    %76 = arith.addf %72, %75 : vector<2x128xf32>
    %cst_46 = arith.constant 0.000000e+00 : f32
    %77 = vector.broadcast %cst_46 : f32 to vector<2x128xf32>
    %78 = arith.maximumf %76, %77 : vector<2x128xf32>
    %cst_47 = arith.constant dense<0.000000e+00> : vector<2xf32>
    %79 = vector.multi_reduction <add>, %78, %cst_47 [1] : vector<2x128xf32> to vector<2xf32>
    %80 = vector.shape_cast %79 : vector<2xf32> to vector<2x1xf32>
    %cst_48 = arith.constant 7.812500e-03 : f32
    %81 = vector.broadcast %cst_48 : f32 to vector<2x1xf32>
    %82 = arith.mulf %80, %81 : vector<2x1xf32>
    %83 = vector.broadcast %82 : vector<2x1xf32> to vector<2x128xf32>
    %84 = arith.subf %78, %83 : vector<2x128xf32>
    %85 = arith.mulf %84, %84 : vector<2x128xf32>
    %cst_49 = arith.constant dense<0.000000e+00> : vector<2xf32>
    %86 = vector.multi_reduction <add>, %85, %cst_49 [1] : vector<2x128xf32> to vector<2xf32>
    %87 = vector.shape_cast %86 : vector<2xf32> to vector<2x1xf32>
    %cst_50 = arith.constant 7.812500e-03 : f32
    %88 = vector.broadcast %cst_50 : f32 to vector<2x1xf32>
    %89 = arith.mulf %87, %88 : vector<2x1xf32>
    %cst_51 = arith.constant 9.99999974E-6 : f32
    %90 = vector.broadcast %cst_51 : f32 to vector<2x1xf32>
    %91 = arith.addf %89, %90 : vector<2x1xf32>
    %92 = math.rsqrt %91 : vector<2x1xf32>
    %93 = vector.broadcast %92 : vector<2x1xf32> to vector<2x128xf32>
    %94 = arith.mulf %84, %93 : vector<2x128xf32>
    %c0_52 = arith.constant 0 : index
    %c0_53 = arith.constant 0 : index
    %c0_54 = arith.constant 0 : index
    %95 = vector.load %arg12[%c0_52, %c0_53, %c0_54] : memref<1x1x128xf32, #tpu.memory_space<vmem>>, vector<1x1x128xf32>
    %96 = vector.shape_cast %95 : vector<1x1x128xf32> to vector<1x128xf32>
    %97 = vector.broadcast %96 : vector<1x128xf32> to vector<2x128xf32>
    %98 = arith.mulf %94, %97 : vector<2x128xf32>
    %c0_55 = arith.constant 0 : index
    %c0_56 = arith.constant 0 : index
    %c0_57 = arith.constant 0 : index
    %99 = vector.load %arg13[%c0_55, %c0_56, %c0_57] : memref<1x1x128xf32, #tpu.memory_space<vmem>>, vector<1x1x128xf32>
    %100 = vector.shape_cast %99 : vector<1x1x128xf32> to vector<1x128xf32>
    %101 = vector.broadcast %100 : vector<1x128xf32> to vector<2x128xf32>
    %102 = arith.addf %98, %101 : vector<2x128xf32>
    %103 = arith.truncf %102 : vector<2x128xf32> to vector<2x128xbf16>
    %c0_58 = arith.constant 0 : index
    %c0_59 = arith.constant 0 : index
    %c0_60 = arith.constant 0 : index
    %104 = vector.load %arg14[%c0_58, %c0_59, %c0_60] : memref<1x128x128xbf16, #tpu.memory_space<vmem>>, vector<1x128x128xbf16>
    %105 = vector.shape_cast %104 : vector<1x128x128xbf16> to vector<128x128xbf16>
    %cst_61 = arith.constant dense<0.000000e+00> : vector<2x128xf32>
    %106 = tpu.matmul %103, %105, %cst_61 {dimension_numbers = #tpu.dot_dimension_numbers<[1], [0], [0], [1], [0, 0, 1, 1], [], []>} : vector<2x128xbf16>, vector<128x128xbf16>, vector<2x128xf32> -> vector<2x128xf32>
    %c0_62 = arith.constant 0 : index
    %c0_63 = arith.constant 0 : index
    %c0_64 = arith.constant 0 : index
    %107 = vector.load %arg15[%c0_62, %c0_63, %c0_64] : memref<1x1x128xf32, #tpu.memory_space<vmem>>, vector<1x1x128xf32>
    %108 = vector.shape_cast %107 : vector<1x1x128xf32> to vector<1x128xf32>
    %109 = vector.broadcast %108 : vector<1x128xf32> to vector<2x128xf32>
    %110 = arith.addf %106, %109 : vector<2x128xf32>
    %cst_65 = arith.constant 0.000000e+00 : f32
    %111 = vector.broadcast %cst_65 : f32 to vector<2x128xf32>
    %112 = arith.maximumf %110, %111 : vector<2x128xf32>
    %113 = tpu.iota {dimensions = array<i32: 1>} : vector<2x128xi32>
    %c100_i32 = arith.constant 100 : i32
    %114 = vector.broadcast %c100_i32 : i32 to vector<2x128xi32>
    %115 = arith.cmpi slt, %113, %114 : vector<2x128xi32>
    %116 = arith.extui %115 : vector<2x128xi1> to vector<2x128xi32>
    %117 = arith.sitofp %116 : vector<2x128xi32> to vector<2x128xf32>
    %118 = arith.mulf %112, %117 : vector<2x128xf32>
    %cst_66 = arith.constant dense<0.000000e+00> : vector<2xf32>
    %119 = vector.multi_reduction <add>, %118, %cst_66 [1] : vector<2x128xf32> to vector<2xf32>
    %120 = vector.shape_cast %119 : vector<2xf32> to vector<2x1xf32>
    %cst_67 = arith.constant 0.00999999977 : f32
    %121 = vector.broadcast %cst_67 : f32 to vector<2x1xf32>
    %122 = arith.mulf %120, %121 : vector<2x1xf32>
    %123 = vector.broadcast %122 : vector<2x1xf32> to vector<2x128xf32>
    %124 = arith.subf %112, %123 : vector<2x128xf32>
    %125 = arith.mulf %124, %117 : vector<2x128xf32>
    %126 = arith.mulf %125, %125 : vector<2x128xf32>
    %cst_68 = arith.constant dense<0.000000e+00> : vector<2xf32>
    %127 = vector.multi_reduction <add>, %126, %cst_68 [1] : vector<2x128xf32> to vector<2xf32>
    %128 = vector.shape_cast %127 : vector<2xf32> to vector<2x1xf32>
    %cst_69 = arith.constant 0.00999999977 : f32
    %129 = vector.broadcast %cst_69 : f32 to vector<2x1xf32>
    %130 = arith.mulf %128, %129 : vector<2x1xf32>
    %cst_70 = arith.constant 9.99999974E-6 : f32
    %131 = vector.broadcast %cst_70 : f32 to vector<2x1xf32>
    %132 = arith.addf %130, %131 : vector<2x1xf32>
    %133 = math.rsqrt %132 : vector<2x1xf32>
    %134 = vector.broadcast %133 : vector<2x1xf32> to vector<2x128xf32>
    %135 = arith.mulf %125, %134 : vector<2x128xf32>
    %c0_71 = arith.constant 0 : index
    %c0_72 = arith.constant 0 : index
    %c0_73 = arith.constant 0 : index
    %136 = vector.load %arg16[%c0_71, %c0_72, %c0_73] : memref<1x1x128xf32, #tpu.memory_space<vmem>>, vector<1x1x128xf32>
    %137 = vector.shape_cast %136 : vector<1x1x128xf32> to vector<1x128xf32>
    %138 = vector.broadcast %137 : vector<1x128xf32> to vector<2x128xf32>
    %139 = arith.mulf %135, %138 : vector<2x128xf32>
    %c0_74 = arith.constant 0 : index
    %c0_75 = arith.constant 0 : index
    %c0_76 = arith.constant 0 : index
    %140 = vector.load %arg17[%c0_74, %c0_75, %c0_76] : memref<1x1x128xf32, #tpu.memory_space<vmem>>, vector<1x1x128xf32>
    %141 = vector.shape_cast %140 : vector<1x1x128xf32> to vector<1x128xf32>
    %142 = vector.broadcast %141 : vector<1x128xf32> to vector<2x128xf32>
    %143 = arith.addf %139, %142 : vector<2x128xf32>
    %c0_77 = arith.constant 0 : index
    %c0_78 = arith.constant 0 : index
    %c0_79 = arith.constant 0 : index
    %144 = vector.load %arg18[%c0_77, %c0_78, %c0_79] : memref<1x2x128xf32, #tpu.memory_space<vmem>>, vector<1x2x128xf32>
    %145 = vector.shape_cast %144 : vector<1x2x128xf32> to vector<2x128xf32>
    %146 = vector.shape_cast %143 : vector<2x128xf32> to vector<1x2x128xf32>
    tpu.vector_store %arg18[%c0_77, %c0_78, %c0_79], %146 {strides = array<i32>} : memref<1x2x128xf32, #tpu.memory_space<vmem>>, vector<1x2x128xf32>,
    return
  }
  func.func @transform_0(%arg0: i32) -> (i32, i32, i32) {
    %c0_i32 = arith.constant 0 : i32
    %c0_i32_0 = arith.constant 0 : i32
    %c0_i32_1 = arith.constant 0 : i32
    return %arg0, %c0_i32, %c0_i32_0 : i32, i32, i32
  }
  func.func @transform_1(%arg0: i32) -> (i32, i32, i32) {
    %c0_i32 = arith.constant 0 : i32
    %c0_i32_0 = arith.constant 0 : i32
    %c0_i32_1 = arith.constant 0 : i32
    return %arg0, %c0_i32, %c0_i32_0 : i32, i32, i32
  }
  func.func @transform_2(%arg0: i32) -> (i32, i32, i32) {
    %c0_i32 = arith.constant 0 : i32
    %c0_i32_0 = arith.constant 0 : i32
    %c0_i32_1 = arith.constant 0 : i32
    return %arg0, %c0_i32, %c0_i32_0 : i32, i32, i32
  }
  func.func @transform_3(%arg0: i32) -> (i32, i32, i32) {
    %c0_i32 = arith.constant 0 : i32
    %c0_i32_0 = arith.constant 0 : i32
    %c0_i32_1 = arith.constant 0 : i32
    return %arg0, %c0_i32, %c0_i32_0 : i32, i32, i32
  }
  func.func @transform_4(%arg0: i32) -> (i32, i32, i32) {
    %c0_i32 = arith.constant 0 : i32
    %c0_i32_0 = arith.constant 0 : i32
    %c0_i32_1 = arith.constant 0 : i32
    return %arg0, %c0_i32, %c0_i32_0 : i32, i32, i32
  }
  func.func @transform_5(%arg0: i32) -> (i32, i32, i32) {
    %c0_i32 = arith.constant 0 : i32
    %c0_i32_0 = arith.constant 0 : i32
    %c0_i32_1 = arith.constant 0 : i32
    return %arg0, %c0_i32, %c0_i32_0 : i32, i32, i32
  }
  func.func @transform_6(%arg0: i32) -> (i32, i32, i32) {
    %c0_i32 = arith.constant 0 : i32
    %c0_i32_0 = arith.constant 0 : i32
    %c0_i32_1 = arith.constant 0 : i32
    return %arg0, %c0_i32, %c0_i32_0 : i32, i32, i32
  }
  func.func @transform_7(%arg0: i32) -> (i32, i32, i32) {
    %c0_i32 = arith.constant 0 : i32
    %c0_i32_0 = arith.constant 0 : i32
    %c0_i32_1 = arith.constant 0 : i32
    return %arg0, %c0_i32, %c0_i32_0 : i32, i32, i32
  }
  func.func @transform_8(%arg0: i32) -> (i32, i32, i32) {
    %c0_i32 = arith.constant 0 : i32
    %c0_i32_0 = arith.constant 0 : i32
    %c0_i32_1 = arith.constant 0 : i32
    return %arg0, %c0_i32, %c0_i32_0 : i32, i32, i32
  }
  func.func @transform_9(%arg0: i32) -> (i32, i32, i32) {
    %c0_i32 = arith.constant 0 : i32
    %c0_i32_0 = arith.constant 0 : i32
    %c0_i32_1 = arith.constant 0 : i32
    return %arg0, %c0_i32, %c0_i32_0 : i32, i32, i32
  }
  func.func @transform_10(%arg0: i32) -> (i32, i32, i32) {
    %c0_i32 = arith.constant 0 : i32
    %c0_i32_0 = arith.constant 0 : i32
    %c0_i32_1 = arith.constant 0 : i32
    return %arg0, %c0_i32, %c0_i32_0 : i32, i32, i32
  }
  func.func @transform_11(%arg0: i32) -> (i32, i32, i32) {
    %c0_i32 = arith.constant 0 : i32
    %c0_i32_0 = arith.constant 0 : i32
    %c0_i32_1 = arith.constant 0 : i32
    return %arg0, %c0_i32, %c0_i32_0 : i32, i32, i32
  }
  func.func @transform_12(%arg0: i32) -> (i32, i32, i32) {
    %c0_i32 = arith.constant 0 : i32
    %c0_i32_0 = arith.constant 0 : i32
    %c0_i32_1 = arith.constant 0 : i32
    return %arg0, %c0_i32, %c0_i32_0 : i32, i32, i32
  }
  func.func @transform_13(%arg0: i32) -> (i32, i32, i32) {
    %c0_i32 = arith.constant 0 : i32
    %c0_i32_0 = arith.constant 0 : i32
    %c0_i32_1 = arith.constant 0 : i32
    return %arg0, %c0_i32, %c0_i32_0 : i32, i32, i32
  }
  func.func @transform_14(%arg0: i32) -> (i32, i32, i32) {
    %c0_i32 = arith.constant 0 : i32
    %c0_i32_0 = arith.constant 0 : i32
    %c0_i32_1 = arith.constant 0 : i32
    return %arg0, %c0_i32, %c0_i32_0 : i32, i32, i32
  }
  func.func @transform_15(%arg0: i32) -> (i32, i32, i32) {
    %c0_i32 = arith.constant 0 : i32
    %c0_i32_0 = arith.constant 0 : i32
    %c0_i32_1 = arith.constant 0 : i32
    return %arg0, %c0_i32, %c0_i32_0 : i32, i32, i32
  }
  func.func @transform_16(%arg0: i32) -> (i32, i32, i32) {
    %c0_i32 = arith.constant 0 : i32
    %c0_i32_0 = arith.constant 0 : i32
    %c0_i32_1 = arith.constant 0 : i32
    return %arg0, %c0_i32, %c0_i32_0 : i32, i32, i32
  }
  func.func @transform_17(%arg0: i32) -> (i32, i32, i32) {
    %c0_i32 = arith.constant 0 : i32
    %c0_i32_0 = arith.constant 0 : i32
    %c0_i32_1 = arith.constant 0 : i32
    return %arg0, %c0_i32, %c0_i32_0 : i32, i32, i32
  }
}

</mosaic_0001>

<llo_original>
// kernel: cell_line_graph_forward.1
$region0: #{cell_line_graph_forward.1}
  #allocation0 [shape = 'u32[]', space=smem, size = 0x4, offset = 0x4, fixed_abs, tag = 'smem constant byte address 0x4 - core index']
  #allocation1 [shape = 'u32[144,128]{1,0:T(1,128)}', space=vmem, size = 0x12000, scoped, tag = 'internal scratch']
  %s0 = inlined_call_operand.vmem [shape: bf16[2,2,768], index: 0, kind: input, shape index: {}]
  %s1 = inlined_call_operand.hbm [shape: bf16[2,768,512], index: 1, kind: input, shape index: {}]
  %s2 = inlined_call_operand.hbm [shape: f32[2,1,512], index: 2, kind: input, shape index: {}]
  %s3 = inlined_call_operand.hbm [shape: f32[2,1,512], index: 3, kind: input, shape index: {}]
  %s4 = inlined_call_operand.hbm [shape: f32[2,1,512], index: 4, kind: input, shape index: {}]
  %s5 = inlined_call_operand.hbm [shape: bf16[2,512,256], index: 5, kind: input, shape index: {}]
  %s6 = inlined_call_operand.hbm [shape: f32[2,1,256], index: 6, kind: input, shape index: {}]
  %s7 = inlined_call_operand.hbm [shape: f32[2,1,256], index: 7, kind: input, shape index: {}]
  %s8 = inlined_call_operand.hbm [shape: f32[2,1,256], index: 8, kind: input, shape index: {}]
  %s9 = inlined_call_operand.hbm [shape: bf16[2,256,128], index: 9, kind: input, shape index: {}]
  %s10 = inlined_call_operand.hbm [shape: f32[2,1,128], index: 10, kind: input, shape index: {}]
  %s11 = inlined_call_operand.hbm [shape: f32[2,1,128], index: 11, kind: input, shape index: {}]
  %s12 = inlined_call_operand.hbm [shape: f32[2,1,128], index: 12, kind: input, shape index: {}]
  %s13 = inlined_call_operand.hbm [shape: bf16[2,128,128], index: 13, kind: input, shape index: {}]
  %s14 = inlined_call_operand.hbm [shape: f32[2,1,128], index: 14, kind: input, shape index: {}]
  %s15 = inlined_call_operand.hbm [shape: f32[2,1,128], index: 15, kind: input, shape index: {}]
  %s16 = inlined_call_operand.hbm [shape: f32[2,1,128], index: 16, kind: input, shape index: {}]
  %s17 = inlined_call_operand.vmem [shape: f32[2,2,128], index: 17, kind: output, shape index: {}]
  %s18 = sld [smem:[#allocation0]]
  $region165: #{cell_line_graph_forward.1} parent=0
    _
  %s20 = ssub.s32 1, %s18
  %s21 = scalar_select 0, %s20, %s18
  $region1: #{cell_line_graph_forward.1} parent=0
    #allocation2 [shape = 'u8[1572864]{0}', space=vmem, size = 0x180000, scoped, tag = 'input window, operand 1']
    #allocation3 [shape = 's32[2]{0}', space=sflag, size = 0x8, scoped, tag = 'scoped memory for cell_line_graph_forward.1']
    #allocation4 [shape = 'u8[4096]{0}', space=vmem, size = 0x1000, scoped, tag = 'input window, operand 2']
    #allocation5 [shape = 's32[2]{0}', space=sflag, size = 0x8, scoped, tag = 'scoped memory for cell_line_graph_forward.1']
    #allocation6 [shape = 'u8[4096]{0}', space=vmem, size = 0x1000, scoped, tag = 'input window, operand 3']
    #allocation7 [shape = 'u8[4096]{0}', space=vmem, size = 0x1000, scoped, tag = 'input window, operand 4']
    #allocation8 [shape = 's32[2]{0}', space=sflag, size = 0x8, scoped, tag = 'scoped memory for cell_line_graph_forward.1']
    #allocation9 [shape = 'u8[524288]{0}', space=vmem, size = 0x80000, scoped, tag = 'input window, operand 5']
    #allocation10 [shape = 'u8[2048]{0}', space=vmem, size = 0x800, scoped, tag = 'input window, operand 6']
    #allocation11 [shape = 's32[2]{0}', space=sflag, size = 0x8, scoped, tag = 'scoped memory for cell_line_graph_forward.1']
    #allocation12 [shape = 'u8[2048]{0}', space=vmem, size = 0x800, scoped, tag = 'input window, operand 7']
    #allocation13 [shape = 'u8[2048]{0}', space=vmem, size = 0x800, scoped, tag = 'input window, operand 8']
    #allocation14 [shape = 's32[2]{0}', space=sflag, size = 0x8, scoped, tag = 'scoped memory for cell_line_graph_forward.1']
    #allocation15 [shape = 'u8[131072]{0}', space=vmem, size = 0x20000, scoped, tag = 'input window, operand 9']
    #allocation16 [shape = 'u8[1024]{0}', space=vmem, size = 0x400, scoped, tag = 'input window, operand 10']
    #allocation17 [shape = 's32[2]{0}', space=sflag, size = 0x8, scoped, tag = 'scoped memory for cell_line_graph_forward.1']
    #allocation18 [shape = 'u8[1024]{0}', space=vmem, size = 0x400, scoped, tag = 'input window, operand 11']
    #allocation19 [shape = 'u8[1024]{0}', space=vmem, size = 0x400, scoped, tag = 'input window, operand 12']
    #allocation20 [shape = 's32[2]{0}', space=sflag, size = 0x8, scoped, tag = 'scoped memory for cell_line_graph_forward.1']
    #allocation21 [shape = 'u8[65536]{0}', space=vmem, size = 0x10000, scoped, tag = 'input window, operand 13']
    #allocation22 [shape = 'u8[1024]{0}', space=vmem, size = 0x400, scoped, tag = 'input window, operand 14']
    #allocation23 [shape = 's32[2]{0}', space=sflag, size = 0x8, scoped, tag = 'scoped memory for cell_line_graph_forward.1']
    #allocation24 [shape = 'u8[1024]{0}', space=vmem, size = 0x400, scoped, tag = 'input window, operand 15']
    #allocation25 [shape = 'u8[1024]{0}', space=vmem, size = 0x400, scoped, tag = 'input window, operand 16']
    #allocation26 [shape = 's32[2]{0}', space=sflag, size = 0x8, scoped, tag = 'scoped memory for cell_line_graph_forward.1']
    %22 = vsyncpa [#allocation3], 0
    %s23 = scalar_lea.sflag [#allocation3], 1
    %24 = vsyncpa %s23, 0
    %25 = vsyncpa [#allocation5], 0
    %s26 = scalar_lea.sflag [#allocation5], 1
    %27 = vsyncpa %s26, 0
    %28 = vsyncpa [#allocation8], 0
    %s29 = scalar_lea.sflag [#allocation8], 1
    %30 = vsyncpa %s29, 0
    %31 = vsyncpa [#allocation11], 0
    %s32 = scalar_lea.sflag [#allocation11], 1
    %33 = vsyncpa %s32, 0
    %34 = vsyncpa [#allocation14], 0
    %s35 = scalar_lea.sflag [#allocation14], 1
    %36 = vsyncpa %s35, 0
    %37 = vsyncpa [#allocation17], 0
    %s38 = scalar_lea.sflag [#allocation17], 1
    %39 = vsyncpa %s38, 0
    %40 = vsyncpa [#allocation20], 0
    %s41 = scalar_lea.sflag [#allocation20], 1
    %42 = vsyncpa %s41, 0
    %43 = vsyncpa [#allocation23], 0
    %s44 = scalar_lea.sflag [#allocation23], 1
    %45 = vsyncpa %s44, 0
    %46 = vsyncpa [#allocation26], 0
    %s47 = scalar_lea.sflag [#allocation26], 1
    %48 = vsyncpa %s47, 0
    loop: start=0, step=1, limit=4
    $region2: #{cell_line_graph_forward.1} parent=1 // loop_pre_header
      _
    $region3: #{cell_line_graph_forward.1} parent=1 // loop_header
      %s50 = sphi 0, %s54
      %p51 = scmp.ge.s32.totalorder %s50, 4
      %s60 = sphi 0, %s62
      %s63 = sphi 0, %s60
      %s64 = sphi 0, %s63
      %s80 = sphi 0, %s64
      %s86 = sphi 0, %s88
      %s89 = sphi 0, %s86
      %s90 = sphi 0, %s89
      %s106 = sphi 0, %s90
      %s112 = sphi 0, %s114
      %s115 = sphi 0, %s112
      %s116 = sphi 0, %s115
      %s132 = sphi 0, %s116
      %s138 = sphi 0, %s140
      %s141 = sphi 0, %s138
      %s142 = sphi 0, %s141
      %s158 = sphi 0, %s142
      %s164 = sphi 0, %s166
      %s167 = sphi 0, %s164
      %s168 = sphi 0, %s167
      %s184 = sphi 0, %s168
      %s190 = sphi 0, %s192
      %s193 = sphi 0, %s190
      %s194 = sphi 0, %s193
      %s210 = sphi 0, %s194
      %s216 = sphi 0, %s218
      %s219 = sphi 0, %s216
      %s220 = sphi 0, %s219
      %s236 = sphi 0, %s220
      %s242 = sphi 0, %s244
      %s245 = sphi 0, %s242
      %s246 = sphi 0, %s245
      %s262 = sphi 0, %s246
      %s268 = sphi 0, %s270
      %s271 = sphi 0, %s268
      %s272 = sphi 0, %s271
      %s288 = sphi 0, %s272
      %s294 = sphi 0, %s296
      %s297 = sphi 0, %s294
      %s298 = sphi 0, %s297
      %s314 = sphi 0, %s298
      %s320 = sphi 0, %s322
      %s323 = sphi 0, %s320
      %s324 = sphi 0, %s323
      %s340 = sphi 0, %s324
      %s346 = sphi 0, %s348
      %s349 = sphi 0, %s346
      %s350 = sphi 0, %s349
      %s366 = sphi 0, %s350
      %s372 = sphi 0, %s374
      %s375 = sphi 0, %s372
      %s376 = sphi 0, %s375
      %s392 = sphi 0, %s376
      %s398 = sphi 0, %s400
      %s401 = sphi 0, %s398
      %s402 = sphi 0, %s401
      %s418 = sphi 0, %s402
      %s424 = sphi 0, %s426
      %s427 = sphi 0, %s424
      %s428 = sphi 0, %s427
      %s444 = sphi 0, %s428
      %s450 = sphi 0, %s452
      %s453 = sphi 0, %s450
      %s454 = sphi 0, %s453
      %s470 = sphi 0, %s454
      %s476 = sphi 0, %s478
      %s479 = sphi 0, %s476
      %s480 = sphi 0, %s479
      %s496 = sphi 0, %s480
      %s502 = sphi 0, %s504
      %s505 = sphi 0, %s502
      %s506 = sphi 0, %s505
      %s522 = sphi 0, %s506
    $region4: #{cell_line_graph_forward.1} parent=1 // loop_header_branch
      %53 = sbr.rel (%p51) target = $region8
    $region5: #{cell_line_graph_forward.1} parent=1 // loop_body
      %s55 = ssub.s32 %s50, 1
      %s56 = ssub.s32 %s50, 2
      %s57 = sadd.s32 %s50, 1
      %s58 = ssub.s32 %s50, %s57
      %p59 = scmp.eq.s32.totalorder %s58, 0
      %s61 = sadd.s32 %s60, 1
      %s62 = scalar_select %p59, %s60, %s61
      %p65 = pneg %p59
      %p66 = scmp.eq.s32.totalorder %s50, 1
      %p67 = por %p65, %p66
      %p68 = scmp.ne.s32.totalorder %s60, %s63
      %p69 = scmp.eq.s32.totalorder %s50, 0
      %p70 = por %p68, %p69
      %p71 = scmp.ne.s32.totalorder %s60, %s63
      %p72 = scmp.eq.s32.totalorder %s55, 1
      %p73 = por %p71, %p72
      %p74 = scmp.ne.s32.totalorder %s63, %s64
      %p75 = scmp.eq.s32.totalorder %s55, 0
      %p76 = por %p74, %p75
      %p77 = scmp.ne.s32.totalorder %s63, %s64
      %p78 = scmp.eq.s32.totalorder %s56, 1
      %p79 = por %p77, %p78
      %p81 = scmp.ne.s32.totalorder %s64, %s80
      %p82 = scmp.eq.s32.totalorder %s56, 0
      %p83 = por %p81, %p82
      %s84 = ssub.s32 %s50, %s57
      %p85 = scmp.eq.s32.totalorder %s84, 0
      %s87 = sadd.s32 %s86, 1
      %s88 = scalar_select %p85, %s86, %s87
      %p91 = pneg %p85
      %p92 = scmp.eq.s32.totalorder %s50, 1
      %p93 = por %p91, %p92
      %p94 = scmp.ne.s32.totalorder %s86, %s89
      %p95 = scmp.eq.s32.totalorder %s50, 0
      %p96 = por %p94, %p95
      %p97 = scmp.ne.s32.totalorder %s86, %s89
      %p98 = scmp.eq.s32.totalorder %s55, 1
      %p99 = por %p97, %p98
      %p100 = scmp.ne.s32.totalorder %s89, %s90
      %p101 = scmp.eq.s32.totalorder %s55, 0
      %p102 = por %p100, %p101
      %p103 = scmp.ne.s32.totalorder %s89, %s90
      %p104 = scmp.eq.s32.totalorder %s56, 1
      %p105 = por %p103, %p104
      %p107 = scmp.ne.s32.totalorder %s90, %s106
      %p108 = scmp.eq.s32.totalorder %s56, 0
      %p109 = por %p107, %p108
      %s110 = ssub.s32 %s50, %s57
      %p111 = scmp.eq.s32.totalorder %s110, 0
      %s113 = sadd.s32 %s112, 1
      %s114 = scalar_select %p111, %s112, %s113
      %p117 = pneg %p111
      %p118 = scmp.eq.s32.totalorder %s50, 1
      %p119 = por %p117, %p118
      %p120 = scmp.ne.s32.totalorder %s112, %s115
      %p121 = scmp.eq.s32.totalorder %s50, 0
      %p122 = por %p120, %p121
      %p123 = scmp.ne.s32.totalorder %s112, %s115
      %p124 = scmp.eq.s32.totalorder %s55, 1
      %p125 = por %p123, %p124
      %p126 = scmp.ne.s32.totalorder %s115, %s116
      %p127 = scmp.eq.s32.totalorder %s55, 0
      %p128 = por %p126, %p127
      %p129 = scmp.ne.s32.totalorder %s115, %s116
      %p130 = scmp.eq.s32.totalorder %s56, 1
      %p131 = por %p129, %p130
      %p133 = scmp.ne.s32.totalorder %s116, %s132
      %p134 = scmp.eq.s32.totalorder %s56, 0
      %p135 = por %p133, %p134
      %s136 = ssub.s32 %s50, %s57
      %p137 = scmp.eq.s32.totalorder %s136, 0
      %s139 = sadd.s32 %s138, 1
      %s140 = scalar_select %p137, %s138, %s139
      %p143 = pneg %p137
      %p144 = scmp.eq.s32.totalorder %s50, 1
      %p145 = por %p143, %p144
      %p146 = scmp.ne.s32.totalorder %s138, %s141
      %p147 = scmp.eq.s32.totalorder %s50, 0
      %p148 = por %p146, %p147
      %p149 = scmp.ne.s32.totalorder %s138, %s141
      %p150 = scmp.eq.s32.totalorder %s55, 1
      %p151 = por %p149, %p150
      %p152 = scmp.ne.s32.totalorder %s141, %s142
      %p153 = scmp.eq.s32.totalorder %s55, 0
      %p154 = por %p152, %p153
      %p155 = scmp.ne.s32.totalorder %s141, %s142
      %p156 = scmp.eq.s32.totalorder %s56, 1
      %p157 = por %p155, %p156
      %p159 = scmp.ne.s32.totalorder %s142, %s158
      %p160 = scmp.eq.s32.totalorder %s56, 0
      %p161 = por %p159, %p160
      %s162 = ssub.s32 %s50, %s57
      %p163 = scmp.eq.s32.totalorder %s162, 0
      %s165 = sadd.s32 %s164, 1
      %s166 = scalar_select %p163, %s164, %s165
      %p169 = pneg %p163
      %p170 = scmp.eq.s32.totalorder %s50, 1
      %p171 = por %p169, %p170
      %p172 = scmp.ne.s32.totalorder %s164, %s167
      %p173 = scmp.eq.s32.totalorder %s50, 0
      %p174 = por %p172, %p173
      %p175 = scmp.ne.s32.totalorder %s164, %s167
      %p176 = scmp.eq.s32.totalorder %s55, 1
      %p177 = por %p175, %p176
      %p178 = scmp.ne.s32.totalorder %s167, %s168
      %p179 = scmp.eq.s32.totalorder %s55, 0
      %p180 = por %p178, %p179
      %p181 = scmp.ne.s32.totalorder %s167, %s168
      %p182 = scmp.eq.s32.totalorder %s56, 1
      %p183 = por %p181, %p182
      %p185 = scmp.ne.s32.totalorder %s168, %s184
      %p186 = scmp.eq.s32.totalorder %s56, 0
      %p187 = por %p185, %p186
      %s188 = ssub.s32 %s50, %s57
      %p189 = scmp.eq.s32.totalorder %s188, 0
      %s191 = sadd.s32 %s190, 1
      %s192 = scalar_select %p189, %s190, %s191
      %p195 = pneg %p189
      %p196 = scmp.eq.s32.totalorder %s50, 1
      %p197 = por %p195, %p196
      %p198 = scmp.ne.s32.totalorder %s190, %s193
      %p199 = scmp.eq.s32.totalorder %s50, 0
      %p200 = por %p198, %p199
      %p201 = scmp.ne.s32.totalorder %s190, %s193
      %p202 = scmp.eq.s32.totalorder %s55, 1
      %p203 = por %p201, %p202
      %p204 = scmp.ne.s32.totalorder %s193, %s194
      %p205 = scmp.eq.s32.totalorder %s55, 0
      %p206 = por %p204, %p205
      %p207 = scmp.ne.s32.totalorder %s193, %s194
      %p208 = scmp.eq.s32.totalorder %s56, 1
      %p209 = por %p207, %p208
      %p211 = scmp.ne.s32.totalorder %s194, %s210
      %p212 = scmp.eq.s32.totalorder %s56, 0
      %p213 = por %p211, %p212
      %s214 = ssub.s32 %s50, %s57
      %p215 = scmp.eq.s32.totalorder %s214, 0
      %s217 = sadd.s32 %s216, 1
      %s218 = scalar_select %p215, %s216, %s217
      %p221 = pneg %p215
      %p222 = scmp.eq.s32.totalorder %s50, 1
      %p223 = por %p221, %p222
      %p224 = scmp.ne.s32.totalorder %s216, %s219
      %p225 = scmp.eq.s32.totalorder %s50, 0
      %p226 = por %p224, %p225
      %p227 = scmp.ne.s32.totalorder %s216, %s219
      %p228 = scmp.eq.s32.totalorder %s55, 1
      %p229 = por %p227, %p228
      %p230 = scmp.ne.s32.totalorder %s219, %s220
      %p231 = scmp.eq.s32.totalorder %s55, 0
      %p232 = por %p230, %p231
      %p233 = scmp.ne.s32.totalorder %s219, %s220
      %p234 = scmp.eq.s32.totalorder %s56, 1
      %p235 = por %p233, %p234
      %p237 = scmp.ne.s32.totalorder %s220, %s236
      %p238 = scmp.eq.s32.totalorder %s56, 0
      %p239 = por %p237, %p238
      %s240 = ssub.s32 %s50, %s57
      %p241 = scmp.eq.s32.totalorder %s240, 0
      %s243 = sadd.s32 %s242, 1
      %s244 = scalar_select %p241, %s242, %s243
      %p247 = pneg %p241
      %p248 = scmp.eq.s32.totalorder %s50, 1
      %p249 = por %p247, %p248
      %p250 = scmp.ne.s32.totalorder %s242, %s245
      %p251 = scmp.eq.s32.totalorder %s50, 0
      %p252 = por %p250, %p251
      %p253 = scmp.ne.s32.totalorder %s242, %s245
      %p254 = scmp.eq.s32.totalorder %s55, 1
      %p255 = por %p253, %p254
      %p256 = scmp.ne.s32.totalorder %s245, %s246
      %p257 = scmp.eq.s32.totalorder %s55, 0
      %p258 = por %p256, %p257
      %p259 = scmp.ne.s32.totalorder %s245, %s246
      %p260 = scmp.eq.s32.totalorder %s56, 1
      %p261 = por %p259, %p260
      %p263 = scmp.ne.s32.totalorder %s246, %s262
      %p264 = scmp.eq.s32.totalorder %s56, 0
      %p265 = por %p263, %p264
      %s266 = ssub.s32 %s50, %s57
      %p267 = scmp.eq.s32.totalorder %s266, 0
      %s269 = sadd.s32 %s268, 1
      %s270 = scalar_select %p267, %s268, %s269
      %p273 = pneg %p267
      %p274 = scmp.eq.s32.totalorder %s50, 1
      %p275 = por %p273, %p274
      %p276 = scmp.ne.s32.totalorder %s268, %s271
      %p277 = scmp.eq.s32.totalorder %s50, 0
      %p278 = por %p276, %p277
      %p279 = scmp.ne.s32.totalorder %s268, %s271
      %p280 = scmp.eq.s32.totalorder %s55, 1
      %p281 = por %p279, %p280
      %p282 = scmp.ne.s32.totalorder %s271, %s272
      %p283 = scmp.eq.s32.totalorder %s55, 0
      %p284 = por %p282, %p283
      %p285 = scmp.ne.s32.totalorder %s271, %s272
      %p286 = scmp.eq.s32.totalorder %s56, 1
      %p287 = por %p285, %p286
      %p289 = scmp.ne.s32.totalorder %s272, %s288
      %p290 = scmp.eq.s32.totalorder %s56, 0
      %p291 = por %p289, %p290
      %s292 = ssub.s32 %s50, %s57
      %p293 = scmp.eq.s32.totalorder %s292, 0
      %s295 = sadd.s32 %s294, 1
      %s296 = scalar_select %p293, %s294, %s295
      %p299 = pneg %p293
      %p300 = scmp.eq.s32.totalorder %s50, 1
      %p301 = por %p299, %p300
      %p302 = scmp.ne.s32.totalorder %s294, %s297
      %p303 = scmp.eq.s32.totalorder %s50, 0
      %p304 = por %p302, %p303
      %p305 = scmp.ne.s32.totalorder %s294, %s297
      %p306 = scmp.eq.s32.totalorder %s55, 1
      %p307 = por %p305, %p306
      %p308 = scmp.ne.s32.totalorder %s297, %s298
      %p309 = scmp.eq.s32.totalorder %s55, 0
      %p310 = por %p308, %p309
      %p311 = scmp.ne.s32.totalorder %s297, %s298
      %p312 = scmp.eq.s32.totalorder %s56, 1
      %p313 = por %p311, %p312
      %p315 = scmp.ne.s32.totalorder %s298, %s314
      %p316 = scmp.eq.s32.totalorder %s56, 0
      %p317 = por %p315, %p316
      %s318 = ssub.s32 %s50, %s57
      %p319 = scmp.eq.s32.totalorder %s318, 0
      %s321 = sadd.s32 %s320, 1
      %s322 = scalar_select %p319, %s320, %s321
      %p325 = pneg %p319
      %p326 = scmp.eq.s32.totalorder %s50, 1
      %p327 = por %p325, %p326
      %p328 = scmp.ne.s32.totalorder %s320, %s323
      %p329 = scmp.eq.s32.totalorder %s50, 0
      %p330 = por %p328, %p329
      %p331 = scmp.ne.s32.totalorder %s320, %s323
      %p332 = scmp.eq.s32.totalorder %s55, 1
      %p333 = por %p331, %p332
      %p334 = scmp.ne.s32.totalorder %s323, %s324
      %p335 = scmp.eq.s32.totalorder %s55, 0
      %p336 = por %p334, %p335
      %p337 = scmp.ne.s32.totalorder %s323, %s324
      %p338 = scmp.eq.s32.totalorder %s56, 1
      %p339 = por %p337, %p338
      %p341 = scmp.ne.s32.totalorder %s324, %s340
      %p342 = scmp.eq.s32.totalorder %s56, 0
      %p343 = por %p341, %p342
      %s344 = ssub.s32 %s50, %s57
      %p345 = scmp.eq.s32.totalorder %s344, 0
      %s347 = sadd.s32 %s346, 1
      %s348 = scalar_select %p345, %s346, %s347
      %p351 = pneg %p345
      %p352 = scmp.eq.s32.totalorder %s50, 1
      %p353 = por %p351, %p352
      %p354 = scmp.ne.s32.totalorder %s346, %s349
      %p355 = scmp.eq.s32.totalorder %s50, 0
      %p356 = por %p354, %p355
      %p357 = scmp.ne.s32.totalorder %s346, %s349
      %p358 = scmp.eq.s32.totalorder %s55, 1
      %p359 = por %p357, %p358
      %p360 = scmp.ne.s32.totalorder %s349, %s350
      %p361 = scmp.eq.s32.totalorder %s55, 0
      %p362 = por %p360, %p361
      %p363 = scmp.ne.s32.totalorder %s349, %s350
      %p364 = scmp.eq.s32.totalorder %s56, 1
      %p365 = por %p363, %p364
      %p367 = scmp.ne.s32.totalorder %s350, %s366
      %p368 = scmp.eq.s32.totalorder %s56, 0
      %p369 = por %p367, %p368
      %s370 = ssub.s32 %s50, %s57
      %p371 = scmp.eq.s32.totalorder %s370, 0
      %s373 = sadd.s32 %s372, 1
      %s374 = scalar_select %p371, %s372, %s373
      %p377 = pneg %p371
      %p378 = scmp.eq.s32.totalorder %s50, 1
      %p379 = por %p377, %p378
      %p380 = scmp.ne.s32.totalorder %s372, %s375
      %p381 = scmp.eq.s32.totalorder %s50, 0
      %p382 = por %p380, %p381
      %p383 = scmp.ne.s32.totalorder %s372, %s375
      %p384 = scmp.eq.s32.totalorder %s55, 1
      %p385 = por %p383, %p384
      %p386 = scmp.ne.s32.totalorder %s375, %s376
      %p387 = scmp.eq.s32.totalorder %s55, 0
      %p388 = por %p386, %p387
      %p389 = scmp.ne.s32.totalorder %s375, %s376
      %p390 = scmp.eq.s32.totalorder %s56, 1
      %p391 = por %p389, %p390
      %p393 = scmp.ne.s32.totalorder %s376, %s392
      %p394 = scmp.eq.s32.totalorder %s56, 0
      %p395 = por %p393, %p394
      %s396 = ssub.s32 %s50, %s57
      %p397 = scmp.eq.s32.totalorder %s396, 0
      %s399 = sadd.s32 %s398, 1
      %s400 = scalar_select %p397, %s398, %s399
      %p403 = pneg %p397
      %p404 = scmp.eq.s32.totalorder %s50, 1
      %p405 = por %p403, %p404
      %p406 = scmp.ne.s32.totalorder %s398, %s401
      %p407 = scmp.eq.s32.totalorder %s50, 0
      %p408 = por %p406, %p407
      %p409 = scmp.ne.s32.totalorder %s398, %s401
      %p410 = scmp.eq.s32.totalorder %s55, 1
      %p411 = por %p409, %p410
      %p412 = scmp.ne.s32.totalorder %s401, %s402
      %p413 = scmp.eq.s32.totalorder %s55, 0
      %p414 = por %p412, %p413
      %p415 = scmp.ne.s32.totalorder %s401, %s402
      %p416 = scmp.eq.s32.totalorder %s56, 1
      %p417 = por %p415, %p416
      %p419 = scmp.ne.s32.totalorder %s402, %s418
      %p420 = scmp.eq.s32.totalorder %s56, 0
      %p421 = por %p419, %p420
      %s422 = ssub.s32 %s50, %s57
      %p423 = scmp.eq.s32.totalorder %s422, 0
      %s425 = sadd.s32 %s424, 1
      %s426 = scalar_select %p423, %s424, %s425
      %p429 = pneg %p423
      %p430 = scmp.eq.s32.totalorder %s50, 1
      %p431 = por %p429, %p430
      %p432 = scmp.ne.s32.totalorder %s424, %s427
      %p433 = scmp.eq.s32.totalorder %s50, 0
      %p434 = por %p432, %p433
      %p435 = scmp.ne.s32.totalorder %s424, %s427
      %p436 = scmp.eq.s32.totalorder %s55, 1
      %p437 = por %p435, %p436
      %p438 = scmp.ne.s32.totalorder %s427, %s428
      %p439 = scmp.eq.s32.totalorder %s55, 0
      %p440 = por %p438, %p439
      %p441 = scmp.ne.s32.totalorder %s427, %s428
      %p442 = scmp.eq.s32.totalorder %s56, 1
      %p443 = por %p441, %p442
      %p445 = scmp.ne.s32.totalorder %s428, %s444
      %p446 = scmp.eq.s32.totalorder %s56, 0
      %p447 = por %p445, %p446
      %s448 = ssub.s32 %s50, %s57
      %p449 = scmp.eq.s32.totalorder %s448, 0
      %s451 = sadd.s32 %s450, 1
      %s452 = scalar_select %p449, %s450, %s451
      %p455 = pneg %p449
      %p456 = scmp.eq.s32.totalorder %s50, 1
      %p457 = por %p455, %p456
      %p458 = scmp.ne.s32.totalorder %s450, %s453
      %p459 = scmp.eq.s32.totalorder %s50, 0
      %p460 = por %p458, %p459
      %p461 = scmp.ne.s32.totalorder %s450, %s453
      %p462 = scmp.eq.s32.totalorder %s55, 1
      %p463 = por %p461, %p462
      %p464 = scmp.ne.s32.totalorder %s453, %s454
      %p465 = scmp.eq.s32.totalorder %s55, 0
      %p466 = por %p464, %p465
      %p467 = scmp.ne.s32.totalorder %s453, %s454
      %p468 = scmp.eq.s32.totalorder %s56, 1
      %p469 = por %p467, %p468
      %p471 = scmp.ne.s32.totalorder %s454, %s470
      %p472 = scmp.eq.s32.totalorder %s56, 0
      %p473 = por %p471, %p472
      %s474 = ssub.s32 %s50, %s57
      %p475 = scmp.eq.s32.totalorder %s474, 0
      %s477 = sadd.s32 %s476, 1
      %s478 = scalar_select %p475, %s476, %s477
      %p481 = pneg %p475
      %p482 = scmp.eq.s32.totalorder %s50, 1
      %p483 = por %p481, %p482
      %p484 = scmp.ne.s32.totalorder %s476, %s479
      %p485 = scmp.eq.s32.totalorder %s50, 0
      %p486 = por %p484, %p485
      %p487 = scmp.ne.s32.totalorder %s476, %s479
      %p488 = scmp.eq.s32.totalorder %s55, 1
      %p489 = por %p487, %p488
      %p490 = scmp.ne.s32.totalorder %s479, %s480
      %p491 = scmp.eq.s32.totalorder %s55, 0
      %p492 = por %p490, %p491
      %p493 = scmp.ne.s32.totalorder %s479, %s480
      %p494 = scmp.eq.s32.totalorder %s56, 1
      %p495 = por %p493, %p494
      %p497 = scmp.ne.s32.totalorder %s480, %s496
      %p498 = scmp.eq.s32.totalorder %s56, 0
      %p499 = por %p497, %p498
      %s500 = ssub.s32 %s50, %s57
      %p501 = scmp.eq.s32.totalorder %s500, 0
      %s503 = sadd.s32 %s502, 1
      %s504 = scalar_select %p501, %s502, %s503
      %p507 = pneg %p501
      %p508 = scmp.eq.s32.totalorder %s50, 1
      %p509 = por %p507, %p508
      %p510 = scmp.ne.s32.totalorder %s502, %s505
      %p511 = scmp.eq.s32.totalorder %s50, 0
      %p512 = por %p510, %p511
      %p513 = scmp.ne.s32.totalorder %s502, %s505
      %p514 = scmp.eq.s32.totalorder %s55, 1
      %p515 = por %p513, %p514
      %p516 = scmp.ne.s32.totalorder %s505, %s506
      %p517 = scmp.eq.s32.totalorder %s55, 0
      %p518 = por %p516, %p517
      %p519 = scmp.ne.s32.totalorder %s505, %s506
      %p520 = scmp.eq.s32.totalorder %s56, 1
      %p521 = por %p519, %p520
      %p523 = scmp.ne.s32.totalorder %s506, %s522
      %p524 = scmp.eq.s32.totalorder %s56, 0
      %p525 = por %p523, %p524
      %p526 = scmp.le.s32.totalorder 1, %s50
      %p527 = scmp.lt.s32.totalorder %s50, 3
      %p528 = pnand %p526, %p527
      %p529 = pneg %p528
      // Predicated region
      $region9: #{cell_line_graph_forward.1} parent=5 // pred_check
        _
      $region10: #{cell_line_graph_forward.1} parent=5 // pred_check_branch
        %531 = sbr.rel (%p528) target = $region12
      $region11: #{cell_line_graph_forward.1} parent=5 // pred_region
        %s532 = ssub.s32 %s50, 1
      $region12: #{cell_line_graph_forward.1} parent=5 // pred_fallthru
        _
      %p533 = scmp.lt.s32.totalorder %s50, 2
      // Predicated region
      $region13: #{cell_line_graph_forward.1} parent=5 // pred_check
        %p534 = pneg %p533
      $region14: #{cell_line_graph_forward.1} parent=5 // pred_check_branch
        %536 = sbr.rel (%p534) target = $region16
      $region15: #{cell_line_graph_forward.1} parent=5 // pred_region
        // Predicated region
        $region17: #{cell_line_graph_forward.1} parent=15 // pred_check
          %p537 = pneg %p70
        $region18: #{cell_line_graph_forward.1} parent=15 // pred_check_branch
          %539 = sbr.rel (%p537) target = $region20
        $region19: #{cell_line_graph_forward.1} parent=15 // pred_region
          %p540 = scmp.lt.s32.totalorder %s50, 1
          %s541 = scalar_select %p540, %s50, 1
          %s542 = smul.addr %s541, 6
          %s543 = scalar_lea.vmem %s0, %s542
        $region20: #{cell_line_graph_forward.1} parent=15 // pred_fallthru
          _
        // Predicated region
        $region21: #{cell_line_graph_forward.1} parent=15 // pred_check
          %p544 = pneg %p96
        $region22: #{cell_line_graph_forward.1} parent=15 // pred_check_branch
          %546 = sbr.rel (%p544) target = $region24
        $region23: #{cell_line_graph_forward.1} parent=15 // pred_region
          %s547 = sand.u32 %s86, 1
          %s548 = scalar_lea.sflag [#allocation3], %s547
          %s549 = sand.u32 %s86, 1
          %s550 = smul.addr %s549, 1536
          %s551 = scalar_lea.vmem [#allocation2], %s550
          %s553 = ssub.s32 24576, 24576
          %554 = vsyncadd %s548, %s553
          %s555 = smul.addr %s50, 384
          %s556 = smul.addr %s555, 64
          %s557 = scalar_lea.hbm %s1, %s556
          %s558 = sshll.u32 %s551, 4
          %s559 = int_to_ptr.vmem [resolvable:$true] %s558
          %564 = dma.hbm_to_vmem [thread:$0]  %s557, 24576, %s559, %s548, 256, 256, 16
        $region24: #{cell_line_graph_forward.1} parent=15 // pred_fallthru
          _
        // Predicated region
        $region25: #{cell_line_graph_forward.1} parent=15 // pred_check
          %p565 = pneg %p122
        $region26: #{cell_line_graph_forward.1} parent=15 // pred_check_branch
          %567 = sbr.rel (%p565) target = $region28
        $region27: #{cell_line_graph_forward.1} parent=15 // pred_region
          %s568 = sand.u32 %s50, 1
          %s569 = scalar_lea.sflag [#allocation5], %s568
          %s570 = sand.u32 %s112, 1
          %s571 = smul.addr %s570, 4
          %s572 = scalar_lea.vmem [#allocation4], %s571
          %s574 = ssub.s32 64, 64
          %575 = vsyncadd %s569, %s574
          %s576 = smul.addr %s50, 4
          %s577 = smul.addr %s576, 16
          %s578 = scalar_lea.hbm %s2, %s577
          %s580 = sshll.u32 %s572, 4
          %s581 = int_to_ptr.vmem [resolvable:$true] %s580
          %583 = dma.hbm_to_vmem [thread:$0]  %s578, 64, %s581, %s569
        $region28: #{cell_line_graph_forward.1} parent=15 // pred_fallthru
          _
        // Predicated region
        $region29: #{cell_line_graph_forward.1} parent=15 // pred_check
          %p584 = pneg %p148
        $region30: #{cell_line_graph_forward.1} parent=15 // pred_check_branch
          %586 = sbr.rel (%p584) target = $region32
        $region31: #{cell_line_graph_forward.1} parent=15 // pred_region
          %s587 = sand.u32 %s50, 1
          %s588 = scalar_lea.sflag [#allocation5], %s587
          %s589 = sand.u32 %s138, 1
          %s590 = smul.addr %s589, 4
          %s591 = scalar_lea.vmem [#allocation6], %s590
          %s593 = ssub.s32 64, 64
          %594 = vsyncadd %s588, %s593
          %s595 = smul.addr %s50, 4
          %s596 = smul.addr %s595, 16
          %s597 = scalar_lea.hbm %s3, %s596
          %s599 = sshll.u32 %s591, 4
          %s600 = int_to_ptr.vmem [resolvable:$true] %s599
          %602 = dma.hbm_to_vmem [thread:$0]  %s597, 64, %s600, %s588
        $region32: #{cell_line_graph_forward.1} parent=15 // pred_fallthru
          _
        // Predicated region
        $region33: #{cell_line_graph_forward.1} parent=15 // pred_check
          %p603 = pneg %p174
        $region34: #{cell_line_graph_forward.1} parent=15 // pred_check_branch
          %605 = sbr.rel (%p603) target = $region36
        $region35: #{cell_line_graph_forward.1} parent=15 // pred_region
          %s606 = sand.u32 %s50, 1
          %s607 = scalar_lea.sflag [#allocation8], %s606
          %s608 = sand.u32 %s164, 1
          %s609 = smul.addr %s608, 4
          %s610 = scalar_lea.vmem [#allocation7], %s609
          %s612 = ssub.s32 64, 64
          %613 = vsyncadd %s607, %s612
          %s614 = smul.addr %s50, 4
          %s615 = smul.addr %s614, 16
          %s616 = scalar_lea.hbm %s4, %s615
          %s618 = sshll.u32 %s610, 4
          %s619 = int_to_ptr.vmem [resolvable:$true] %s618
          %621 = dma.hbm_to_vmem [thread:$0]  %s616, 64, %s619, %s607
        $region36: #{cell_line_graph_forward.1} parent=15 // pred_fallthru
          _
        // Predicated region
        $region37: #{cell_line_graph_forward.1} parent=15 // pred_check
          %p622 = pneg %p200
        $region38: #{cell_line_graph_forward.1} parent=15 // pred_check_branch
          %624 = sbr.rel (%p622) target = $region40
        $region39: #{cell_line_graph_forward.1} parent=15 // pred_region
          %s625 = sand.u32 %s50, 1
          %s626 = scalar_lea.sflag [#allocation8], %s625
          %s627 = sand.u32 %s190, 1
          %s628 = smul.addr %s627, 512
          %s629 = scalar_lea.vmem [#allocation9], %s628
          %s631 = ssub.s32 8192, 8192
          %632 = vsyncadd %s626, %s631
          %s633 = smul.addr %s50, 128
          %s634 = smul.addr %s633, 64
          %s635 = scalar_lea.hbm %s5, %s634
          %s636 = sshll.u32 %s629, 4
          %s637 = int_to_ptr.vmem [resolvable:$true] %s636
          %642 = dma.hbm_to_vmem [thread:$0]  %s635, 8192, %s637, %s626, 128, 128, 8
        $region40: #{cell_line_graph_forward.1} parent=15 // pred_fallthru
          _
        // Predicated region
        $region41: #{cell_line_graph_forward.1} parent=15 // pred_check
          %p643 = pneg %p226
        $region42: #{cell_line_graph_forward.1} parent=15 // pred_check_branch
          %645 = sbr.rel (%p643) target = $region44
        $region43: #{cell_line_graph_forward.1} parent=15 // pred_region
          %s646 = sand.u32 %s50, 1
          %s647 = scalar_lea.sflag [#allocation11], %s646
          %s648 = sand.u32 %s216, 1
          %s649 = smul.addr %s648, 2
          %s650 = scalar_lea.vmem [#allocation10], %s649
          %s652 = ssub.s32 32, 32
          %653 = vsyncadd %s647, %s652
          %s654 = smul.addr %s50, 2
          %s655 = smul.addr %s654, 16
          %s656 = scalar_lea.hbm %s6, %s655
          %s658 = sshll.u32 %s650, 4
          %s659 = int_to_ptr.vmem [resolvable:$true] %s658
          %661 = dma.hbm_to_vmem [thread:$0]  %s656, 32, %s659, %s647
        $region44: #{cell_line_graph_forward.1} parent=15 // pred_fallthru
          _
        // Predicated region
        $region45: #{cell_line_graph_forward.1} parent=15 // pred_check
          %p662 = pneg %p252
        $region46: #{cell_line_graph_forward.1} parent=15 // pred_check_branch
          %664 = sbr.rel (%p662) target = $region48
        $region47: #{cell_line_graph_forward.1} parent=15 // pred_region
          %s665 = sand.u32 %s50, 1
          %s666 = scalar_lea.sflag [#allocation11], %s665
          %s667 = sand.u32 %s242, 1
          %s668 = smul.addr %s667, 2
          %s669 = scalar_lea.vmem [#allocation12], %s668
          %s671 = ssub.s32 32, 32
          %672 = vsyncadd %s666, %s671
          %s673 = smul.addr %s50, 2
          %s674 = smul.addr %s673, 16
          %s675 = scalar_lea.hbm %s7, %s674
          %s677 = sshll.u32 %s669, 4
          %s678 = int_to_ptr.vmem [resolvable:$true] %s677
          %680 = dma.hbm_to_vmem [thread:$0]  %s675, 32, %s678, %s666
        $region48: #{cell_line_graph_forward.1} parent=15 // pred_fallthru
          _
        // Predicated region
        $region49: #{cell_line_graph_forward.1} parent=15 // pred_check
          %p681 = pneg %p278
        $region50: #{cell_line_graph_forward.1} parent=15 // pred_check_branch
          %683 = sbr.rel (%p681) target = $region52
        $region51: #{cell_line_graph_forward.1} parent=15 // pred_region
          %s684 = sand.u32 %s50, 1
          %s685 = scalar_lea.sflag [#allocation14], %s684
          %s686 = sand.u32 %s268, 1
          %s687 = smul.addr %s686, 2
          %s688 = scalar_lea.vmem [#allocation13], %s687
          %s690 = ssub.s32 32, 32
          %691 = vsyncadd %s685, %s690
          %s692 = smul.addr %s50, 2
          %s693 = smul.addr %s692, 16
          %s694 = scalar_lea.hbm %s8, %s693
          %s696 = sshll.u32 %s688, 4
          %s697 = int_to_ptr.vmem [resolvable:$true] %s696
          %699 = dma.hbm_to_vmem [thread:$0]  %s694, 32, %s697, %s685
        $region52: #{cell_line_graph_forward.1} parent=15 // pred_fallthru
          _
        // Predicated region
        $region53: #{cell_line_graph_forward.1} parent=15 // pred_check
          %p700 = pneg %p304
        $region54: #{cell_line_graph_forward.1} parent=15 // pred_check_branch
          %702 = sbr.rel (%p700) target = $region56
        $region55: #{cell_line_graph_forward.1} parent=15 // pred_region
          %s703 = sand.u32 %s50, 1
          %s704 = scalar_lea.sflag [#allocation14], %s703
          %s705 = sand.u32 %s294, 1
          %s706 = smul.addr %s705, 128
          %s707 = scalar_lea.vmem [#allocation15], %s706
          %s709 = ssub.s32 2048, 2048
          %710 = vsyncadd %s704, %s709
          %s711 = smul.addr %s50, 32
          %s712 = smul.addr %s711, 64
          %s713 = scalar_lea.hbm %s9, %s712
          %s714 = sshll.u32 %s707, 4
          %s715 = int_to_ptr.vmem [resolvable:$true] %s714
          %720 = dma.hbm_to_vmem [thread:$0]  %s713, 2048, %s715, %s704, 64, 64, 4
        $region56: #{cell_line_graph_forward.1} parent=15 // pred_fallthru
          _
        // Predicated region
        $region57: #{cell_line_graph_forward.1} parent=15 // pred_check
          %p721 = pneg %p330
        $region58: #{cell_line_graph_forward.1} parent=15 // pred_check_branch
          %723 = sbr.rel (%p721) target = $region60
        $region59: #{cell_line_graph_forward.1} parent=15 // pred_region
          %s724 = sand.u32 %s50, 1
          %s725 = scalar_lea.sflag [#allocation17], %s724
          %s726 = sand.u32 %s320, 1
          %s727 = scalar_lea.vmem [#allocation16], %s726
          %s729 = ssub.s32 16, 16
          %730 = vsyncadd %s725, %s729
          %s731 = smul.addr %s50, 16
          %s732 = scalar_lea.hbm %s10, %s731
          %s734 = sshll.u32 %s727, 4
          %s735 = int_to_ptr.vmem [resolvable:$true] %s734
          %737 = dma.hbm_to_vmem [thread:$0]  %s732, 16, %s735, %s725
        $region60: #{cell_line_graph_forward.1} parent=15 // pred_fallthru
          _
        // Predicated region
        $region61: #{cell_line_graph_forward.1} parent=15 // pred_check
          %p738 = pneg %p356
        $region62: #{cell_line_graph_forward.1} parent=15 // pred_check_branch
          %740 = sbr.rel (%p738) target = $region64
        $region63: #{cell_line_graph_forward.1} parent=15 // pred_region
          %s741 = sand.u32 %s50, 1
          %s742 = scalar_lea.sflag [#allocation17], %s741
          %s743 = sand.u32 %s346, 1
          %s744 = scalar_lea.vmem [#allocation18], %s743
          %s746 = ssub.s32 16, 16
          %747 = vsyncadd %s742, %s746
          %s748 = smul.addr %s50, 16
          %s749 = scalar_lea.hbm %s11, %s748
          %s751 = sshll.u32 %s744, 4
          %s752 = int_to_ptr.vmem [resolvable:$true] %s751
          %754 = dma.hbm_to_vmem [thread:$0]  %s749, 16, %s752, %s742
        $region64: #{cell_line_graph_forward.1} parent=15 // pred_fallthru
          _
        // Predicated region
        $region65: #{cell_line_graph_forward.1} parent=15 // pred_check
          %p755 = pneg %p382
        $region66: #{cell_line_graph_forward.1} parent=15 // pred_check_branch
          %757 = sbr.rel (%p755) target = $region68
        $region67: #{cell_line_graph_forward.1} parent=15 // pred_region
          %s758 = sand.u32 %s50, 1
          %s759 = scalar_lea.sflag [#allocation20], %s758
          %s760 = sand.u32 %s372, 1
          %s761 = scalar_lea.vmem [#allocation19], %s760
          %s763 = ssub.s32 16, 16
          %764 = vsyncadd %s759, %s763
          %s765 = smul.addr %s50, 16
          %s766 = scalar_lea.hbm %s12, %s765
          %s768 = sshll.u32 %s761, 4
          %s769 = int_to_ptr.vmem [resolvable:$true] %s768
          %771 = dma.hbm_to_vmem [thread:$0]  %s766, 16, %s769, %s759
        $region68: #{cell_line_graph_forward.1} parent=15 // pred_fallthru
          _
        // Predicated region
        $region69: #{cell_line_graph_forward.1} parent=15 // pred_check
          %p772 = pneg %p408
        $region70: #{cell_line_graph_forward.1} parent=15 // pred_check_branch
          %774 = sbr.rel (%p772) target = $region72
        $region71: #{cell_line_graph_forward.1} parent=15 // pred_region
          %s775 = sand.u32 %s50, 1
          %s776 = scalar_lea.sflag [#allocation20], %s775
          %s777 = sand.u32 %s398, 1
          %s778 = smul.addr %s777, 64
          %s779 = scalar_lea.vmem [#allocation21], %s778
          %s781 = ssub.s32 1024, 1024
          %782 = vsyncadd %s776, %s781
          %s783 = smul.addr %s50, 16
          %s784 = smul.addr %s783, 64
          %s785 = scalar_lea.hbm %s13, %s784
          %s786 = sshll.u32 %s779, 4
          %s787 = int_to_ptr.vmem [resolvable:$true] %s786
          %792 = dma.hbm_to_vmem [thread:$0]  %s785, 1024, %s787, %s776, 64, 64, 4
        $region72: #{cell_line_graph_forward.1} parent=15 // pred_fallthru
          _
        // Predicated region
        $region73: #{cell_line_graph_forward.1} parent=15 // pred_check
          %p793 = pneg %p434
        $region74: #{cell_line_graph_forward.1} parent=15 // pred_check_branch
          %795 = sbr.rel (%p793) target = $region76
        $region75: #{cell_line_graph_forward.1} parent=15 // pred_region
          %s796 = sand.u32 %s50, 1
          %s797 = scalar_lea.sflag [#allocation23], %s796
          %s798 = sand.u32 %s424, 1
          %s799 = scalar_lea.vmem [#allocation22], %s798
          %s801 = ssub.s32 16, 16
          %802 = vsyncadd %s797, %s801
          %s803 = smul.addr %s50, 16
          %s804 = scalar_lea.hbm %s14, %s803
          %s806 = sshll.u32 %s799, 4
          %s807 = int_to_ptr.vmem [resolvable:$true] %s806
          %809 = dma.hbm_to_vmem [thread:$0]  %s804, 16, %s807, %s797
        $region76: #{cell_line_graph_forward.1} parent=15 // pred_fallthru
          _
        // Predicated region
        $region77: #{cell_line_graph_forward.1} parent=15 // pred_check
          %p810 = pneg %p460
        $region78: #{cell_line_graph_forward.1} parent=15 // pred_check_branch
          %812 = sbr.rel (%p810) target = $region80
        $region79: #{cell_line_graph_forward.1} parent=15 // pred_region
          %s813 = sand.u32 %s50, 1
          %s814 = scalar_lea.sflag [#allocation23], %s813
          %s815 = sand.u32 %s450, 1
          %s816 = scalar_lea.vmem [#allocation24], %s815
          %s818 = ssub.s32 16, 16
          %819 = vsyncadd %s814, %s818
          %s820 = smul.addr %s50, 16
          %s821 = scalar_lea.hbm %s15, %s820
          %s823 = sshll.u32 %s816, 4
          %s824 = int_to_ptr.vmem [resolvable:$true] %s823
          %826 = dma.hbm_to_vmem [thread:$0]  %s821, 16, %s824, %s814
        $region80: #{cell_line_graph_forward.1} parent=15 // pred_fallthru
          _
        // Predicated region
        $region81: #{cell_line_graph_forward.1} parent=15 // pred_check
          %p827 = pneg %p486
        $region82: #{cell_line_graph_forward.1} parent=15 // pred_check_branch
          %829 = sbr.rel (%p827) target = $region84
        $region83: #{cell_line_graph_forward.1} parent=15 // pred_region
          %s830 = sand.u32 %s476, 1
          %s831 = scalar_lea.sflag [#allocation26], %s830
          %s832 = sand.u32 %s476, 1
          %s833 = scalar_lea.vmem [#allocation25], %s832
          %s835 = ssub.s32 16, 16
          %836 = vsyncadd %s831, %s835
          %s837 = smul.addr %s50, 16
          %s838 = scalar_lea.hbm %s16, %s837
          %s840 = sshll.u32 %s833, 4
          %s841 = int_to_ptr.vmem [resolvable:$true] %s840
          %843 = dma.hbm_to_vmem [thread:$0]  %s838, 16, %s841, %s831
        $region84: #{cell_line_graph_forward.1} parent=15 // pred_fallthru
          _
      $region16: #{cell_line_graph_forward.1} parent=5 // pred_fallthru
        _
      %p844 = scmp.le.s32.totalorder 1, %s50
      %p845 = scmp.lt.s32.totalorder %s50, 3
      %p846 = pnand %p844, %p845
      %p847 = pneg %p846
      // Predicated region
      $region85: #{cell_line_graph_forward.1} parent=5 // pred_check
        _
      $region86: #{cell_line_graph_forward.1} parent=5 // pred_check_branch
        %849 = sbr.rel (%p846) target = $region88
      $region87: #{cell_line_graph_forward.1} parent=5 // pred_region
        %s850 = ssub.s32 %s50, 1
        %s851 = sand.u32 %s89, 1
        %s852 = scalar_lea.sflag [#allocation3], %s851
        %s853 = sand.u32 %s89, 1
        %s854 = smul.addr %s853, 1536
        %s855 = scalar_lea.vmem [#allocation2], %s854
        // Predicated region
        $region89: #{cell_line_graph_forward.1} parent=87 // pred_check
          %p856 = pneg %p102
        $region90: #{cell_line_graph_forward.1} parent=87 // pred_check_branch
          %858 = sbr.rel (%p856) target = $region92
        $region91: #{cell_line_graph_forward.1} parent=87 // pred_region
          %859 = dma.done %s852, 24576
        $region92: #{cell_line_graph_forward.1} parent=87 // pred_fallthru
          _
        %s860 = sand.u32 %s55, 1
        %s861 = scalar_lea.sflag [#allocation5], %s860
        %s862 = sand.u32 %s115, 1
        %s863 = smul.addr %s862, 4
        %s864 = scalar_lea.vmem [#allocation4], %s863
        // Predicated region
        $region93: #{cell_line_graph_forward.1} parent=87 // pred_check
          %p865 = pneg %p128
        $region94: #{cell_line_graph_forward.1} parent=87 // pred_check_branch
          %867 = sbr.rel (%p865) target = $region96
        $region95: #{cell_line_graph_forward.1} parent=87 // pred_region
          %868 = dma.done %s861, 64
        $region96: #{cell_line_graph_forward.1} parent=87 // pred_fallthru
          _
        %s869 = sand.u32 %s55, 1
        %s870 = scalar_lea.sflag [#allocation5], %s869
        %s871 = sand.u32 %s141, 1
        %s872 = smul.addr %s871, 4
        %s873 = scalar_lea.vmem [#allocation6], %s872
        // Predicated region
        $region97: #{cell_line_graph_forward.1} parent=87 // pred_check
          %p874 = pneg %p154
        $region98: #{cell_line_graph_forward.1} parent=87 // pred_check_branch
          %876 = sbr.rel (%p874) target = $region100
        $region99: #{cell_line_graph_forward.1} parent=87 // pred_region
          %877 = dma.done %s870, 64
        $region100: #{cell_line_graph_forward.1} parent=87 // pred_fallthru
          _
        %s878 = sand.u32 %s55, 1
        %s879 = scalar_lea.sflag [#allocation8], %s878
        %s880 = sand.u32 %s167, 1
        %s881 = smul.addr %s880, 4
        %s882 = scalar_lea.vmem [#allocation7], %s881
        // Predicated region
        $region101: #{cell_line_graph_forward.1} parent=87 // pred_check
          %p883 = pneg %p180
        $region102: #{cell_line_graph_forward.1} parent=87 // pred_check_branch
          %885 = sbr.rel (%p883) target = $region104
        $region103: #{cell_line_graph_forward.1} parent=87 // pred_region
          %886 = dma.done %s879, 64
        $region104: #{cell_line_graph_forward.1} parent=87 // pred_fallthru
          _
        %s887 = sand.u32 %s55, 1
        %s888 = scalar_lea.sflag [#allocation8], %s887
        %s889 = sand.u32 %s193, 1
        %s890 = smul.addr %s889, 512
        %s891 = scalar_lea.vmem [#allocation9], %s890
        // Predicated region
        $region105: #{cell_line_graph_forward.1} parent=87 // pred_check
          %p892 = pneg %p206
        $region106: #{cell_line_graph_forward.1} parent=87 // pred_check_branch
          %894 = sbr.rel (%p892) target = $region108
        $region107: #{cell_line_graph_forward.1} parent=87 // pred_region
          %895 = dma.done %s888, 8192
        $region108: #{cell_line_graph_forward.1} parent=87 // pred_fallthru
          _
        %s896 = sand.u32 %s55, 1
        %s897 = scalar_lea.sflag [#allocation11], %s896
        %s898 = sand.u32 %s219, 1
        %s899 = smul.addr %s898, 2
        %s900 = scalar_lea.vmem [#allocation10], %s899
        // Predicated region
        $region109: #{cell_line_graph_forward.1} parent=87 // pred_check
          %p901 = pneg %p232
        $region110: #{cell_line_graph_forward.1} parent=87 // pred_check_branch
          %903 = sbr.rel (%p901) target = $region112
        $region111: #{cell_line_graph_forward.1} parent=87 // pred_region
          %904 = dma.done %s897, 32
        $region112: #{cell_line_graph_forward.1} parent=87 // pred_fallthru
          _
        %s905 = sand.u32 %s55, 1
        %s906 = scalar_lea.sflag [#allocation11], %s905
        %s907 = sand.u32 %s245, 1
        %s908 = smul.addr %s907, 2
        %s909 = scalar_lea.vmem [#allocation12], %s908
        // Predicated region
        $region113: #{cell_line_graph_forward.1} parent=87 // pred_check
          %p910 = pneg %p258
        $region114: #{cell_line_graph_forward.1} parent=87 // pred_check_branch
          %912 = sbr.rel (%p910) target = $region116
        $region115: #{cell_line_graph_forward.1} parent=87 // pred_region
          %913 = dma.done %s906, 32
        $region116: #{cell_line_graph_forward.1} parent=87 // pred_fallthru
          _
        %s914 = sand.u32 %s55, 1
        %s915 = scalar_lea.sflag [#allocation14], %s914
        %s916 = sand.u32 %s271, 1
        %s917 = smul.addr %s916, 2
        %s918 = scalar_lea.vmem [#allocation13], %s917
        // Predicated region
        $region117: #{cell_line_graph_forward.1} parent=87 // pred_check
          %p919 = pneg %p284
        $region118: #{cell_line_graph_forward.1} parent=87 // pred_check_branch
          %921 = sbr.rel (%p919) target = $region120
        $region119: #{cell_line_graph_forward.1} parent=87 // pred_region
          %922 = dma.done %s915, 32
        $region120: #{cell_line_graph_forward.1} parent=87 // pred_fallthru
          _
        %s923 = sand.u32 %s55, 1
        %s924 = scalar_lea.sflag [#allocation14], %s923
        %s925 = sand.u32 %s297, 1
        %s926 = smul.addr %s925, 128
        %s927 = scalar_lea.vmem [#allocation15], %s926
        // Predicated region
        $region121: #{cell_line_graph_forward.1} parent=87 // pred_check
          %p928 = pneg %p310
        $region122: #{cell_line_graph_forward.1} parent=87 // pred_check_branch
          %930 = sbr.rel (%p928) target = $region124
        $region123: #{cell_line_graph_forward.1} parent=87 // pred_region
          %931 = dma.done %s924, 2048
        $region124: #{cell_line_graph_forward.1} parent=87 // pred_fallthru
          _
        %s932 = sand.u32 %s55, 1
        %s933 = scalar_lea.sflag [#allocation17], %s932
        %s934 = sand.u32 %s323, 1
        %s935 = scalar_lea.vmem [#allocation16], %s934
        // Predicated region
        $region125: #{cell_line_graph_forward.1} parent=87 // pred_check
          %p936 = pneg %p336
        $region126: #{cell_line_graph_forward.1} parent=87 // pred_check_branch
          %938 = sbr.rel (%p936) target = $region128
        $region127: #{cell_line_graph_forward.1} parent=87 // pred_region
          %939 = dma.done %s933, 16
        $region128: #{cell_line_graph_forward.1} parent=87 // pred_fallthru
          _
        %s940 = sand.u32 %s55, 1
        %s941 = scalar_lea.sflag [#allocation17], %s940
        %s942 = sand.u32 %s349, 1
        %s943 = scalar_lea.vmem [#allocation18], %s942
        // Predicated region
        $region129: #{cell_line_graph_forward.1} parent=87 // pred_check
          %p944 = pneg %p362
        $region130: #{cell_line_graph_forward.1} parent=87 // pred_check_branch
          %946 = sbr.rel (%p944) target = $region132
        $region131: #{cell_line_graph_forward.1} parent=87 // pred_region
          %947 = dma.done %s941, 16
        $region132: #{cell_line_graph_forward.1} parent=87 // pred_fallthru
          _
        %s948 = sand.u32 %s55, 1
        %s949 = scalar_lea.sflag [#allocation20], %s948
        %s950 = sand.u32 %s375, 1
        %s951 = scalar_lea.vmem [#allocation19], %s950
        // Predicated region
        $region133: #{cell_line_graph_forward.1} parent=87 // pred_check
          %p952 = pneg %p388
        $region134: #{cell_line_graph_forward.1} parent=87 // pred_check_branch
          %954 = sbr.rel (%p952) target = $region136
        $region135: #{cell_line_graph_forward.1} parent=87 // pred_region
          %955 = dma.done %s949, 16
        $region136: #{cell_line_graph_forward.1} parent=87 // pred_fallthru
          _
        %s956 = sand.u32 %s55, 1
        %s957 = scalar_lea.sflag [#allocation20], %s956
        %s958 = sand.u32 %s401, 1
        %s959 = smul.addr %s958, 64
        %s960 = scalar_lea.vmem [#allocation21], %s959
        // Predicated region
        $region137: #{cell_line_graph_forward.1} parent=87 // pred_check
          %p961 = pneg %p414
        $region138: #{cell_line_graph_forward.1} parent=87 // pred_check_branch
          %963 = sbr.rel (%p961) target = $region140
        $region139: #{cell_line_graph_forward.1} parent=87 // pred_region
          %964 = dma.done %s957, 1024
        $region140: #{cell_line_graph_forward.1} parent=87 // pred_fallthru
          _
        %s965 = sand.u32 %s55, 1
        %s966 = scalar_lea.sflag [#allocation23], %s965
        %s967 = sand.u32 %s427, 1
        %s968 = scalar_lea.vmem [#allocation22], %s967
        // Predicated region
        $region141: #{cell_line_graph_forward.1} parent=87 // pred_check
          %p969 = pneg %p440
        $region142: #{cell_line_graph_forward.1} parent=87 // pred_check_branch
          %971 = sbr.rel (%p969) target = $region144
        $region143: #{cell_line_graph_forward.1} parent=87 // pred_region
          %972 = dma.done %s966, 16
        $region144: #{cell_line_graph_forward.1} parent=87 // pred_fallthru
          _
        %s973 = sand.u32 %s55, 1
        %s974 = scalar_lea.sflag [#allocation23], %s973
        %s975 = sand.u32 %s453, 1
        %s976 = scalar_lea.vmem [#allocation24], %s975
        // Predicated region
        $region145: #{cell_line_graph_forward.1} parent=87 // pred_check
          %p977 = pneg %p466
        $region146: #{cell_line_graph_forward.1} parent=87 // pred_check_branch
          %979 = sbr.rel (%p977) target = $region148
        $region147: #{cell_line_graph_forward.1} parent=87 // pred_region
          %980 = dma.done %s974, 16
        $region148: #{cell_line_graph_forward.1} parent=87 // pred_fallthru
          _
        %s981 = sand.u32 %s479, 1
        %s982 = scalar_lea.sflag [#allocation26], %s981
        %s983 = sand.u32 %s479, 1
        %s984 = scalar_lea.vmem [#allocation25], %s983
        // Predicated region
        $region149: #{cell_line_graph_forward.1} parent=87 // pred_check
          %p985 = pneg %p492
        $region150: #{cell_line_graph_forward.1} parent=87 // pred_check_branch
          %987 = sbr.rel (%p985) target = $region152
        $region151: #{cell_line_graph_forward.1} parent=87 // pred_region
          %988 = dma.done %s982, 16
        $region152: #{cell_line_graph_forward.1} parent=87 // pred_fallthru
          _
        %p989 = scmp.lt.s32.totalorder %s55, 1
        %s990 = scalar_select %p989, %s55, 1
        %s991 = smul.addr %s990, 6
        %s992 = scalar_lea.vmem %s0, %s991
        %p993 = pneg %p76
        %p994 = pneg %p73
        %s995 = sand.u32 %s89, 1
        %s996 = scalar_lea.sflag [#allocation3], %s995
        %s997 = sand.u32 %s89, 1
        %s998 = smul.addr %s997, 1536
        %s999 = scalar_lea.vmem [#allocation2], %s998
        %p1000 = pneg %p102
        %p1001 = pneg %p99
        %s1002 = sand.u32 %s55, 1
        %s1003 = scalar_lea.sflag [#allocation5], %s1002
        %s1004 = sand.u32 %s115, 1
        %s1005 = smul.addr %s1004, 4
        %s1006 = scalar_lea.vmem [#allocation4], %s1005
        %p1007 = pneg %p128
        %p1008 = pneg %p125
        %s1009 = sand.u32 %s55, 1
        %s1010 = scalar_lea.sflag [#allocation5], %s1009
        %s1011 = sand.u32 %s141, 1
        %s1012 = smul.addr %s1011, 4
        %s1013 = scalar_lea.vmem [#allocation6], %s1012
        %p1014 = pneg %p154
        %p1015 = pneg %p151
        %s1016 = sand.u32 %s55, 1
        %s1017 = scalar_lea.sflag [#allocation8], %s1016
        %s1018 = sand.u32 %s167, 1
        %s1019 = smul.addr %s1018, 4
        %s1020 = scalar_lea.vmem [#allocation7], %s1019
        %p1021 = pneg %p180
        %p1022 = pneg %p177
        %s1023 = sand.u32 %s55, 1
        %s1024 = scalar_lea.sflag [#allocation8], %s1023
        %s1025 = sand.u32 %s193, 1
        %s1026 = smul.addr %s1025, 512
        %s1027 = scalar_lea.vmem [#allocation9], %s1026
        %p1028 = pneg %p206
        %p1029 = pneg %p203
        %s1030 = sand.u32 %s55, 1
        %s1031 = scalar_lea.sflag [#allocation11], %s1030
        %s1032 = sand.u32 %s219, 1
        %s1033 = smul.addr %s1032, 2
        %s1034 = scalar_lea.vmem [#allocation10], %s1033
        %p1035 = pneg %p232
        %p1036 = pneg %p229
        %s1037 = sand.u32 %s55, 1
        %s1038 = scalar_lea.sflag [#allocation11], %s1037
        %s1039 = sand.u32 %s245, 1
        %s1040 = smul.addr %s1039, 2
        %s1041 = scalar_lea.vmem [#allocation12], %s1040
        %p1042 = pneg %p258
        %p1043 = pneg %p255
        %s1044 = sand.u32 %s55, 1
        %s1045 = scalar_lea.sflag [#allocation14], %s1044
        %s1046 = sand.u32 %s271, 1
        %s1047 = smul.addr %s1046, 2
        %s1048 = scalar_lea.vmem [#allocation13], %s1047
        %p1049 = pneg %p284
        %p1050 = pneg %p281
        %s1051 = sand.u32 %s55, 1
        %s1052 = scalar_lea.sflag [#allocation14], %s1051
        %s1053 = sand.u32 %s297, 1
        %s1054 = smul.addr %s1053, 128
        %s1055 = scalar_lea.vmem [#allocation15], %s1054
        %p1056 = pneg %p310
        %p1057 = pneg %p307
        %s1058 = sand.u32 %s55, 1
        %s1059 = scalar_lea.sflag [#allocation17], %s1058
        %s1060 = sand.u32 %s323, 1
        %s1061 = scalar_lea.vmem [#allocation16], %s1060
        %p1062 = pneg %p336
        %p1063 = pneg %p333
        %s1064 = sand.u32 %s55, 1
        %s1065 = scalar_lea.sflag [#allocation17], %s1064
        %s1066 = sand.u32 %s349, 1
        %s1067 = scalar_lea.vmem [#allocation18], %s1066
        %p1068 = pneg %p362
        %p1069 = pneg %p359
        %s1070 = sand.u32 %s55, 1
        %s1071 = scalar_lea.sflag [#allocation20], %s1070
        %s1072 = sand.u32 %s375, 1
        %s1073 = scalar_lea.vmem [#allocation19], %s1072
        %p1074 = pneg %p388
        %p1075 = pneg %p385
        %s1076 = sand.u32 %s55, 1
        %s1077 = scalar_lea.sflag [#allocation20], %s1076
        %s1078 = sand.u32 %s401, 1
        %s1079 = smul.addr %s1078, 64
        %s1080 = scalar_lea.vmem [#allocation21], %s1079
        %p1081 = pneg %p414
        %p1082 = pneg %p411
        %s1083 = sand.u32 %s55, 1
        %s1084 = scalar_lea.sflag [#allocation23], %s1083
        %s1085 = sand.u32 %s427, 1
        %s1086 = scalar_lea.vmem [#allocation22], %s1085
        %p1087 = pneg %p440
        %p1088 = pneg %p437
        %s1089 = sand.u32 %s55, 1
        %s1090 = scalar_lea.sflag [#allocation23], %s1089
        %s1091 = sand.u32 %s453, 1
        %s1092 = scalar_lea.vmem [#allocation24], %s1091
        %p1093 = pneg %p466
        %p1094 = pneg %p463
        %s1095 = sand.u32 %s479, 1
        %s1096 = scalar_lea.sflag [#allocation26], %s1095
        %s1097 = sand.u32 %s479, 1
        %s1098 = scalar_lea.vmem [#allocation25], %s1097
        %p1099 = pneg %p492
        %p1100 = pneg %p489
        %p1101 = pneg %p518
        %p1102 = pneg %p515
        %p1103 = scmp.lt.s32.totalorder %s55, 1
        %s1104 = scalar_select %p1103, %s55, 1
        %s1105 = smul.addr %s1104, 2
        %s1106 = scalar_lea.vmem %s17, %s1105
        %p1107 = scmp.lt.s32.totalorder %s55, 1
        %s1108 = scalar_select %p1107, %s55, 1
        %s1109 = smul.addr %s1108, 6
        %s1110 = scalar_lea.vmem %s0, %s1109
        %p1111 = scmp.lt.s32.totalorder %s55, 1
        %s1112 = scalar_select %p1111, %s55, 1
        %s1113 = smul.addr %s1112, 2
        %s1114 = scalar_lea.vmem %s17, %s1113
        %v1116 = vld [vmem:[%s1110] sm:$0x3f]
        %v1117 = vld [vmem:[%s855] sm:$0xff]
        %v1118 = vld [vmem:[%s855 + $0x8] sm:$0xff]
        %v1119 = vld [vmem:[%s855 + $0x10] sm:$0xff]
        %v1120 = vld [vmem:[%s855 + $0x18] sm:$0xff]
        %v1121 = vld [vmem:[%s855 + $0x20] sm:$0xff]
        %v1122 = vld [vmem:[%s855 + $0x28] sm:$0xff]
        %v1123 = vld [vmem:[%s855 + $0x30] sm:$0xff]
        %v1124 = vld [vmem:[%s855 + $0x38] sm:$0xff]
        %v1125 = vld [vmem:[%s855 + $0x40] sm:$0xff]
        %v1126 = vld [vmem:[%s855 + $0x48] sm:$0xff]
        %v1127 = vld [vmem:[%s855 + $0x50] sm:$0xff]
        %v1128 = vld [vmem:[%s855 + $0x58] sm:$0xff]
        %v1129 = vld [vmem:[%s855 + $0x60] sm:$0xff]
        %v1130 = vld [vmem:[%s855 + $0x68] sm:$0xff]
        %v1131 = vld [vmem:[%s855 + $0x70] sm:$0xff]
        %v1132 = vld [vmem:[%s855 + $0x78] sm:$0xff]
        %v1133 = vld [vmem:[%s855 + $0x80] sm:$0xff]
        %v1134 = vld [vmem:[%s855 + $0x88] sm:$0xff]
        %v1135 = vld [vmem:[%s855 + $0x90] sm:$0xff]
        %v1136 = vld [vmem:[%s855 + $0x98] sm:$0xff]
        %v1137 = vld [vmem:[%s855 + $0xa0] sm:$0xff]
        %v1138 = vld [vmem:[%s855 + $0xa8] sm:$0xff]
        %v1139 = vld [vmem:[%s855 + $0xb0] sm:$0xff]
        %v1140 = vld [vmem:[%s855 + $0xb8] sm:$0xff]
        %v1141 = vld [vmem:[%s855 + $0xc0] sm:$0xff]
        %v1142 = vld [vmem:[%s855 + $0xc8] sm:$0xff]
        %v1143 = vld [vmem:[%s855 + $0xd0] sm:$0xff]
        %v1144 = vld [vmem:[%s855 + $0xd8] sm:$0xff]
        %v1145 = vld [vmem:[%s855 + $0xe0] sm:$0xff]
        %v1146 = vld [vmem:[%s855 + $0xe8] sm:$0xff]
        %v1147 = vld [vmem:[%s855 + $0xf0] sm:$0xff]
        %v1148 = vld [vmem:[%s855 + $0xf8] sm:$0xff]
        %v1149 = vld [vmem:[%s855 + $0x100] sm:$0xff]
        %v1150 = vld [vmem:[%s855 + $0x108] sm:$0xff]
        %v1151 = vld [vmem:[%s855 + $0x110] sm:$0xff]
        %v1152 = vld [vmem:[%s855 + $0x118] sm:$0xff]
        %v1153 = vld [vmem:[%s855 + $0x120] sm:$0xff]
        %v1154 = vld [vmem:[%s855 + $0x128] sm:$0xff]
        %v1155 = vld [vmem:[%s855 + $0x130] sm:$0xff]
        %v1156 = vld [vmem:[%s855 + $0x138] sm:$0xff]
        %v1157 = vld [vmem:[%s855 + $0x140] sm:$0xff]
        %v1158 = vld [vmem:[%s855 + $0x148] sm:$0xff]
        %v1159 = vld [vmem:[%s855 + $0x150] sm:$0xff]
        %v1160 = vld [vmem:[%s855 + $0x158] sm:$0xff]
        %v1161 = vld [vmem:[%s855 + $0x160] sm:$0xff]
        %v1162 = vld [vmem:[%s855 + $0x168] sm:$0xff]
        %v1163 = vld [vmem:[%s855 + $0x170] sm:$0xff]
        %v1164 = vld [vmem:[%s855 + $0x178] sm:$0xff]
        %v1165 = vld [vmem:[%s855 + $0x180] sm:$0xff]
        %v1166 = vld [vmem:[%s855 + $0x188] sm:$0xff]
        %v1167 = vld [vmem:[%s855 + $0x190] sm:$0xff]
        %v1168 = vld [vmem:[%s855 + $0x198] sm:$0xff]
        %v1169 = vld [vmem:[%s855 + $0x1a0] sm:$0xff]
        %v1170 = vld [vmem:[%s855 + $0x1a8] sm:$0xff]
        %v1171 = vld [vmem:[%s855 + $0x1b0] sm:$0xff]
        %v1172 = vld [vmem:[%s855 + $0x1b8] sm:$0xff]
        %v1173 = vld [vmem:[%s855 + $0x1c0] sm:$0xff]
        %v1174 = vld [vmem:[%s855 + $0x1c8] sm:$0xff]
        %v1175 = vld [vmem:[%s855 + $0x1d0] sm:$0xff]
        %v1176 = vld [vmem:[%s855 + $0x1d8] sm:$0xff]
        %v1177 = vld [vmem:[%s855 + $0x1e0] sm:$0xff]
        %v1178 = vld [vmem:[%s855 + $0x1e8] sm:$0xff]
        %v1179 = vld [vmem:[%s855 + $0x1f0] sm:$0xff]
        %v1180 = vld [vmem:[%s855 + $0x1f8] sm:$0xff]
        %v1181 = vld [vmem:[%s855 + $0x200] sm:$0xff]
        %v1182 = vld [vmem:[%s855 + $0x208] sm:$0xff]
        %v1183 = vld [vmem:[%s855 + $0x210] sm:$0xff]
        %v1184 = vld [vmem:[%s855 + $0x218] sm:$0xff]
        %v1185 = vld [vmem:[%s855 + $0x220] sm:$0xff]
        %v1186 = vld [vmem:[%s855 + $0x228] sm:$0xff]
        %v1187 = vld [vmem:[%s855 + $0x230] sm:$0xff]
        %v1188 = vld [vmem:[%s855 + $0x238] sm:$0xff]
        %v1189 = vld [vmem:[%s855 + $0x240] sm:$0xff]
        %v1190 = vld [vmem:[%s855 + $0x248] sm:$0xff]
        %v1191 = vld [vmem:[%s855 + $0x250] sm:$0xff]
        %v1192 = vld [vmem:[%s855 + $0x258] sm:$0xff]
        %v1193 = vld [vmem:[%s855 + $0x260] sm:$0xff]
        %v1194 = vld [vmem:[%s855 + $0x268] sm:$0xff]
        %v1195 = vld [vmem:[%s855 + $0x270] sm:$0xff]
        %v1196 = vld [vmem:[%s855 + $0x278] sm:$0xff]
        %v1197 = vld [vmem:[%s855 + $0x280] sm:$0xff]
        %v1198 = vld [vmem:[%s855 + $0x288] sm:$0xff]
        %v1199 = vld [vmem:[%s855 + $0x290] sm:$0xff]
        %v1200 = vld [vmem:[%s855 + $0x298] sm:$0xff]
        %v1201 = vld [vmem:[%s855 + $0x2a0] sm:$0xff]
        %v1202 = vld [vmem:[%s855 + $0x2a8] sm:$0xff]
        %v1203 = vld [vmem:[%s855 + $0x2b0] sm:$0xff]
        %v1204 = vld [vmem:[%s855 + $0x2b8] sm:$0xff]
        %v1205 = vld [vmem:[%s855 + $0x2c0] sm:$0xff]
        %v1206 = vld [vmem:[%s855 + $0x2c8] sm:$0xff]
        %v1207 = vld [vmem:[%s855 + $0x2d0] sm:$0xff]
        %v1208 = vld [vmem:[%s855 + $0x2d8] sm:$0xff]
        %v1209 = vld [vmem:[%s855 + $0x2e0] sm:$0xff]
        %v1210 = vld [vmem:[%s855 + $0x2e8] sm:$0xff]
        %v1211 = vld [vmem:[%s855 + $0x2f0] sm:$0xff]
        %v1212 = vld [vmem:[%s855 + $0x2f8] sm:$0xff]
        %v1213 = vld [vmem:[%s855 + $0x300] sm:$0xff]
        %v1214 = vld [vmem:[%s855 + $0x308] sm:$0xff]
        %v1215 = vld [vmem:[%s855 + $0x310] sm:$0xff]
        %v1216 = vld [vmem:[%s855 + $0x318] sm:$0xff]
        %v1217 = vld [vmem:[%s855 + $0x320] sm:$0xff]
        %v1218 = vld [vmem:[%s855 + $0x328] sm:$0xff]
        %v1219 = vld [vmem:[%s855 + $0x330] sm:$0xff]
        %v1220 = vld [vmem:[%s855 + $0x338] sm:$0xff]
        %v1221 = vld [vmem:[%s855 + $0x340] sm:$0xff]
        %v1222 = vld [vmem:[%s855 + $0x348] sm:$0xff]
        %v1223 = vld [vmem:[%s855 + $0x350] sm:$0xff]
        %v1224 = vld [vmem:[%s855 + $0x358] sm:$0xff]
        %v1225 = vld [vmem:[%s855 + $0x360] sm:$0xff]
        %v1226 = vld [vmem:[%s855 + $0x368] sm:$0xff]
        %v1227 = vld [vmem:[%s855 + $0x370] sm:$0xff]
        %v1228 = vld [vmem:[%s855 + $0x378] sm:$0xff]
        %v1229 = vld [vmem:[%s855 + $0x380] sm:$0xff]
        %v1230 = vld [vmem:[%s855 + $0x388] sm:$0xff]
        %v1231 = vld [vmem:[%s855 + $0x390] sm:$0xff]
        %v1232 = vld [vmem:[%s855 + $0x398] sm:$0xff]
        %v1233 = vld [vmem:[%s855 + $0x3a0] sm:$0xff]
        %v1234 = vld [vmem:[%s855 + $0x3a8] sm:$0xff]
        %v1235 = vld [vmem:[%s855 + $0x3b0] sm:$0xff]
        %v1236 = vld [vmem:[%s855 + $0x3b8] sm:$0xff]
        %v1237 = vld [vmem:[%s855 + $0x3c0] sm:$0xff]
        %v1238 = vld [vmem:[%s855 + $0x3c8] sm:$0xff]
        %v1239 = vld [vmem:[%s855 + $0x3d0] sm:$0xff]
        %v1240 = vld [vmem:[%s855 + $0x3d8] sm:$0xff]
        %v1241 = vld [vmem:[%s855 + $0x3e0] sm:$0xff]
        %v1242 = vld [vmem:[%s855 + $0x3e8] sm:$0xff]
        %v1243 = vld [vmem:[%s855 + $0x3f0] sm:$0xff]
        %v1244 = vld [vmem:[%s855 + $0x3f8] sm:$0xff]
        %v1245 = vld [vmem:[%s855 + $0x400] sm:$0xff]
        %v1246 = vld [vmem:[%s855 + $0x408] sm:$0xff]
        %v1247 = vld [vmem:[%s855 + $0x410] sm:$0xff]
        %v1248 = vld [vmem:[%s855 + $0x418] sm:$0xff]
        %v1249 = vld [vmem:[%s855 + $0x420] sm:$0xff]
        %v1250 = vld [vmem:[%s855 + $0x428] sm:$0xff]
        %v1251 = vld [vmem:[%s855 + $0x430] sm:$0xff]
        %v1252 = vld [vmem:[%s855 + $0x438] sm:$0xff]
        %v1253 = vld [vmem:[%s855 + $0x440] sm:$0xff]
        %v1254 = vld [vmem:[%s855 + $0x448] sm:$0xff]
        %v1255 = vld [vmem:[%s855 + $0x450] sm:$0xff]
        %v1256 = vld [vmem:[%s855 + $0x458] sm:$0xff]
        %v1257 = vld [vmem:[%s855 + $0x460] sm:$0xff]
        %v1258 = vld [vmem:[%s855 + $0x468] sm:$0xff]
        %v1259 = vld [vmem:[%s855 + $0x470] sm:$0xff]
        %v1260 = vld [vmem:[%s855 + $0x478] sm:$0xff]
        %v1261 = vld [vmem:[%s855 + $0x480] sm:$0xff]
        %v1262 = vld [vmem:[%s855 + $0x488] sm:$0xff]
        %v1263 = vld [vmem:[%s855 + $0x490] sm:$0xff]
        %v1264 = vld [vmem:[%s855 + $0x498] sm:$0xff]
        %v1265 = vld [vmem:[%s855 + $0x4a0] sm:$0xff]
        %v1266 = vld [vmem:[%s855 + $0x4a8] sm:$0xff]
        %v1267 = vld [vmem:[%s855 + $0x4b0] sm:$0xff]
        %v1268 = vld [vmem:[%s855 + $0x4b8] sm:$0xff]
        %v1269 = vld [vmem:[%s855 + $0x4c0] sm:$0xff]
        %v1270 = vld [vmem:[%s855 + $0x4c8] sm:$0xff]
        %v1271 = vld [vmem:[%s855 + $0x4d0] sm:$0xff]
        %v1272 = vld [vmem:[%s855 + $0x4d8] sm:$0xff]
        %v1273 = vld [vmem:[%s855 + $0x4e0] sm:$0xff]
        %v1274 = vld [vmem:[%s855 + $0x4e8] sm:$0xff]
        %v1275 = vld [vmem:[%s855 + $0x4f0] sm:$0xff]
        %v1276 = vld [vmem:[%s855 + $0x4f8] sm:$0xff]
        %v1277 = vld [vmem:[%s855 + $0x500] sm:$0xff]
        %v1278 = vld [vmem:[%s855 + $0x508] sm:$0xff]
        %v1279 = vld [vmem:[%s855 + $0x510] sm:$0xff]
        %v1280 = vld [vmem:[%s855 + $0x518] sm:$0xff]
        %v1281 = vld [vmem:[%s855 + $0x520] sm:$0xff]
        %v1282 = vld [vmem:[%s855 + $0x528] sm:$0xff]
        %v1283 = vld [vmem:[%s855 + $0x530] sm:$0xff]
        %v1284 = vld [vmem:[%s855 + $0x538] sm:$0xff]
        %v1285 = vld [vmem:[%s855 + $0x540] sm:$0xff]
        %v1286 = vld [vmem:[%s855 + $0x548] sm:$0xff]
        %v1287 = vld [vmem:[%s855 + $0x550] sm:$0xff]
        %v1288 = vld [vmem:[%s855 + $0x558] sm:$0xff]
        %v1289 = vld [vmem:[%s855 + $0x560] sm:$0xff]
        %v1290 = vld [vmem:[%s855 + $0x568] sm:$0xff]
        %v1291 = vld [vmem:[%s855 + $0x570] sm:$0xff]
        %v1292 = vld [vmem:[%s855 + $0x578] sm:$0xff]
        %v1293 = vld [vmem:[%s855 + $0x580] sm:$0xff]
        %v1294 = vld [vmem:[%s855 + $0x588] sm:$0xff]
        %v1295 = vld [vmem:[%s855 + $0x590] sm:$0xff]
        %v1296 = vld [vmem:[%s855 + $0x598] sm:$0xff]
        %v1297 = vld [vmem:[%s855 + $0x5a0] sm:$0xff]
        %v1298 = vld [vmem:[%s855 + $0x5a8] sm:$0xff]
        %v1299 = vld [vmem:[%s855 + $0x5b0] sm:$0xff]
        %v1300 = vld [vmem:[%s855 + $0x5b8] sm:$0xff]
        %v1301 = vld [vmem:[%s855 + $0x5c0] sm:$0xff]
        %v1302 = vld [vmem:[%s855 + $0x5c8] sm:$0xff]
        %v1303 = vld [vmem:[%s855 + $0x5d0] sm:$0xff]
        %v1304 = vld [vmem:[%s855 + $0x5d8] sm:$0xff]
        %v1305 = vld [vmem:[%s855 + $0x5e0] sm:$0xff]
        %v1306 = vld [vmem:[%s855 + $0x5e8] sm:$0xff]
        %v1307 = vld [vmem:[%s855 + $0x5f0] sm:$0xff]
        %v1308 = vld [vmem:[%s855 + $0x5f8] sm:$0xff]
        %v1309 = vld [vmem:[%s864] sm:$0xf]
        %v1311 = vlaneseq
        %v1312 = vshrl.u32 %v1311, 7
        %v1313 = vsub.s32 0, %v1312
        %v1314 = vrot.slane %v1309, %v1313
        %v1315 = vlaneseq
        %v1316 = vshrl.u32 %v1315, 7
        %v1317 = vsub.s32 1, %v1316
        %v1318 = vrot.slane %v1309, %v1317
        %v1319 = vlaneseq
        %v1320 = vshrl.u32 %v1319, 7
        %v1321 = vsub.s32 2, %v1320
        %v1322 = vrot.slane %v1309, %v1321
        %v1323 = vlaneseq
        %v1324 = vshrl.u32 %v1323, 7
        %v1325 = vsub.s32 3, %v1324
        %v1326 = vrot.slane %v1309, %v1325
        %v1332 = vcombine.high %v1116, %v1116
        %v1334 = vunpack.c.l.s4 1966171168
        %v1335 = vunpack.c.0.s8 %v1334
        %v1336 = vlaneseq
        %v1337 = vshrl.u32 %v1336, 7
        %v1338 = vsub.s32 %v1335, %v1337
        %v1339 = vrot.slane %v1116, %v1338
        %v1341 = vunpack.c.l.s4 1966171168
        %v1342 = vunpack.c.0.s8 %v1341
        %v1343 = vlaneseq
        %v1344 = vshrl.u32 %v1343, 7
        %v1345 = vsub.s32 %v1342, %v1344
        %v1346 = vrot.slane %v1332, %v1345
        %v1347 = vcombine.high %v1339, %v1339
        %v1348 = vcombine.high %v1346, %v1346
        %v1350 = vunpack.c.l.s4 1966171168
        %v1351 = vunpack.c.0.s8 %v1350
        %v1352 = vlaneseq
        %v1353 = vshrl.u32 %v1352, 7
        %v1354 = vsub.s32 %v1351, %v1353
        %v1355 = vrot.slane %v1339, %v1354
        %v1357 = vunpack.c.l.s4 1966171168
        %v1358 = vunpack.c.0.s8 %v1357
        %v1359 = vlaneseq
        %v1360 = vshrl.u32 %v1359, 7
        %v1361 = vsub.s32 %v1358, %v1360
        %v1362 = vrot.slane %v1346, %v1361
        %v1364 = vunpack.c.l.s4 1966171168
        %v1365 = vunpack.c.0.s8 %v1364
        %v1366 = vlaneseq
        %v1367 = vshrl.u32 %v1366, 7
        %v1368 = vsub.s32 %v1365, %v1367
        %v1369 = vrot.slane %v1347, %v1368
        %v1371 = vunpack.c.l.s4 1966171168
        %v1372 = vunpack.c.0.s8 %v1371
        %v1373 = vlaneseq
        %v1374 = vshrl.u32 %v1373, 7
        %v1375 = vsub.s32 %v1372, %v1374
        %v1376 = vrot.slane %v1348, %v1375
        %v1377 = vcombine.high %v1355, %v1355
        %v1378 = vcombine.high %v1369, %v1369
        %v1577 = vunpack.c.l.b16 %v1117
        %v1578 = vunpack.c.h.b16 %v1117
        %v1579 = vunpack.c.l.b16 %v1118
        %v1580 = vunpack.c.h.b16 %v1118
        %v1581 = vunpack.c.l.b16 %v1119
        %v1582 = vunpack.c.h.b16 %v1119
        %v1583 = vunpack.c.l.b16 %v1120
        %v1584 = vunpack.c.h.b16 %v1120
        %v1585 = vunpack.c.l.b16 %v1121
        %v1586 = vunpack.c.h.b16 %v1121
        %v1587 = vunpack.c.l.b16 %v1122
        %v1588 = vunpack.c.h.b16 %v1122
        %v1589 = vunpack.c.l.b16 %v1123
        %v1590 = vunpack.c.h.b16 %v1123
        %v1591 = vunpack.c.l.b16 %v1124
        %v1592 = vunpack.c.h.b16 %v1124
        %v1593 = vunpack.c.l.b16 %v1125
        %v1594 = vunpack.c.h.b16 %v1125
        %v1595 = vunpack.c.l.b16 %v1126
        %v1596 = vunpack.c.h.b16 %v1126
        %v1597 = vunpack.c.l.b16 %v1127
        %v1598 = vunpack.c.h.b16 %v1127
        %v1599 = vunpack.c.l.b16 %v1128
        %v1600 = vunpack.c.h.b16 %v1128
        %v1601 = vunpack.c.l.b16 %v1129
        %v1602 = vunpack.c.h.b16 %v1129
        %v1603 = vunpack.c.l.b16 %v1130
        %v1604 = vunpack.c.h.b16 %v1130
        %v1605 = vunpack.c.l.b16 %v1131
        %v1606 = vunpack.c.h.b16 %v1131
        %v1607 = vunpack.c.l.b16 %v1132
        %v1608 = vunpack.c.h.b16 %v1132
        %v1609 = vunpack.c.l.b16 %v1133
        %v1610 = vunpack.c.h.b16 %v1133
        %v1611 = vunpack.c.l.b16 %v1134
        %v1612 = vunpack.c.h.b16 %v1134
        %v1613 = vunpack.c.l.b16 %v1135
        %v1614 = vunpack.c.h.b16 %v1135
        %v1615 = vunpack.c.l.b16 %v1136
        %v1616 = vunpack.c.h.b16 %v1136
        %v1617 = vunpack.c.l.b16 %v1137
        %v1618 = vunpack.c.h.b16 %v1137
        %v1619 = vunpack.c.l.b16 %v1138
        %v1620 = vunpack.c.h.b16 %v1138
        %v1621 = vunpack.c.l.b16 %v1139
        %v1622 = vunpack.c.h.b16 %v1139
        %v1623 = vunpack.c.l.b16 %v1140
        %v1624 = vunpack.c.h.b16 %v1140
        %v1625 = vunpack.c.l.b16 %v1141
        %v1626 = vunpack.c.h.b16 %v1141
        %v1627 = vunpack.c.l.b16 %v1142
        %v1628 = vunpack.c.h.b16 %v1142
        %v1629 = vunpack.c.l.b16 %v1143
        %v1630 = vunpack.c.h.b16 %v1143
        %v1631 = vunpack.c.l.b16 %v1144
        %v1632 = vunpack.c.h.b16 %v1144
        %v1633 = vunpack.c.l.b16 %v1145
        %v1634 = vunpack.c.h.b16 %v1145
        %v1635 = vunpack.c.l.b16 %v1146
        %v1636 = vunpack.c.h.b16 %v1146
        %v1637 = vunpack.c.l.b16 %v1147
        %v1638 = vunpack.c.h.b16 %v1147
        %v1639 = vunpack.c.l.b16 %v1148
        %v1640 = vunpack.c.h.b16 %v1148
        %v1641 = vunpack.c.l.b16 %v1149
        %v1642 = vunpack.c.h.b16 %v1149
        %v1643 = vunpack.c.l.b16 %v1150
        %v1644 = vunpack.c.h.b16 %v1150
        %v1645 = vunpack.c.l.b16 %v1151
        %v1646 = vunpack.c.h.b16 %v1151
        %v1647 = vunpack.c.l.b16 %v1152
        %v1648 = vunpack.c.h.b16 %v1152
        %v1649 = vunpack.c.l.b16 %v1153
        %v1650 = vunpack.c.h.b16 %v1153
        %v1651 = vunpack.c.l.b16 %v1154
        %v1652 = vunpack.c.h.b16 %v1154
        %v1653 = vunpack.c.l.b16 %v1155
        %v1654 = vunpack.c.h.b16 %v1155
        %v1655 = vunpack.c.l.b16 %v1156
        %v1656 = vunpack.c.h.b16 %v1156
        %v1657 = vunpack.c.l.b16 %v1157
        %v1658 = vunpack.c.h.b16 %v1157
        %v1659 = vunpack.c.l.b16 %v1158
        %v1660 = vunpack.c.h.b16 %v1158
        %v1661 = vunpack.c.l.b16 %v1159
        %v1662 = vunpack.c.h.b16 %v1159
        %v1663 = vunpack.c.l.b16 %v1160
        %v1664 = vunpack.c.h.b16 %v1160
        %v1665 = vunpack.c.l.b16 %v1161
        %v1666 = vunpack.c.h.b16 %v1161
        %v1667 = vunpack.c.l.b16 %v1162
        %v1668 = vunpack.c.h.b16 %v1162
        %v1669 = vunpack.c.l.b16 %v1163
        %v1670 = vunpack.c.h.b16 %v1163
        %v1671 = vunpack.c.l.b16 %v1164
        %v1672 = vunpack.c.h.b16 %v1164
        %v1673 = vunpack.c.l.b16 %v1165
        %v1674 = vunpack.c.h.b16 %v1165
        %v1675 = vunpack.c.l.b16 %v1166
        %v1676 = vunpack.c.h.b16 %v1166
        %v1677 = vunpack.c.l.b16 %v1167
        %v1678 = vunpack.c.h.b16 %v1167
        %v1679 = vunpack.c.l.b16 %v1168
        %v1680 = vunpack.c.h.b16 %v1168
        %v1681 = vunpack.c.l.b16 %v1169
        %v1682 = vunpack.c.h.b16 %v1169
        %v1683 = vunpack.c.l.b16 %v1170
        %v1684 = vunpack.c.h.b16 %v1170
        %v1685 = vunpack.c.l.b16 %v1171
        %v1686 = vunpack.c.h.b16 %v1171
        %v1687 = vunpack.c.l.b16 %v1172
        %v1688 = vunpack.c.h.b16 %v1172
        %v1689 = vunpack.c.l.b16 %v1173
        %v1690 = vunpack.c.h.b16 %v1173
        %v1691 = vunpack.c.l.b16 %v1174
        %v1692 = vunpack.c.h.b16 %v1174
        %v1693 = vunpack.c.l.b16 %v1175
        %v1694 = vunpack.c.h.b16 %v1175
        %v1695 = vunpack.c.l.b16 %v1176
        %v1696 = vunpack.c.h.b16 %v1176
        %v1697 = vunpack.c.l.b16 %v1177
        %v1698 = vunpack.c.h.b16 %v1177
        %v1699 = vunpack.c.l.b16 %v1178
        %v1700 = vunpack.c.h.b16 %v1178
        %v1701 = vunpack.c.l.b16 %v1179
        %v1702 = vunpack.c.h.b16 %v1179
        %v1703 = vunpack.c.l.b16 %v1180
        %v1704 = vunpack.c.h.b16 %v1180
        %v1705 = vunpack.c.l.b16 %v1181
        %v1706 = vunpack.c.h.b16 %v1181
        %v1707 = vunpack.c.l.b16 %v1182
        %v1708 = vunpack.c.h.b16 %v1182
        %v1709 = vunpack.c.l.b16 %v1183
        %v1710 = vunpack.c.h.b16 %v1183
        %v1711 = vunpack.c.l.b16 %v1184
        %v1712 = vunpack.c.h.b16 %v1184
        %v1713 = vunpack.c.l.b16 %v1185
        %v1714 = vunpack.c.h.b16 %v1185
        %v1715 = vunpack.c.l.b16 %v1186
        %v1716 = vunpack.c.h.b16 %v1186
        %v1717 = vunpack.c.l.b16 %v1187
        %v1718 = vunpack.c.h.b16 %v1187
        %v1719 = vunpack.c.l.b16 %v1188
        %v1720 = vunpack.c.h.b16 %v1188
        %v1721 = vunpack.c.l.b16 %v1189
        %v1722 = vunpack.c.h.b16 %v1189
        %v1723 = vunpack.c.l.b16 %v1190
        %v1724 = vunpack.c.h.b16 %v1190
        %v1725 = vunpack.c.l.b16 %v1191
        %v1726 = vunpack.c.h.b16 %v1191
        %v1727 = vunpack.c.l.b16 %v1192
        %v1728 = vunpack.c.h.b16 %v1192
        %v1729 = vunpack.c.l.b16 %v1193
        %v1730 = vunpack.c.h.b16 %v1193
        %v1731 = vunpack.c.l.b16 %v1194
        %v1732 = vunpack.c.h.b16 %v1194
        %v1733 = vunpack.c.l.b16 %v1195
        %v1734 = vunpack.c.h.b16 %v1195
        %v1735 = vunpack.c.l.b16 %v1196
        %v1736 = vunpack.c.h.b16 %v1196
        %v1737 = vunpack.c.l.b16 %v1197
        %v1738 = vunpack.c.h.b16 %v1197
        %v1739 = vunpack.c.l.b16 %v1198
        %v1740 = vunpack.c.h.b16 %v1198
        %v1741 = vunpack.c.l.b16 %v1199
        %v1742 = vunpack.c.h.b16 %v1199
        %v1743 = vunpack.c.l.b16 %v1200
        %v1744 = vunpack.c.h.b16 %v1200
        %v1745 = vunpack.c.l.b16 %v1201
        %v1746 = vunpack.c.h.b16 %v1201
        %v1747 = vunpack.c.l.b16 %v1202
        %v1748 = vunpack.c.h.b16 %v1202
        %v1749 = vunpack.c.l.b16 %v1203
        %v1750 = vunpack.c.h.b16 %v1203
        %v1751 = vunpack.c.l.b16 %v1204
        %v1752 = vunpack.c.h.b16 %v1204
        %v1753 = vunpack.c.l.b16 %v1205
        %v1754 = vunpack.c.h.b16 %v1205
        %v1755 = vunpack.c.l.b16 %v1206
        %v1756 = vunpack.c.h.b16 %v1206
        %v1757 = vunpack.c.l.b16 %v1207
        %v1758 = vunpack.c.h.b16 %v1207
        %v1759 = vunpack.c.l.b16 %v1208
        %v1760 = vunpack.c.h.b16 %v1208
        %v1761 = vunpack.c.l.b16 %v1209
        %v1762 = vunpack.c.h.b16 %v1209
        %v1763 = vunpack.c.l.b16 %v1210
        %v1764 = vunpack.c.h.b16 %v1210
        %v1765 = vunpack.c.l.b16 %v1211
        %v1766 = vunpack.c.h.b16 %v1211
        %v1767 = vunpack.c.l.b16 %v1212
        %v1768 = vunpack.c.h.b16 %v1212
        %v1769 = vunpack.c.l.b16 %v1213
        %v1770 = vunpack.c.h.b16 %v1213
        %v1771 = vunpack.c.l.b16 %v1214
        %v1772 = vunpack.c.h.b16 %v1214
        %v1773 = vunpack.c.l.b16 %v1215
        %v1774 = vunpack.c.h.b16 %v1215
        %v1775 = vunpack.c.l.b16 %v1216
        %v1776 = vunpack.c.h.b16 %v1216
        %v1777 = vunpack.c.l.b16 %v1217
        %v1778 = vunpack.c.h.b16 %v1217
        %v1779 = vunpack.c.l.b16 %v1218
        %v1780 = vunpack.c.h.b16 %v1218
        %v1781 = vunpack.c.l.b16 %v1219
        %v1782 = vunpack.c.h.b16 %v1219
        %v1783 = vunpack.c.l.b16 %v1220
        %v1784 = vunpack.c.h.b16 %v1220
        %v1785 = vunpack.c.l.b16 %v1221
        %v1786 = vunpack.c.h.b16 %v1221
        %v1787 = vunpack.c.l.b16 %v1222
        %v1788 = vunpack.c.h.b16 %v1222
        %v1789 = vunpack.c.l.b16 %v1223
        %v1790 = vunpack.c.h.b16 %v1223
        %v1791 = vunpack.c.l.b16 %v1224
        %v1792 = vunpack.c.h.b16 %v1224
        %v1793 = vunpack.c.l.b16 %v1225
        %v1794 = vunpack.c.h.b16 %v1225
        %v1795 = vunpack.c.l.b16 %v1226
        %v1796 = vunpack.c.h.b16 %v1226
        %v1797 = vunpack.c.l.b16 %v1227
        %v1798 = vunpack.c.h.b16 %v1227
        %v1799 = vunpack.c.l.b16 %v1228
        %v1800 = vunpack.c.h.b16 %v1228
        %v1801 = vunpack.c.l.b16 %v1229
        %v1802 = vunpack.c.h.b16 %v1229
        %v1803 = vunpack.c.l.b16 %v1230
        %v1804 = vunpack.c.h.b16 %v1230
        %v1805 = vunpack.c.l.b16 %v1231
        %v1806 = vunpack.c.h.b16 %v1231
        %v1807 = vunpack.c.l.b16 %v1232
        %v1808 = vunpack.c.h.b16 %v1232
        %v1809 = vunpack.c.l.b16 %v1233
        %v1810 = vunpack.c.h.b16 %v1233
        %v1811 = vunpack.c.l.b16 %v1234
        %v1812 = vunpack.c.h.b16 %v1234
        %v1813 = vunpack.c.l.b16 %v1235
        %v1814 = vunpack.c.h.b16 %v1235
        %v1815 = vunpack.c.l.b16 %v1236
        %v1816 = vunpack.c.h.b16 %v1236
        %v1817 = vunpack.c.l.b16 %v1237
        %v1818 = vunpack.c.h.b16 %v1237
        %v1819 = vunpack.c.l.b16 %v1238
        %v1820 = vunpack.c.h.b16 %v1238
        %v1821 = vunpack.c.l.b16 %v1239
        %v1822 = vunpack.c.h.b16 %v1239
        %v1823 = vunpack.c.l.b16 %v1240
        %v1824 = vunpack.c.h.b16 %v1240
        %v1825 = vunpack.c.l.b16 %v1241
        %v1826 = vunpack.c.h.b16 %v1241
        %v1827 = vunpack.c.l.b16 %v1242
        %v1828 = vunpack.c.h.b16 %v1242
        %v1829 = vunpack.c.l.b16 %v1243
        %v1830 = vunpack.c.h.b16 %v1243
        %v1831 = vunpack.c.l.b16 %v1244
        %v1832 = vunpack.c.h.b16 %v1244
        %v1833 = vunpack.c.l.b16 %v1245
        %v1834 = vunpack.c.h.b16 %v1245
        %v1835 = vunpack.c.l.b16 %v1246
        %v1836 = vunpack.c.h.b16 %v1246
        %v1837 = vunpack.c.l.b16 %v1247
        %v1838 = vunpack.c.h.b16 %v1247
        %v1839 = vunpack.c.l.b16 %v1248
        %v1840 = vunpack.c.h.b16 %v1248
        %v1841 = vunpack.c.l.b16 %v1249
        %v1842 = vunpack.c.h.b16 %v1249
        %v1843 = vunpack.c.l.b16 %v1250
        %v1844 = vunpack.c.h.b16 %v1250
        %v1845 = vunpack.c.l.b16 %v1251
        %v1846 = vunpack.c.h.b16 %v1251
        %v1847 = vunpack.c.l.b16 %v1252
        %v1848 = vunpack.c.h.b16 %v1252
        %v1849 = vunpack.c.l.b16 %v1253
        %v1850 = vunpack.c.h.b16 %v1253
        %v1851 = vunpack.c.l.b16 %v1254
        %v1852 = vunpack.c.h.b16 %v1254
        %v1853 = vunpack.c.l.b16 %v1255
        %v1854 = vunpack.c.h.b16 %v1255
        %v1855 = vunpack.c.l.b16 %v1256
        %v1856 = vunpack.c.h.b16 %v1256
        %v1857 = vunpack.c.l.b16 %v1257
        %v1858 = vunpack.c.h.b16 %v1257
        %v1859 = vunpack.c.l.b16 %v1258
        %v1860 = vunpack.c.h.b16 %v1258
        %v1861 = vunpack.c.l.b16 %v1259
        %v1862 = vunpack.c.h.b16 %v1259
        %v1863 = vunpack.c.l.b16 %v1260
        %v1864 = vunpack.c.h.b16 %v1260
        %v1865 = vunpack.c.l.b16 %v1261
        %v1866 = vunpack.c.h.b16 %v1261
        %v1867 = vunpack.c.l.b16 %v1262
        %v1868 = vunpack.c.h.b16 %v1262
        %v1869 = vunpack.c.l.b16 %v1263
        %v1870 = vunpack.c.h.b16 %v1263
        %v1871 = vunpack.c.l.b16 %v1264
        %v1872 = vunpack.c.h.b16 %v1264
        %v1873 = vunpack.c.l.b16 %v1265
        %v1874 = vunpack.c.h.b16 %v1265
        %v1875 = vunpack.c.l.b16 %v1266
        %v1876 = vunpack.c.h.b16 %v1266
        %v1877 = vunpack.c.l.b16 %v1267
        %v1878 = vunpack.c.h.b16 %v1267
        %v1879 = vunpack.c.l.b16 %v1268
        %v1880 = vunpack.c.h.b16 %v1268
        %v1881 = vunpack.c.l.b16 %v1269
        %v1882 = vunpack.c.h.b16 %v1269
        %v1883 = vunpack.c.l.b16 %v1270
        %v1884 = vunpack.c.h.b16 %v1270
        %v1885 = vunpack.c.l.b16 %v1271
        %v1886 = vunpack.c.h.b16 %v1271
        %v1887 = vunpack.c.l.b16 %v1272
        %v1888 = vunpack.c.h.b16 %v1272
        %v1889 = vunpack.c.l.b16 %v1273
        %v1890 = vunpack.c.h.b16 %v1273
        %v1891 = vunpack.c.l.b16 %v1274
        %v1892 = vunpack.c.h.b16 %v1274
        %v1893 = vunpack.c.l.b16 %v1275
        %v1894 = vunpack.c.h.b16 %v1275
        %v1895 = vunpack.c.l.b16 %v1276
        %v1896 = vunpack.c.h.b16 %v1276
        %v1897 = vunpack.c.l.b16 %v1277
        %v1898 = vunpack.c.h.b16 %v1277
        %v1899 = vunpack.c.l.b16 %v1278
        %v1900 = vunpack.c.h.b16 %v1278
        %v1901 = vunpack.c.l.b16 %v1279
        %v1902 = vunpack.c.h.b16 %v1279
        %v1903 = vunpack.c.l.b16 %v1280
        %v1904 = vunpack.c.h.b16 %v1280
        %v1905 = vunpack.c.l.b16 %v1281
        %v1906 = vunpack.c.h.b16 %v1281
        %v1907 = vunpack.c.l.b16 %v1282
        %v1908 = vunpack.c.h.b16 %v1282
        %v1909 = vunpack.c.l.b16 %v1283
        %v1910 = vunpack.c.h.b16 %v1283
        %v1911 = vunpack.c.l.b16 %v1284
        %v1912 = vunpack.c.h.b16 %v1284
        %v1913 = vunpack.c.l.b16 %v1285
        %v1914 = vunpack.c.h.b16 %v1285
        %v1915 = vunpack.c.l.b16 %v1286
        %v1916 = vunpack.c.h.b16 %v1286
        %v1917 = vunpack.c.l.b16 %v1287
        %v1918 = vunpack.c.h.b16 %v1287
        %v1919 = vunpack.c.l.b16 %v1288
        %v1920 = vunpack.c.h.b16 %v1288
        %v1921 = vunpack.c.l.b16 %v1289
        %v1922 = vunpack.c.h.b16 %v1289
        %v1923 = vunpack.c.l.b16 %v1290
        %v1924 = vunpack.c.h.b16 %v1290
        %v1925 = vunpack.c.l.b16 %v1291
        %v1926 = vunpack.c.h.b16 %v1291
        %v1927 = vunpack.c.l.b16 %v1292
        %v1928 = vunpack.c.h.b16 %v1292
        %v1929 = vunpack.c.l.b16 %v1293
        %v1930 = vunpack.c.h.b16 %v1293
        %v1931 = vunpack.c.l.b16 %v1294
        %v1932 = vunpack.c.h.b16 %v1294
        %v1933 = vunpack.c.l.b16 %v1295
        %v1934 = vunpack.c.h.b16 %v1295
        %v1935 = vunpack.c.l.b16 %v1296
        %v1936 = vunpack.c.h.b16 %v1296
        %v1937 = vunpack.c.l.b16 %v1297
        %v1938 = vunpack.c.h.b16 %v1297
        %v1939 = vunpack.c.l.b16 %v1298
        %v1940 = vunpack.c.h.b16 %v1298
        %v1941 = vunpack.c.l.b16 %v1299
        %v1942 = vunpack.c.h.b16 %v1299
        %v1943 = vunpack.c.l.b16 %v1300
        %v1944 = vunpack.c.h.b16 %v1300
        %v1945 = vunpack.c.l.b16 %v1301
        %v1946 = vunpack.c.h.b16 %v1301
        %v1947 = vunpack.c.l.b16 %v1302
        %v1948 = vunpack.c.h.b16 %v1302
        %v1949 = vunpack.c.l.b16 %v1303
        %v1950 = vunpack.c.h.b16 %v1303
        %v1951 = vunpack.c.l.b16 %v1304
        %v1952 = vunpack.c.h.b16 %v1304
        %v1953 = vunpack.c.l.b16 %v1305
        %v1954 = vunpack.c.h.b16 %v1305
        %v1955 = vunpack.c.l.b16 %v1306
        %v1956 = vunpack.c.h.b16 %v1306
        %v1957 = vunpack.c.l.b16 %v1307
        %v1958 = vunpack.c.h.b16 %v1307
        %v1959 = vunpack.c.l.b16 %v1308
        %v1960 = vunpack.c.h.b16 %v1308
        %v1961 = vpack.c.b16 %v1581, %v1577
        %v1962 = vpack.c.b16 %v1582, %v1578
        %v1963 = vpack.c.b16 %v1583, %v1579
        %v1964 = vpack.c.b16 %v1584, %v1580
        %v1965 = vpack.c.b16 %v1589, %v1585
        %v1966 = vpack.c.b16 %v1590, %v1586
        %v1967 = vpack.c.b16 %v1591, %v1587
        %v1968 = vpack.c.b16 %v1592, %v1588
        %v1969 = vpack.c.b16 %v1597, %v1593
        %v1970 = vpack.c.b16 %v1598, %v1594
        %v1971 = vpack.c.b16 %v1599, %v1595
        %v1972 = vpack.c.b16 %v1600, %v1596
        %v1973 = vpack.c.b16 %v1605, %v1601
        %v1974 = vpack.c.b16 %v1606, %v1602
        %v1975 = vpack.c.b16 %v1607, %v1603
        %v1976 = vpack.c.b16 %v1608, %v1604
        %v1977 = vpack.c.b16 %v1613, %v1609
        %v1978 = vpack.c.b16 %v1614, %v1610
        %v1979 = vpack.c.b16 %v1615, %v1611
        %v1980 = vpack.c.b16 %v1616, %v1612
        %v1981 = vpack.c.b16 %v1621, %v1617
        %v1982 = vpack.c.b16 %v1622, %v1618
        %v1983 = vpack.c.b16 %v1623, %v1619
        %v1984 = vpack.c.b16 %v1624, %v1620
        %v1985 = vpack.c.b16 %v1629, %v1625
        %v1986 = vpack.c.b16 %v1630, %v1626
        %v1987 = vpack.c.b16 %v1631, %v1627
        %v1988 = vpack.c.b16 %v1632, %v1628
        %v1989 = vpack.c.b16 %v1637, %v1633
        %v1990 = vpack.c.b16 %v1638, %v1634
        %v1991 = vpack.c.b16 %v1639, %v1635
        %v1992 = vpack.c.b16 %v1640, %v1636
        %v1993 = vpack.c.b16 %v1645, %v1641
        %v1994 = vpack.c.b16 %v1646, %v1642
        %v1995 = vpack.c.b16 %v1647, %v1643
        %v1996 = vpack.c.b16 %v1648, %v1644
        %v1997 = vpack.c.b16 %v1653, %v1649
        %v1998 = vpack.c.b16 %v1654, %v1650
        %v1999 = vpack.c.b16 %v1655, %v1651
        %v2000 = vpack.c.b16 %v1656, %v1652
        %v2001 = vpack.c.b16 %v1661, %v1657
        %v2002 = vpack.c.b16 %v1662, %v1658
        %v2003 = vpack.c.b16 %v1663, %v1659
        %v2004 = vpack.c.b16 %v1664, %v1660
        %v2005 = vpack.c.b16 %v1669, %v1665
        %v2006 = vpack.c.b16 %v1670, %v1666
        %v2007 = vpack.c.b16 %v1671, %v1667
        %v2008 = vpack.c.b16 %v1672, %v1668
        %v2009 = vpack.c.b16 %v1677, %v1673
        %v2010 = vpack.c.b16 %v1678, %v1674
        %v2011 = vpack.c.b16 %v1679, %v1675
        %v2012 = vpack.c.b16 %v1680, %v1676
        %v2013 = vpack.c.b16 %v1685, %v1681
        %v2014 = vpack.c.b16 %v1686, %v1682
        %v2015 = vpack.c.b16 %v1687, %v1683
        %v2016 = vpack.c.b16 %v1688, %v1684
        %v2017 = vpack.c.b16 %v1693, %v1689
        %v2018 = vpack.c.b16 %v1694, %v1690
        %v2019 = vpack.c.b16 %v1695, %v1691
        %v2020 = vpack.c.b16 %v1696, %v1692
        %v2021 = vpack.c.b16 %v1701, %v1697
        %v2022 = vpack.c.b16 %v1702, %v1698
        %v2023 = vpack.c.b16 %v1703, %v1699
        %v2024 = vpack.c.b16 %v1704, %v1700
        %v2025 = vpack.c.b16 %v1709, %v1705
        %v2026 = vpack.c.b16 %v1710, %v1706
        %v2027 = vpack.c.b16 %v1711, %v1707
        %v2028 = vpack.c.b16 %v1712, %v1708
        %v2029 = vpack.c.b16 %v1717, %v1713
        %v2030 = vpack.c.b16 %v1718, %v1714
        %v2031 = vpack.c.b16 %v1719, %v1715
        %v2032 = vpack.c.b16 %v1720, %v1716
        %v2033 = vpack.c.b16 %v1725, %v1721
        %v2034 = vpack.c.b16 %v1726, %v1722
        %v2035 = vpack.c.b16 %v1727, %v1723
        %v2036 = vpack.c.b16 %v1728, %v1724
        %v2037 = vpack.c.b16 %v1733, %v1729
        %v2038 = vpack.c.b16 %v1734, %v1730
        %v2039 = vpack.c.b16 %v1735, %v1731
        %v2040 = vpack.c.b16 %v1736, %v1732
        %v2041 = vpack.c.b16 %v1741, %v1737
        %v2042 = vpack.c.b16 %v1742, %v1738
        %v2043 = vpack.c.b16 %v1743, %v1739
        %v2044 = vpack.c.b16 %v1744, %v1740
        %v2045 = vpack.c.b16 %v1749, %v1745
        %v2046 = vpack.c.b16 %v1750, %v1746
        %v2047 = vpack.c.b16 %v1751, %v1747
        %v2048 = vpack.c.b16 %v1752, %v1748
        %v2049 = vpack.c.b16 %v1757, %v1753
        %v2050 = vpack.c.b16 %v1758, %v1754
        %v2051 = vpack.c.b16 %v1759, %v1755
        %v2052 = vpack.c.b16 %v1760, %v1756
        %v2053 = vpack.c.b16 %v1765, %v1761
        %v2054 = vpack.c.b16 %v1766, %v1762
        %v2055 = vpack.c.b16 %v1767, %v1763
        %v2056 = vpack.c.b16 %v1768, %v1764
        %v2057 = vpack.c.b16 %v1773, %v1769
        %v2058 = vpack.c.b16 %v1774, %v1770
        %v2059 = vpack.c.b16 %v1775, %v1771
        %v2060 = vpack.c.b16 %v1776, %v1772
        %v2061 = vpack.c.b16 %v1781, %v1777
        %v2062 = vpack.c.b16 %v1782, %v1778
        %v2063 = vpack.c.b16 %v1783, %v1779
        %v2064 = vpack.c.b16 %v1784, %v1780
        %v2065 = vpack.c.b16 %v1789, %v1785
        %v2066 = vpack.c.b16 %v1790, %v1786
        %v2067 = vpack.c.b16 %v1791, %v1787
        %v2068 = vpack.c.b16 %v1792, %v1788
        %v2069 = vpack.c.b16 %v1797, %v1793
        %v2070 = vpack.c.b16 %v1798, %v1794
        %v2071 = vpack.c.b16 %v1799, %v1795
        %v2072 = vpack.c.b16 %v1800, %v1796
        %v2073 = vpack.c.b16 %v1805, %v1801
        %v2074 = vpack.c.b16 %v1806, %v1802
        %v2075 = vpack.c.b16 %v1807, %v1803
        %v2076 = vpack.c.b16 %v1808, %v1804
        %v2077 = vpack.c.b16 %v1813, %v1809
        %v2078 = vpack.c.b16 %v1814, %v1810
        %v2079 = vpack.c.b16 %v1815, %v1811
        %v2080 = vpack.c.b16 %v1816, %v1812
        %v2081 = vpack.c.b16 %v1821, %v1817
        %v2082 = vpack.c.b16 %v1822, %v1818
        %v2083 = vpack.c.b16 %v1823, %v1819
        %v2084 = vpack.c.b16 %v1824, %v1820
        %v2085 = vpack.c.b16 %v1829, %v1825
        %v2086 = vpack.c.b16 %v1830, %v1826
        %v2087 = vpack.c.b16 %v1831, %v1827
        %v2088 = vpack.c.b16 %v1832, %v1828
        %v2089 = vpack.c.b16 %v1837, %v1833
        %v2090 = vpack.c.b16 %v1838, %v1834
        %v2091 = vpack.c.b16 %v1839, %v1835
        %v2092 = vpack.c.b16 %v1840, %v1836
        %v2093 = vpack.c.b16 %v1845, %v1841
        %v2094 = vpack.c.b16 %v1846, %v1842
        %v2095 = vpack.c.b16 %v1847, %v1843
        %v2096 = vpack.c.b16 %v1848, %v1844
        %v2097 = vpack.c.b16 %v1853, %v1849
        %v2098 = vpack.c.b16 %v1854, %v1850
        %v2099 = vpack.c.b16 %v1855, %v1851
        %v2100 = vpack.c.b16 %v1856, %v1852
        %v2101 = vpack.c.b16 %v1861, %v1857
        %v2102 = vpack.c.b16 %v1862, %v1858
        %v2103 = vpack.c.b16 %v1863, %v1859
        %v2104 = vpack.c.b16 %v1864, %v1860
        %v2105 = vpack.c.b16 %v1869, %v1865
        %v2106 = vpack.c.b16 %v1870, %v1866
        %v2107 = vpack.c.b16 %v1871, %v1867
        %v2108 = vpack.c.b16 %v1872, %v1868
        %v2109 = vpack.c.b16 %v1877, %v1873
        %v2110 = vpack.c.b16 %v1878, %v1874
        %v2111 = vpack.c.b16 %v1879, %v1875
        %v2112 = vpack.c.b16 %v1880, %v1876
        %v2113 = vpack.c.b16 %v1885, %v1881
        %v2114 = vpack.c.b16 %v1886, %v1882
        %v2115 = vpack.c.b16 %v1887, %v1883
        %v2116 = vpack.c.b16 %v1888, %v1884
        %v2117 = vpack.c.b16 %v1893, %v1889
        %v2118 = vpack.c.b16 %v1894, %v1890
        %v2119 = vpack.c.b16 %v1895, %v1891
        %v2120 = vpack.c.b16 %v1896, %v1892
        %v2121 = vpack.c.b16 %v1901, %v1897
        %v2122 = vpack.c.b16 %v1902, %v1898
        %v2123 = vpack.c.b16 %v1903, %v1899
        %v2124 = vpack.c.b16 %v1904, %v1900
        %v2125 = vpack.c.b16 %v1909, %v1905
        %v2126 = vpack.c.b16 %v1910, %v1906
        %v2127 = vpack.c.b16 %v1911, %v1907
        %v2128 = vpack.c.b16 %v1912, %v1908
        %v2129 = vpack.c.b16 %v1917, %v1913
        %v2130 = vpack.c.b16 %v1918, %v1914
        %v2131 = vpack.c.b16 %v1919, %v1915
        %v2132 = vpack.c.b16 %v1920, %v1916
        %v2133 = vpack.c.b16 %v1925, %v1921
        %v2134 = vpack.c.b16 %v1926, %v1922
        %v2135 = vpack.c.b16 %v1927, %v1923
        %v2136 = vpack.c.b16 %v1928, %v1924
        %v2137 = vpack.c.b16 %v1933, %v1929
        %v2138 = vpack.c.b16 %v1934, %v1930
        %v2139 = vpack.c.b16 %v1935, %v1931
        %v2140 = vpack.c.b16 %v1936, %v1932
        %v2141 = vpack.c.b16 %v1941, %v1937
        %v2142 = vpack.c.b16 %v1942, %v1938
        %v2143 = vpack.c.b16 %v1943, %v1939
        %v2144 = vpack.c.b16 %v1944, %v1940
        %v2145 = vpack.c.b16 %v1949, %v1945
        %v2146 = vpack.c.b16 %v1950, %v1946
        %v2147 = vpack.c.b16 %v1951, %v1947
        %v2148 = vpack.c.b16 %v1952, %v1948
        %v2149 = vpack.c.b16 %v1957, %v1953
        %v2150 = vpack.c.b16 %v1958, %v1954
        %v2151 = vpack.c.b16 %v1959, %v1955
        %v2152 = vpack.c.b16 %v1960, %v1956
        %2345 = vmatprep.subr.bf16.mxu0 %v1962
        %2346 = vmatpush1.bf16.msra.mxu0 %v1961
        %2347 = vmatprep.subr.bf16.mxu0 %v1966
        %2348 = vmatpush1.bf16.msra.mxu0 %v1965
        %2349 = vmatprep.subr.bf16.mxu0 %v1970
        %2350 = vmatpush1.bf16.msra.mxu0 %v1969
        %2351 = vmatprep.subr.bf16.mxu0 %v1974
        %2352 = vmatpush1.bf16.msra.mxu0 %v1973
        %2353 = vmatprep.subr.bf16.mxu0 %v1978
        %2354 = vmatpush1.bf16.msra.mxu0 %v1977
        %2355 = vmatprep.subr.bf16.mxu0 %v1982
        %2356 = vmatpush1.bf16.msra.mxu0 %v1981
        %2357 = vmatprep.subr.bf16.mxu0 %v1986
        %2358 = vmatpush1.bf16.msra.mxu0 %v1985
        %2359 = vmatprep.subr.bf16.mxu0 %v1990
        %2360 = vmatpush1.bf16.msra.mxu0 %v1989
        %2361 = vmatprep.subr.bf16.mxu0 %v1994
        %2362 = vmatpush1.bf16.msra.mxu0 %v1993
        %2363 = vmatprep.subr.bf16.mxu0 %v1998
        %2364 = vmatpush1.bf16.msra.mxu0 %v1997
        %2365 = vmatprep.subr.bf16.mxu0 %v2002
        %2366 = vmatpush1.bf16.msra.mxu0 %v2001
        %2367 = vmatprep.subr.bf16.mxu0 %v2006
        %2368 = vmatpush1.bf16.msra.mxu0 %v2005
        %2369 = vmatprep.subr.bf16.mxu0 %v2010
        %2370 = vmatpush1.bf16.msra.mxu0 %v2009
        %2371 = vmatprep.subr.bf16.mxu0 %v2014
        %2372 = vmatpush1.bf16.msra.mxu0 %v2013
        %2373 = vmatprep.subr.bf16.mxu0 %v2018
        %2374 = vmatpush1.bf16.msra.mxu0 %v2017
        %2375 = vmatprep.subr.bf16.mxu0 %v2022
        %2376 = vmatpush1.bf16.msra.mxu0 %v2021
        %2377 = vmatprep.mubr.bf16.mxu0 %v1369
        %2378 = vmatmul.mubr.bf16.gmra.mrb[0].mxu0 %v1355
        %v2379 = vpop.f32.mrb[0].mxu0
        %v2380 = vadd.f32 %v1314, %v2379
        %v2381 = vpop.f32.mrb[0].mxu0
        %v2382 = vadd.f32 %v1318, %v2381
        %v2383 = vpop.f32.mrb[0].mxu0
        %v2384 = vpop.f32.mrb[0].mxu0
        %2385 = vdwg.mxu0
        %2386 = vmatprep.subr.bf16.mxu0 %v2026
        %2387 = vmatpush1.bf16.msra.mxu0 %v2025
        %2388 = vmatprep.subr.bf16.mxu0 %v2030
        %2389 = vmatpush1.bf16.msra.mxu0 %v2029
        %2390 = vmatprep.subr.bf16.mxu0 %v2034
        %2391 = vmatpush1.bf16.msra.mxu0 %v2033
        %2392 = vmatprep.subr.bf16.mxu0 %v2038
        %2393 = vmatpush1.bf16.msra.mxu0 %v2037
        %2394 = vmatprep.subr.bf16.mxu0 %v2042
        %2395 = vmatpush1.bf16.msra.mxu0 %v2041
        %2396 = vmatprep.subr.bf16.mxu0 %v2046
        %2397 = vmatpush1.bf16.msra.mxu0 %v2045
        %2398 = vmatprep.subr.bf16.mxu0 %v2050
        %2399 = vmatpush1.bf16.msra.mxu0 %v2049
        %2400 = vmatprep.subr.bf16.mxu0 %v2054
        %2401 = vmatpush1.bf16.msra.mxu0 %v2053
        %2402 = vmatprep.subr.bf16.mxu0 %v2058
        %2403 = vmatpush1.bf16.msra.mxu0 %v2057
        %2404 = vmatprep.subr.bf16.mxu0 %v2062
        %2405 = vmatpush1.bf16.msra.mxu0 %v2061
        %2406 = vmatprep.subr.bf16.mxu0 %v2066
        %2407 = vmatpush1.bf16.msra.mxu0 %v2065
        %2408 = vmatprep.subr.bf16.mxu0 %v2070
        %2409 = vmatpush1.bf16.msra.mxu0 %v2069
        %2410 = vmatprep.subr.bf16.mxu0 %v2074
        %2411 = vmatpush1.bf16.msra.mxu0 %v2073
        %2412 = vmatprep.subr.bf16.mxu0 %v2078
        %2413 = vmatpush1.bf16.msra.mxu0 %v2077
        %2414 = vmatprep.subr.bf16.mxu0 %v2082
        %2415 = vmatpush1.bf16.msra.mxu0 %v2081
        %2416 = vmatprep.subr.bf16.mxu0 %v2086
        %2417 = vmatpush1.bf16.msra.mxu0 %v2085
        %2418 = vmatprep.mubr.bf16.mxu0 %v1378
        %2419 = vmatmul.mubr.bf16.gmra.mrb[0].mxu0 %v1377
        %v2420 = vpop.f32.mrb[0].mxu0
        %v2421 = vadd.f32 %v2380, %v2420
        %v2422 = vpop.f32.mrb[0].mxu0
        %v2423 = vadd.f32 %v2382, %v2422
        %v2424 = vpop.f32.mrb[0].mxu0
        %v2425 = vpop.f32.mrb[0].mxu0
        %2426 = vdwg.mxu0
        %2427 = vmatprep.subr.bf16.mxu0 %v2090
        %2428 = vmatpush1.bf16.msra.mxu0 %v2089
        %2429 = vmatprep.subr.bf16.mxu0 %v2094
        %2430 = vmatpush1.bf16.msra.mxu0 %v2093
        %2431 = vmatprep.subr.bf16.mxu0 %v2098
        %2432 = vmatpush1.bf16.msra.mxu0 %v2097
        %2433 = vmatprep.subr.bf16.mxu0 %v2102
        %2434 = vmatpush1.bf16.msra.mxu0 %v2101
        %2435 = vmatprep.subr.bf16.mxu0 %v2106
        %2436 = vmatpush1.bf16.msra.mxu0 %v2105
        %2437 = vmatprep.subr.bf16.mxu0 %v2110
        %2438 = vmatpush1.bf16.msra.mxu0 %v2109
        %2439 = vmatprep.subr.bf16.mxu0 %v2114
        %2440 = vmatpush1.bf16.msra.mxu0 %v2113
        %2441 = vmatprep.subr.bf16.mxu0 %v2118
        %2442 = vmatpush1.bf16.msra.mxu0 %v2117
        %2443 = vmatprep.subr.bf16.mxu0 %v2122
        %2444 = vmatpush1.bf16.msra.mxu0 %v2121
        %2445 = vmatprep.subr.bf16.mxu0 %v2126
        %2446 = vmatpush1.bf16.msra.mxu0 %v2125
        %2447 = vmatprep.subr.bf16.mxu0 %v2130
        %2448 = vmatpush1.bf16.msra.mxu0 %v2129
        %2449 = vmatprep.subr.bf16.mxu0 %v2134
        %2450 = vmatpush1.bf16.msra.mxu0 %v2133
        %2451 = vmatprep.subr.bf16.mxu0 %v2138
        %2452 = vmatpush1.bf16.msra.mxu0 %v2137
        %2453 = vmatprep.subr.bf16.mxu0 %v2142
        %2454 = vmatpush1.bf16.msra.mxu0 %v2141
        %2455 = vmatprep.subr.bf16.mxu0 %v2146
        %2456 = vmatpush1.bf16.msra.mxu0 %v2145
        %2457 = vmatprep.subr.bf16.mxu0 %v2150
        %2458 = vmatpush1.bf16.msra.mxu0 %v2149
        %2459 = vmatprep.mubr.bf16.mxu0 %v1376
        %2460 = vmatmul.mubr.bf16.gmra.mrb[0].mxu0 %v1362
        %v2461 = vpop.f32.mrb[0].mxu0
        %v2462 = vadd.f32 %v2421, %v2461
        %v2463 = vpop.f32.mrb[0].mxu0
        %v2464 = vadd.f32 %v2423, %v2463
        %v2465 = vpop.f32.mrb[0].mxu0
        %v2466 = vpop.f32.mrb[0].mxu0
        %2467 = vdwg.mxu0
        %2468 = vmatprep.subr.bf16.mxu0 %v1964
        %2469 = vmatpush1.bf16.msra.mxu0 %v1963
        %2470 = vmatprep.subr.bf16.mxu0 %v1968
        %2471 = vmatpush1.bf16.msra.mxu0 %v1967
        %2472 = vmatprep.subr.bf16.mxu0 %v1972
        %2473 = vmatpush1.bf16.msra.mxu0 %v1971
        %2474 = vmatprep.subr.bf16.mxu0 %v1976
        %2475 = vmatpush1.bf16.msra.mxu0 %v1975
        %2476 = vmatprep.subr.bf16.mxu0 %v1980
        %2477 = vmatpush1.bf16.msra.mxu0 %v1979
        %2478 = vmatprep.subr.bf16.mxu0 %v1984
        %2479 = vmatpush1.bf16.msra.mxu0 %v1983
        %2480 = vmatprep.subr.bf16.mxu0 %v1988
        %2481 = vmatpush1.bf16.msra.mxu0 %v1987
        %2482 = vmatprep.subr.bf16.mxu0 %v1992
        %2483 = vmatpush1.bf16.msra.mxu0 %v1991
        %2484 = vmatprep.subr.bf16.mxu0 %v1996
        %2485 = vmatpush1.bf16.msra.mxu0 %v1995
        %2486 = vmatprep.subr.bf16.mxu0 %v2000
        %2487 = vmatpush1.bf16.msra.mxu0 %v1999
        %2488 = vmatprep.subr.bf16.mxu0 %v2004
        %2489 = vmatpush1.bf16.msra.mxu0 %v2003
        %2490 = vmatprep.subr.bf16.mxu0 %v2008
        %2491 = vmatpush1.bf16.msra.mxu0 %v2007
        %2492 = vmatprep.subr.bf16.mxu0 %v2012
        %2493 = vmatpush1.bf16.msra.mxu0 %v2011
        %2494 = vmatprep.subr.bf16.mxu0 %v2016
        %2495 = vmatpush1.bf16.msra.mxu0 %v2015
        %2496 = vmatprep.subr.bf16.mxu0 %v2020
        %2497 = vmatpush1.bf16.msra.mxu0 %v2019
        %2498 = vmatprep.subr.bf16.mxu0 %v2024
        %2499 = vmatpush1.bf16.msra.mxu0 %v2023
        %2500 = vmatprep.mubr.bf16.mxu0 %v1369
        %2501 = vmatmul.mubr.bf16.gmra.mrb[0].mxu0 %v1355
        %v2502 = vpop.f32.mrb[0].mxu0
        %v2503 = vadd.f32 %v1322, %v2502
        %v2504 = vpop.f32.mrb[0].mxu0
        %v2505 = vadd.f32 %v1326, %v2504
        %v2506 = vpop.f32.mrb[0].mxu0
        %v2507 = vpop.f32.mrb[0].mxu0
        %2508 = vdwg.mxu0
        %2509 = vmatprep.subr.bf16.mxu0 %v2028
        %2510 = vmatpush1.bf16.msra.mxu0 %v2027
        %2511 = vmatprep.subr.bf16.mxu0 %v2032
        %2512 = vmatpush1.bf16.msra.mxu0 %v2031
        %2513 = vmatprep.subr.bf16.mxu0 %v2036
        %2514 = vmatpush1.bf16.msra.mxu0 %v2035
        %2515 = vmatprep.subr.bf16.mxu0 %v2040
        %2516 = vmatpush1.bf16.msra.mxu0 %v2039
        %2517 = vmatprep.subr.bf16.mxu0 %v2044
        %2518 = vmatpush1.bf16.msra.mxu0 %v2043
        %2519 = vmatprep.subr.bf16.mxu0 %v2048
        %2520 = vmatpush1.bf16.msra.mxu0 %v2047
        %2521 = vmatprep.subr.bf16.mxu0 %v2052
        %2522 = vmatpush1.bf16.msra.mxu0 %v2051
        %2523 = vmatprep.subr.bf16.mxu0 %v2056
        %2524 = vmatpush1.bf16.msra.mxu0 %v2055
        %2525 = vmatprep.subr.bf16.mxu0 %v2060
        %2526 = vmatpush1.bf16.msra.mxu0 %v2059
        %2527 = vmatprep.subr.bf16.mxu0 %v2064
        %2528 = vmatpush1.bf16.msra.mxu0 %v2063
        %2529 = vmatprep.subr.bf16.mxu0 %v2068
        %2530 = vmatpush1.bf16.msra.mxu0 %v2067
        %2531 = vmatprep.subr.bf16.mxu0 %v2072
        %2532 = vmatpush1.bf16.msra.mxu0 %v2071
        %2533 = vmatprep.subr.bf16.mxu0 %v2076
        %2534 = vmatpush1.bf16.msra.mxu0 %v2075
        %2535 = vmatprep.subr.bf16.mxu0 %v2080
        %2536 = vmatpush1.bf16.msra.mxu0 %v2079
        %2537 = vmatprep.subr.bf16.mxu0 %v2084
        %2538 = vmatpush1.bf16.msra.mxu0 %v2083
        %2539 = vmatprep.subr.bf16.mxu0 %v2088
        %2540 = vmatpush1.bf16.msra.mxu0 %v2087
        %2541 = vmatprep.mubr.bf16.mxu0 %v1378
        %2542 = vmatmul.mubr.bf16.gmra.mrb[0].mxu0 %v1377
        %v2543 = vpop.f32.mrb[0].mxu0
        %v2544 = vadd.f32 %v2503, %v2543
        %v2545 = vpop.f32.mrb[0].mxu0
        %v2546 = vadd.f32 %v2505, %v2545
        %v2547 = vpop.f32.mrb[0].mxu0
        %v2548 = vpop.f32.mrb[0].mxu0
        %2549 = vdwg.mxu0
        %2550 = vmatprep.subr.bf16.mxu0 %v2092
        %2551 = vmatpush1.bf16.msra.mxu0 %v2091
        %2552 = vmatprep.subr.bf16.mxu0 %v2096
        %2553 = vmatpush1.bf16.msra.mxu0 %v2095
        %2554 = vmatprep.subr.bf16.mxu0 %v2100
        %2555 = vmatpush1.bf16.msra.mxu0 %v2099
        %2556 = vmatprep.subr.bf16.mxu0 %v2104
        %2557 = vmatpush1.bf16.msra.mxu0 %v2103
        %2558 = vmatprep.subr.bf16.mxu0 %v2108
        %2559 = vmatpush1.bf16.msra.mxu0 %v2107
        %2560 = vmatprep.subr.bf16.mxu0 %v2112
        %2561 = vmatpush1.bf16.msra.mxu0 %v2111
        %2562 = vmatprep.subr.bf16.mxu0 %v2116
        %2563 = vmatpush1.bf16.msra.mxu0 %v2115
        %2564 = vmatprep.subr.bf16.mxu0 %v2120
        %2565 = vmatpush1.bf16.msra.mxu0 %v2119
        %2566 = vmatprep.subr.bf16.mxu0 %v2124
        %2567 = vmatpush1.bf16.msra.mxu0 %v2123
        %2568 = vmatprep.subr.bf16.mxu0 %v2128
        %2569 = vmatpush1.bf16.msra.mxu0 %v2127
        %2570 = vmatprep.subr.bf16.mxu0 %v2132
        %2571 = vmatpush1.bf16.msra.mxu0 %v2131
        %2572 = vmatprep.subr.bf16.mxu0 %v2136
        %2573 = vmatpush1.bf16.msra.mxu0 %v2135
        %2574 = vmatprep.subr.bf16.mxu0 %v2140
        %2575 = vmatpush1.bf16.msra.mxu0 %v2139
        %2576 = vmatprep.subr.bf16.mxu0 %v2144
        %2577 = vmatpush1.bf16.msra.mxu0 %v2143
        %2578 = vmatprep.subr.bf16.mxu0 %v2148
        %2579 = vmatpush1.bf16.msra.mxu0 %v2147
        %2580 = vmatprep.subr.bf16.mxu0 %v2152
        %2581 = vmatpush1.bf16.msra.mxu0 %v2151
        %2582 = vmatprep.mubr.bf16.mxu0 %v1376
        %2583 = vmatmul.mubr.bf16.gmra.mrb[0].mxu0 %v1362
        %v2584 = vpop.f32.mrb[0].mxu0
        %v2585 = vadd.f32 %v2544, %v2584
        %v2586 = vpop.f32.mrb[0].mxu0
        %v2587 = vadd.f32 %v2546, %v2586
        %v2588 = vpop.f32.mrb[0].mxu0
        %v2589 = vpop.f32.mrb[0].mxu0
        %2590 = vdwg.mxu0
        %v2591 = vmax.f32 %v2462, 0.0
        %v2592 = vmax.f32 %v2464, 0.0
        %v2593 = vmax.f32 %v2585, 0.0
        %v2594 = vmax.f32 %v2587, 0.0
        %vm2595 = vcmask 1041408
        %v2596 = vsel %vm2595, %v2591, 0.0
        %v2597 = vsel %vm2595, %v2592, 0.0
        %v2598 = vadd.f32 %v2596, %v2597
        %v2599 = vsel %vm2595, %v2593, 0.0
        %v2600 = vadd.f32 %v2598, %v2599
        %v2601 = vsel %vm2595, %v2594, 0.0
        %v2602 = vadd.f32 %v2600, %v2601
        %2603 = vadd.xlane.f32.xlu0 %v2602
        %v2604 = vpop.xlane.xlu0 %2603
        %v2605 = vmul.f32 %v2604, 0.001953125
        %v2606 = vsub.f32 %v2591, %v2605
        %v2607 = vsub.f32 %v2592, %v2605
        %v2608 = vsub.f32 %v2593, %v2605
        %v2609 = vsub.f32 %v2594, %v2605
        %v2610 = vmul.f32 %v2606, %v2606
        %v2611 = vmul.f32 %v2607, %v2607
        %v2612 = vmul.f32 %v2608, %v2608
        %v2613 = vmul.f32 %v2609, %v2609
        %v2614 = vsel %vm2595, %v2610, 0.0
        %v2615 = vsel %vm2595, %v2611, 0.0
        %v2616 = vadd.f32 %v2614, %v2615
        %v2617 = vsel %vm2595, %v2612, 0.0
        %v2618 = vadd.f32 %v2616, %v2617
        %v2619 = vsel %vm2595, %v2613, 0.0
        %v2620 = vadd.f32 %v2618, %v2619
        %2621 = vadd.xlane.f32.xlu0 %v2620
        %v2622 = vpop.xlane.xlu0 %2621
        %v2623 = vmul.f32 %v2622, 0.001953125
        %v2624 = vadd.f32 %v2623, 1e-05
        %v2625 = vrsqrt.pop %v2624
        %v2626 = vmul.f32 %v2606, %v2625
        %v2627 = vmul.f32 %v2607, %v2625
        %v2628 = vmul.f32 %v2608, %v2625
        %v2629 = vmul.f32 %v2609, %v2625
        %v2630 = vld [vmem:[%s873] sm:$0xf]
        %v2632 = vlaneseq
        %v2633 = vshrl.u32 %v2632, 7
        %v2634 = vsub.s32 0, %v2633
        %v2635 = vrot.slane %v2630, %v2634
        %v2636 = vlaneseq
        %v2637 = vshrl.u32 %v2636, 7
        %v2638 = vsub.s32 1, %v2637
        %v2639 = vrot.slane %v2630, %v2638
        %v2640 = vlaneseq
        %v2641 = vshrl.u32 %v2640, 7
        %v2642 = vsub.s32 2, %v2641
        %v2643 = vrot.slane %v2630, %v2642
        %v2644 = vlaneseq
        %v2645 = vshrl.u32 %v2644, 7
        %v2646 = vsub.s32 3, %v2645
        %v2647 = vrot.slane %v2630, %v2646
        %v2652 = vmul.f32 %v2626, %v2635
        %v2653 = vmul.f32 %v2627, %v2639
        %v2654 = vmul.f32 %v2628, %v2643
        %v2655 = vmul.f32 %v2629, %v2647
        %v2656 = vld [vmem:[%s882] sm:$0xf]
        %v2658 = vlaneseq
        %v2659 = vshrl.u32 %v2658, 7
        %v2660 = vsub.s32 0, %v2659
        %v2661 = vrot.slane %v2656, %v2660
        %v2662 = vlaneseq
        %v2663 = vshrl.u32 %v2662, 7
        %v2664 = vsub.s32 1, %v2663
        %v2665 = vrot.slane %v2656, %v2664
        %v2666 = vlaneseq
        %v2667 = vshrl.u32 %v2666, 7
        %v2668 = vsub.s32 2, %v2667
        %v2669 = vrot.slane %v2656, %v2668
        %v2670 = vlaneseq
        %v2671 = vshrl.u32 %v2670, 7
        %v2672 = vsub.s32 3, %v2671
        %v2673 = vrot.slane %v2656, %v2672
        %v2678 = vadd.f32 %v2652, %v2661
        %v2679 = vadd.f32 %v2653, %v2665
        %v2680 = vadd.f32 %v2654, %v2669
        %v2681 = vadd.f32 %v2655, %v2673
        %v2682 = vpack.c.bf16 %v2678, %v2678
        %v2683 = vpack.c.bf16 %v2679, %v2679
        %v2684 = vpack.c.bf16 %v2680, %v2680
        %v2685 = vpack.c.bf16 %v2681, %v2681
        %v2686 = vld [vmem:[%s891] sm:$0xff]
        %v2687 = vld [vmem:[%s891 + $0x8] sm:$0xff]
        %v2688 = vld [vmem:[%s891 + $0x10] sm:$0xff]
        %v2689 = vld [vmem:[%s891 + $0x18] sm:$0xff]
        %v2690 = vld [vmem:[%s891 + $0x20] sm:$0xff]
        %v2691 = vld [vmem:[%s891 + $0x28] sm:$0xff]
        %v2692 = vld [vmem:[%s891 + $0x30] sm:$0xff]
        %v2693 = vld [vmem:[%s891 + $0x38] sm:$0xff]
        %v2694 = vld [vmem:[%s891 + $0x40] sm:$0xff]
        %v2695 = vld [vmem:[%s891 + $0x48] sm:$0xff]
        %v2696 = vld [vmem:[%s891 + $0x50] sm:$0xff]
        %v2697 = vld [vmem:[%s891 + $0x58] sm:$0xff]
        %v2698 = vld [vmem:[%s891 + $0x60] sm:$0xff]
        %v2699 = vld [vmem:[%s891 + $0x68] sm:$0xff]
        %v2700 = vld [vmem:[%s891 + $0x70] sm:$0xff]
        %v2701 = vld [vmem:[%s891 + $0x78] sm:$0xff]
        %v2702 = vld [vmem:[%s891 + $0x80] sm:$0xff]
        %v2703 = vld [vmem:[%s891 + $0x88] sm:$0xff]
        %v2704 = vld [vmem:[%s891 + $0x90] sm:$0xff]
        %v2705 = vld [vmem:[%s891 + $0x98] sm:$0xff]
        %v2706 = vld [vmem:[%s891 + $0xa0] sm:$0xff]
        %v2707 = vld [vmem:[%s891 + $0xa8] sm:$0xff]
        %v2708 = vld [vmem:[%s891 + $0xb0] sm:$0xff]
        %v2709 = vld [vmem:[%s891 + $0xb8] sm:$0xff]
        %v2710 = vld [vmem:[%s891 + $0xc0] sm:$0xff]
        %v2711 = vld [vmem:[%s891 + $0xc8] sm:$0xff]
        %v2712 = vld [vmem:[%s891 + $0xd0] sm:$0xff]
        %v2713 = vld [vmem:[%s891 + $0xd8] sm:$0xff]
        %v2714 = vld [vmem:[%s891 + $0xe0] sm:$0xff]
        %v2715 = vld [vmem:[%s891 + $0xe8] sm:$0xff]
        %v2716 = vld [vmem:[%s891 + $0xf0] sm:$0xff]
        %v2717 = vld [vmem:[%s891 + $0xf8] sm:$0xff]
        %v2718 = vld [vmem:[%s891 + $0x100] sm:$0xff]
        %v2719 = vld [vmem:[%s891 + $0x108] sm:$0xff]
        %v2720 = vld [vmem:[%s891 + $0x110] sm:$0xff]
        %v2721 = vld [vmem:[%s891 + $0x118] sm:$0xff]
        %v2722 = vld [vmem:[%s891 + $0x120] sm:$0xff]
        %v2723 = vld [vmem:[%s891 + $0x128] sm:$0xff]
        %v2724 = vld [vmem:[%s891 + $0x130] sm:$0xff]
        %v2725 = vld [vmem:[%s891 + $0x138] sm:$0xff]
        %v2726 = vld [vmem:[%s891 + $0x140] sm:$0xff]
        %v2727 = vld [vmem:[%s891 + $0x148] sm:$0xff]
        %v2728 = vld [vmem:[%s891 + $0x150] sm:$0xff]
        %v2729 = vld [vmem:[%s891 + $0x158] sm:$0xff]
        %v2730 = vld [vmem:[%s891 + $0x160] sm:$0xff]
        %v2731 = vld [vmem:[%s891 + $0x168] sm:$0xff]
        %v2732 = vld [vmem:[%s891 + $0x170] sm:$0xff]
        %v2733 = vld [vmem:[%s891 + $0x178] sm:$0xff]
        %v2734 = vld [vmem:[%s891 + $0x180] sm:$0xff]
        %v2735 = vld [vmem:[%s891 + $0x188] sm:$0xff]
        %v2736 = vld [vmem:[%s891 + $0x190] sm:$0xff]
        %v2737 = vld [vmem:[%s891 + $0x198] sm:$0xff]
        %v2738 = vld [vmem:[%s891 + $0x1a0] sm:$0xff]
        %v2739 = vld [vmem:[%s891 + $0x1a8] sm:$0xff]
        %v2740 = vld [vmem:[%s891 + $0x1b0] sm:$0xff]
        %v2741 = vld [vmem:[%s891 + $0x1b8] sm:$0xff]
        %v2742 = vld [vmem:[%s891 + $0x1c0] sm:$0xff]
        %v2743 = vld [vmem:[%s891 + $0x1c8] sm:$0xff]
        %v2744 = vld [vmem:[%s891 + $0x1d0] sm:$0xff]
        %v2745 = vld [vmem:[%s891 + $0x1d8] sm:$0xff]
        %v2746 = vld [vmem:[%s891 + $0x1e0] sm:$0xff]
        %v2747 = vld [vmem:[%s891 + $0x1e8] sm:$0xff]
        %v2748 = vld [vmem:[%s891 + $0x1f0] sm:$0xff]
        %v2749 = vld [vmem:[%s891 + $0x1f8] sm:$0xff]
        %v2750 = vld [vmem:[%s900] sm:$0x3]
        %v2752 = vlaneseq
        %v2753 = vshrl.u32 %v2752, 7
        %v2754 = vsub.s32 0, %v2753
        %v2755 = vrot.slane %v2750, %v2754
        %v2756 = vlaneseq
        %v2757 = vshrl.u32 %v2756, 7
        %v2758 = vsub.s32 1, %v2757
        %v2759 = vrot.slane %v2750, %v2758
        %v2826 = vunpack.c.l.b16 %v2686
        %v2827 = vunpack.c.h.b16 %v2686
        %v2828 = vunpack.c.l.b16 %v2687
        %v2829 = vunpack.c.h.b16 %v2687
        %v2830 = vunpack.c.l.b16 %v2688
        %v2831 = vunpack.c.h.b16 %v2688
        %v2832 = vunpack.c.l.b16 %v2689
        %v2833 = vunpack.c.h.b16 %v2689
        %v2834 = vunpack.c.l.b16 %v2690
        %v2835 = vunpack.c.h.b16 %v2690
        %v2836 = vunpack.c.l.b16 %v2691
        %v2837 = vunpack.c.h.b16 %v2691
        %v2838 = vunpack.c.l.b16 %v2692
        %v2839 = vunpack.c.h.b16 %v2692
        %v2840 = vunpack.c.l.b16 %v2693
        %v2841 = vunpack.c.h.b16 %v2693
        %v2842 = vunpack.c.l.b16 %v2694
        %v2843 = vunpack.c.h.b16 %v2694
        %v2844 = vunpack.c.l.b16 %v2695
        %v2845 = vunpack.c.h.b16 %v2695
        %v2846 = vunpack.c.l.b16 %v2696
        %v2847 = vunpack.c.h.b16 %v2696
        %v2848 = vunpack.c.l.b16 %v2697
        %v2849 = vunpack.c.h.b16 %v2697
        %v2850 = vunpack.c.l.b16 %v2698
        %v2851 = vunpack.c.h.b16 %v2698
        %v2852 = vunpack.c.l.b16 %v2699
        %v2853 = vunpack.c.h.b16 %v2699
        %v2854 = vunpack.c.l.b16 %v2700
        %v2855 = vunpack.c.h.b16 %v2700
        %v2856 = vunpack.c.l.b16 %v2701
        %v2857 = vunpack.c.h.b16 %v2701
        %v2858 = vunpack.c.l.b16 %v2702
        %v2859 = vunpack.c.h.b16 %v2702
        %v2860 = vunpack.c.l.b16 %v2703
        %v2861 = vunpack.c.h.b16 %v2703
        %v2862 = vunpack.c.l.b16 %v2704
        %v2863 = vunpack.c.h.b16 %v2704
        %v2864 = vunpack.c.l.b16 %v2705
        %v2865 = vunpack.c.h.b16 %v2705
        %v2866 = vunpack.c.l.b16 %v2706
        %v2867 = vunpack.c.h.b16 %v2706
        %v2868 = vunpack.c.l.b16 %v2707
        %v2869 = vunpack.c.h.b16 %v2707
        %v2870 = vunpack.c.l.b16 %v2708
        %v2871 = vunpack.c.h.b16 %v2708
        %v2872 = vunpack.c.l.b16 %v2709
        %v2873 = vunpack.c.h.b16 %v2709
        %v2874 = vunpack.c.l.b16 %v2710
        %v2875 = vunpack.c.h.b16 %v2710
        %v2876 = vunpack.c.l.b16 %v2711
        %v2877 = vunpack.c.h.b16 %v2711
        %v2878 = vunpack.c.l.b16 %v2712
        %v2879 = vunpack.c.h.b16 %v2712
        %v2880 = vunpack.c.l.b16 %v2713
        %v2881 = vunpack.c.h.b16 %v2713
        %v2882 = vunpack.c.l.b16 %v2714
        %v2883 = vunpack.c.h.b16 %v2714
        %v2884 = vunpack.c.l.b16 %v2715
        %v2885 = vunpack.c.h.b16 %v2715
        %v2886 = vunpack.c.l.b16 %v2716
        %v2887 = vunpack.c.h.b16 %v2716
        %v2888 = vunpack.c.l.b16 %v2717
        %v2889 = vunpack.c.h.b16 %v2717
        %v2890 = vunpack.c.l.b16 %v2718
        %v2891 = vunpack.c.h.b16 %v2718
        %v2892 = vunpack.c.l.b16 %v2719
        %v2893 = vunpack.c.h.b16 %v2719
        %v2894 = vunpack.c.l.b16 %v2720
        %v2895 = vunpack.c.h.b16 %v2720
        %v2896 = vunpack.c.l.b16 %v2721
        %v2897 = vunpack.c.h.b16 %v2721
        %v2898 = vunpack.c.l.b16 %v2722
        %v2899 = vunpack.c.h.b16 %v2722
        %v2900 = vunpack.c.l.b16 %v2723
        %v2901 = vunpack.c.h.b16 %v2723
        %v2902 = vunpack.c.l.b16 %v2724
        %v2903 = vunpack.c.h.b16 %v2724
        %v2904 = vunpack.c.l.b16 %v2725
        %v2905 = vunpack.c.h.b16 %v2725
        %v2906 = vunpack.c.l.b16 %v2726
        %v2907 = vunpack.c.h.b16 %v2726
        %v2908 = vunpack.c.l.b16 %v2727
        %v2909 = vunpack.c.h.b16 %v2727
        %v2910 = vunpack.c.l.b16 %v2728
        %v2911 = vunpack.c.h.b16 %v2728
        %v2912 = vunpack.c.l.b16 %v2729
        %v2913 = vunpack.c.h.b16 %v2729
        %v2914 = vunpack.c.l.b16 %v2730
        %v2915 = vunpack.c.h.b16 %v2730
        %v2916 = vunpack.c.l.b16 %v2731
        %v2917 = vunpack.c.h.b16 %v2731
        %v2918 = vunpack.c.l.b16 %v2732
        %v2919 = vunpack.c.h.b16 %v2732
        %v2920 = vunpack.c.l.b16 %v2733
        %v2921 = vunpack.c.h.b16 %v2733
        %v2922 = vunpack.c.l.b16 %v2734
        %v2923 = vunpack.c.h.b16 %v2734
        %v2924 = vunpack.c.l.b16 %v2735
        %v2925 = vunpack.c.h.b16 %v2735
        %v2926 = vunpack.c.l.b16 %v2736
        %v2927 = vunpack.c.h.b16 %v2736
        %v2928 = vunpack.c.l.b16 %v2737
        %v2929 = vunpack.c.h.b16 %v2737
        %v2930 = vunpack.c.l.b16 %v2738
        %v2931 = vunpack.c.h.b16 %v2738
        %v2932 = vunpack.c.l.b16 %v2739
        %v2933 = vunpack.c.h.b16 %v2739
        %v2934 = vunpack.c.l.b16 %v2740
        %v2935 = vunpack.c.h.b16 %v2740
        %v2936 = vunpack.c.l.b16 %v2741
        %v2937 = vunpack.c.h.b16 %v2741
        %v2938 = vunpack.c.l.b16 %v2742
        %v2939 = vunpack.c.h.b16 %v2742
        %v2940 = vunpack.c.l.b16 %v2743
        %v2941 = vunpack.c.h.b16 %v2743
        %v2942 = vunpack.c.l.b16 %v2744
        %v2943 = vunpack.c.h.b16 %v2744
        %v2944 = vunpack.c.l.b16 %v2745
        %v2945 = vunpack.c.h.b16 %v2745
        %v2946 = vunpack.c.l.b16 %v2746
        %v2947 = vunpack.c.h.b16 %v2746
        %v2948 = vunpack.c.l.b16 %v2747
        %v2949 = vunpack.c.h.b16 %v2747
        %v2950 = vunpack.c.l.b16 %v2748
        %v2951 = vunpack.c.h.b16 %v2748
        %v2952 = vunpack.c.l.b16 %v2749
        %v2953 = vunpack.c.h.b16 %v2749
        %v2954 = vpack.c.b16 %v2828, %v2826
        %v2955 = vpack.c.b16 %v2829, %v2827
        %v2956 = vpack.c.b16 %v2832, %v2830
        %v2957 = vpack.c.b16 %v2833, %v2831
        %v2958 = vpack.c.b16 %v2836, %v2834
        %v2959 = vpack.c.b16 %v2837, %v2835
        %v2960 = vpack.c.b16 %v2840, %v2838
        %v2961 = vpack.c.b16 %v2841, %v2839
        %v2962 = vpack.c.b16 %v2844, %v2842
        %v2963 = vpack.c.b16 %v2845, %v2843
        %v2964 = vpack.c.b16 %v2848, %v2846
        %v2965 = vpack.c.b16 %v2849, %v2847
        %v2966 = vpack.c.b16 %v2852, %v2850
        %v2967 = vpack.c.b16 %v2853, %v2851
        %v2968 = vpack.c.b16 %v2856, %v2854
        %v2969 = vpack.c.b16 %v2857, %v2855
        %v2970 = vpack.c.b16 %v2860, %v2858
        %v2971 = vpack.c.b16 %v2861, %v2859
        %v2972 = vpack.c.b16 %v2864, %v2862
        %v2973 = vpack.c.b16 %v2865, %v2863
        %v2974 = vpack.c.b16 %v2868, %v2866
        %v2975 = vpack.c.b16 %v2869, %v2867
        %v2976 = vpack.c.b16 %v2872, %v2870
        %v2977 = vpack.c.b16 %v2873, %v2871
        %v2978 = vpack.c.b16 %v2876, %v2874
        %v2979 = vpack.c.b16 %v2877, %v2875
        %v2980 = vpack.c.b16 %v2880, %v2878
        %v2981 = vpack.c.b16 %v2881, %v2879
        %v2982 = vpack.c.b16 %v2884, %v2882
        %v2983 = vpack.c.b16 %v2885, %v2883
        %v2984 = vpack.c.b16 %v2888, %v2886
        %v2985 = vpack.c.b16 %v2889, %v2887
        %v2986 = vpack.c.b16 %v2892, %v2890
        %v2987 = vpack.c.b16 %v2893, %v2891
        %v2988 = vpack.c.b16 %v2896, %v2894
        %v2989 = vpack.c.b16 %v2897, %v2895
        %v2990 = vpack.c.b16 %v2900, %v2898
        %v2991 = vpack.c.b16 %v2901, %v2899
        %v2992 = vpack.c.b16 %v2904, %v2902
        %v2993 = vpack.c.b16 %v2905, %v2903
        %v2994 = vpack.c.b16 %v2908, %v2906
        %v2995 = vpack.c.b16 %v2909, %v2907
        %v2996 = vpack.c.b16 %v2912, %v2910
        %v2997 = vpack.c.b16 %v2913, %v2911
        %v2998 = vpack.c.b16 %v2916, %v2914
        %v2999 = vpack.c.b16 %v2917, %v2915
        %v3000 = vpack.c.b16 %v2920, %v2918
        %v3001 = vpack.c.b16 %v2921, %v2919
        %v3002 = vpack.c.b16 %v2924, %v2922
        %v3003 = vpack.c.b16 %v2925, %v2923
        %v3004 = vpack.c.b16 %v2928, %v2926
        %v3005 = vpack.c.b16 %v2929, %v2927
        %v3006 = vpack.c.b16 %v2932, %v2930
        %v3007 = vpack.c.b16 %v2933, %v2931
        %v3008 = vpack.c.b16 %v2936, %v2934
        %v3009 = vpack.c.b16 %v2937, %v2935
        %v3010 = vpack.c.b16 %v2940, %v2938
        %v3011 = vpack.c.b16 %v2941, %v2939
        %v3012 = vpack.c.b16 %v2944, %v2942
        %v3013 = vpack.c.b16 %v2945, %v2943
        %v3014 = vpack.c.b16 %v2948, %v2946
        %v3015 = vpack.c.b16 %v2949, %v2947
        %v3016 = vpack.c.b16 %v2952, %v2950
        %v3017 = vpack.c.b16 %v2953, %v2951
        %3082 = vmatprep.subr.bf16.mxu0 %v2955
        %3083 = vmatpush1.bf16.msra.mxu0 %v2954
        %3084 = vmatprep.subr.bf16.mxu0 %v2957
        %3085 = vmatpush1.bf16.msra.mxu0 %v2956
        %3086 = vmatprep.subr.bf16.mxu0 %v2959
        %3087 = vmatpush1.bf16.msra.mxu0 %v2958
        %3088 = vmatprep.subr.bf16.mxu0 %v2961
        %3089 = vmatpush1.bf16.msra.mxu0 %v2960
        %3090 = vmatprep.subr.bf16.mxu0 %v2963
        %3091 = vmatpush1.bf16.msra.mxu0 %v2962
        %3092 = vmatprep.subr.bf16.mxu0 %v2965
        %3093 = vmatpush1.bf16.msra.mxu0 %v2964
        %3094 = vmatprep.subr.bf16.mxu0 %v2967
        %3095 = vmatpush1.bf16.msra.mxu0 %v2966
        %3096 = vmatprep.subr.bf16.mxu0 %v2969
        %3097 = vmatpush1.bf16.msra.mxu0 %v2968
        %3098 = vmatprep.subr.bf16.mxu0 %v2971
        %3099 = vmatpush1.bf16.msra.mxu0 %v2970
        %3100 = vmatprep.subr.bf16.mxu0 %v2973
        %3101 = vmatpush1.bf16.msra.mxu0 %v2972
        %3102 = vmatprep.subr.bf16.mxu0 %v2975
        %3103 = vmatpush1.bf16.msra.mxu0 %v2974
        %3104 = vmatprep.subr.bf16.mxu0 %v2977
        %3105 = vmatpush1.bf16.msra.mxu0 %v2976
        %3106 = vmatprep.subr.bf16.mxu0 %v2979
        %3107 = vmatpush1.bf16.msra.mxu0 %v2978
        %3108 = vmatprep.subr.bf16.mxu0 %v2981
        %3109 = vmatpush1.bf16.msra.mxu0 %v2980
        %3110 = vmatprep.subr.bf16.mxu0 %v2983
        %3111 = vmatpush1.bf16.msra.mxu0 %v2982
        %3112 = vmatprep.subr.bf16.mxu0 %v2985
        %3113 = vmatpush1.bf16.msra.mxu0 %v2984
        %3114 = vmatprep.mubr.bf16.mxu0 %v2683
        %3115 = vmatmul.mubr.bf16.gmra.mrb[0].mxu0 %v2682
        %v3116 = vpop.f32.mrb[0].mxu0
        %v3117 = vadd.f32 %v2755, %v3116
        %v3118 = vpop.f32.mrb[0].mxu0
        %v3119 = vadd.f32 %v2759, %v3118
        %v3120 = vpop.f32.mrb[0].mxu0
        %v3121 = vpop.f32.mrb[0].mxu0
        %3122 = vdwg.mxu0
        %3123 = vmatprep.subr.bf16.mxu0 %v2987
        %3124 = vmatpush1.bf16.msra.mxu0 %v2986
        %3125 = vmatprep.subr.bf16.mxu0 %v2989
        %3126 = vmatpush1.bf16.msra.mxu0 %v2988
        %3127 = vmatprep.subr.bf16.mxu0 %v2991
        %3128 = vmatpush1.bf16.msra.mxu0 %v2990
        %3129 = vmatprep.subr.bf16.mxu0 %v2993
        %3130 = vmatpush1.bf16.msra.mxu0 %v2992
        %3131 = vmatprep.subr.bf16.mxu0 %v2995
        %3132 = vmatpush1.bf16.msra.mxu0 %v2994
        %3133 = vmatprep.subr.bf16.mxu0 %v2997
        %3134 = vmatpush1.bf16.msra.mxu0 %v2996
        %3135 = vmatprep.subr.bf16.mxu0 %v2999
        %3136 = vmatpush1.bf16.msra.mxu0 %v2998
        %3137 = vmatprep.subr.bf16.mxu0 %v3001
        %3138 = vmatpush1.bf16.msra.mxu0 %v3000
        %3139 = vmatprep.subr.bf16.mxu0 %v3003
        %3140 = vmatpush1.bf16.msra.mxu0 %v3002
        %3141 = vmatprep.subr.bf16.mxu0 %v3005
        %3142 = vmatpush1.bf16.msra.mxu0 %v3004
        %3143 = vmatprep.subr.bf16.mxu0 %v3007
        %3144 = vmatpush1.bf16.msra.mxu0 %v3006
        %3145 = vmatprep.subr.bf16.mxu0 %v3009
        %3146 = vmatpush1.bf16.msra.mxu0 %v3008
        %3147 = vmatprep.subr.bf16.mxu0 %v3011
        %3148 = vmatpush1.bf16.msra.mxu0 %v3010
        %3149 = vmatprep.subr.bf16.mxu0 %v3013
        %3150 = vmatpush1.bf16.msra.mxu0 %v3012
        %3151 = vmatprep.subr.bf16.mxu0 %v3015
        %3152 = vmatpush1.bf16.msra.mxu0 %v3014
        %3153 = vmatprep.subr.bf16.mxu0 %v3017
        %3154 = vmatpush1.bf16.msra.mxu0 %v3016
        %3155 = vmatprep.mubr.bf16.mxu0 %v2685
        %3156 = vmatmul.mubr.bf16.gmra.mrb[0].mxu0 %v2684
        %v3157 = vpop.f32.mrb[0].mxu0
        %v3158 = vadd.f32 %v3117, %v3157
        %v3159 = vpop.f32.mrb[0].mxu0
        %v3160 = vadd.f32 %v3119, %v3159
        %v3161 = vpop.f32.mrb[0].mxu0
        %v3162 = vpop.f32.mrb[0].mxu0
        %3163 = vdwg.mxu0
        %v3164 = vmax.f32 %v3158, 0.0
        %v3165 = vmax.f32 %v3160, 0.0
        %v3166 = vsel %vm2595, %v3164, 0.0
        %v3167 = vsel %vm2595, %v3165, 0.0
        %v3168 = vadd.f32 %v3166, %v3167
        %3169 = vadd.xlane.f32.xlu0 %v3168
        %v3170 = vpop.xlane.xlu0 %3169
        %v3171 = vmul.f32 %v3170, 0.00390625
        %v3172 = vsub.f32 %v3164, %v3171
        %v3173 = vsub.f32 %v3165, %v3171
        %v3174 = vmul.f32 %v3172, %v3172
        %v3175 = vmul.f32 %v3173, %v3173
        %v3176 = vsel %vm2595, %v3174, 0.0
        %v3177 = vsel %vm2595, %v3175, 0.0
        %v3178 = vadd.f32 %v3176, %v3177
        %3179 = vadd.xlane.f32.xlu0 %v3178
        %v3180 = vpop.xlane.xlu0 %3179
        %v3181 = vmul.f32 %v3180, 0.00390625
        %v3182 = vadd.f32 %v3181, 1e-05
        %v3183 = vrsqrt.pop %v3182
        %v3184 = vmul.f32 %v3172, %v3183
        %v3185 = vmul.f32 %v3173, %v3183
        %v3186 = vld [vmem:[%s909] sm:$0x3]
        %v3188 = vlaneseq
        %v3189 = vshrl.u32 %v3188, 7
        %v3190 = vsub.s32 0, %v3189
        %v3191 = vrot.slane %v3186, %v3190
        %v3192 = vlaneseq
        %v3193 = vshrl.u32 %v3192, 7
        %v3194 = vsub.s32 1, %v3193
        %v3195 = vrot.slane %v3186, %v3194
        %v3198 = vmul.f32 %v3184, %v3191
        %v3199 = vmul.f32 %v3185, %v3195
        %v3200 = vld [vmem:[%s918] sm:$0x3]
        %v3202 = vlaneseq
        %v3203 = vshrl.u32 %v3202, 7
        %v3204 = vsub.s32 0, %v3203
        %v3205 = vrot.slane %v3200, %v3204
        %v3206 = vlaneseq
        %v3207 = vshrl.u32 %v3206, 7
        %v3208 = vsub.s32 1, %v3207
        %v3209 = vrot.slane %v3200, %v3208
        %v3212 = vadd.f32 %v3198, %v3205
        %v3213 = vadd.f32 %v3199, %v3209
        %v3214 = vpack.c.bf16 %v3212, %v3212
        %v3215 = vpack.c.bf16 %v3213, %v3213
        %v3216 = vld [vmem:[%s927] sm:$0xf]
        %v3217 = vld [vmem:[%s927 + $0x4] sm:$0xf]
        %v3218 = vld [vmem:[%s927 + $0x8] sm:$0xf]
        %v3219 = vld [vmem:[%s927 + $0xc] sm:$0xf]
        %v3220 = vld [vmem:[%s927 + $0x10] sm:$0xf]
        %v3221 = vld [vmem:[%s927 + $0x14] sm:$0xf]
        %v3222 = vld [vmem:[%s927 + $0x18] sm:$0xf]
        %v3223 = vld [vmem:[%s927 + $0x1c] sm:$0xf]
        %v3224 = vld [vmem:[%s927 + $0x20] sm:$0xf]
        %v3225 = vld [vmem:[%s927 + $0x24] sm:$0xf]
        %v3226 = vld [vmem:[%s927 + $0x28] sm:$0xf]
        %v3227 = vld [vmem:[%s927 + $0x2c] sm:$0xf]
        %v3228 = vld [vmem:[%s927 + $0x30] sm:$0xf]
        %v3229 = vld [vmem:[%s927 + $0x34] sm:$0xf]
        %v3230 = vld [vmem:[%s927 + $0x38] sm:$0xf]
        %v3231 = vld [vmem:[%s927 + $0x3c] sm:$0xf]
        %v3232 = vld [vmem:[%s927 + $0x40] sm:$0xf]
        %v3233 = vld [vmem:[%s927 + $0x44] sm:$0xf]
        %v3234 = vld [vmem:[%s927 + $0x48] sm:$0xf]
        %v3235 = vld [vmem:[%s927 + $0x4c] sm:$0xf]
        %v3236 = vld [vmem:[%s927 + $0x50] sm:$0xf]
        %v3237 = vld [vmem:[%s927 + $0x54] sm:$0xf]
        %v3238 = vld [vmem:[%s927 + $0x58] sm:$0xf]
        %v3239 = vld [vmem:[%s927 + $0x5c] sm:$0xf]
        %v3240 = vld [vmem:[%s927 + $0x60] sm:$0xf]
        %v3241 = vld [vmem:[%s927 + $0x64] sm:$0xf]
        %v3242 = vld [vmem:[%s927 + $0x68] sm:$0xf]
        %v3243 = vld [vmem:[%s927 + $0x6c] sm:$0xf]
        %v3244 = vld [vmem:[%s927 + $0x70] sm:$0xf]
        %v3245 = vld [vmem:[%s927 + $0x74] sm:$0xf]
        %v3246 = vld [vmem:[%s927 + $0x78] sm:$0xf]
        %v3247 = vld [vmem:[%s927 + $0x7c] sm:$0xf]
        %v3248 = vld [vmem:[%s935] sm:$0x1]
        %v3250 = vlaneseq
        %v3251 = vshrl.u32 %v3250, 7
        %v3252 = vsub.s32 0, %v3251
        %v3253 = vrot.slane %v3248, %v3252
        %v3287 = vunpack.c.l.b16 %v3216
        %v3288 = vunpack.c.l.b16 %v3217
        %v3289 = vunpack.c.l.b16 %v3218
        %v3290 = vunpack.c.l.b16 %v3219
        %v3291 = vunpack.c.l.b16 %v3220
        %v3292 = vunpack.c.l.b16 %v3221
        %v3293 = vunpack.c.l.b16 %v3222
        %v3294 = vunpack.c.l.b16 %v3223
        %v3295 = vunpack.c.l.b16 %v3224
        %v3296 = vunpack.c.l.b16 %v3225
        %v3297 = vunpack.c.l.b16 %v3226
        %v3298 = vunpack.c.l.b16 %v3227
        %v3299 = vunpack.c.l.b16 %v3228
        %v3300 = vunpack.c.l.b16 %v3229
        %v3301 = vunpack.c.l.b16 %v3230
        %v3302 = vunpack.c.l.b16 %v3231
        %v3303 = vunpack.c.l.b16 %v3232
        %v3304 = vunpack.c.l.b16 %v3233
        %v3305 = vunpack.c.l.b16 %v3234
        %v3306 = vunpack.c.l.b16 %v3235
        %v3307 = vunpack.c.l.b16 %v3236
        %v3308 = vunpack.c.l.b16 %v3237
        %v3309 = vunpack.c.l.b16 %v3238
        %v3310 = vunpack.c.l.b16 %v3239
        %v3311 = vunpack.c.l.b16 %v3240
        %v3312 = vunpack.c.l.b16 %v3241
        %v3313 = vunpack.c.l.b16 %v3242
        %v3314 = vunpack.c.l.b16 %v3243
        %v3315 = vunpack.c.l.b16 %v3244
        %v3316 = vunpack.c.l.b16 %v3245
        %v3317 = vunpack.c.l.b16 %v3246
        %v3318 = vunpack.c.l.b16 %v3247
        %v3319 = vpack.c.b16 %v3288, %v3287
        %v3320 = vpack.c.b16 %v3290, %v3289
        %v3321 = vpack.c.b16 %v3292, %v3291
        %v3322 = vpack.c.b16 %v3294, %v3293
        %v3323 = vpack.c.b16 %v3296, %v3295
        %v3324 = vpack.c.b16 %v3298, %v3297
        %v3325 = vpack.c.b16 %v3300, %v3299
        %v3326 = vpack.c.b16 %v3302, %v3301
        %v3327 = vpack.c.b16 %v3304, %v3303
        %v3328 = vpack.c.b16 %v3306, %v3305
        %v3329 = vpack.c.b16 %v3308, %v3307
        %v3330 = vpack.c.b16 %v3310, %v3309
        %v3331 = vpack.c.b16 %v3312, %v3311
        %v3332 = vpack.c.b16 %v3314, %v3313
        %v3333 = vpack.c.b16 %v3316, %v3315
        %v3334 = vpack.c.b16 %v3318, %v3317
        %3351 = vmatprep.subr.bf16.mxu0 0
        %3352 = vmatpush1.bf16.msra.mxu0 %v3319
        %3353 = vmatprep.subr.bf16.mxu0 0
        %3354 = vmatpush1.bf16.msra.mxu0 %v3320
        %3355 = vmatprep.subr.bf16.mxu0 0
        %3356 = vmatpush1.bf16.msra.mxu0 %v3321
        %3357 = vmatprep.subr.bf16.mxu0 0
        %3358 = vmatpush1.bf16.msra.mxu0 %v3322
        %3359 = vmatprep.subr.bf16.mxu0 0
        %3360 = vmatpush1.bf16.msra.mxu0 %v3323
        %3361 = vmatprep.subr.bf16.mxu0 0
        %3362 = vmatpush1.bf16.msra.mxu0 %v3324
        %3363 = vmatprep.subr.bf16.mxu0 0
        %3364 = vmatpush1.bf16.msra.mxu0 %v3325
        %3365 = vmatprep.subr.bf16.mxu0 0
        %3366 = vmatpush1.bf16.msra.mxu0 %v3326
        %3367 = vmatprep.subr.bf16.mxu0 0
        %3368 = vmatpush1.bf16.msra.mxu0 %v3327
        %3369 = vmatprep.subr.bf16.mxu0 0
        %3370 = vmatpush1.bf16.msra.mxu0 %v3328
        %3371 = vmatprep.subr.bf16.mxu0 0
        %3372 = vmatpush1.bf16.msra.mxu0 %v3329
        %3373 = vmatprep.subr.bf16.mxu0 0
        %3374 = vmatpush1.bf16.msra.mxu0 %v3330
        %3375 = vmatprep.subr.bf16.mxu0 0
        %3376 = vmatpush1.bf16.msra.mxu0 %v3331
        %3377 = vmatprep.subr.bf16.mxu0 0
        %3378 = vmatpush1.bf16.msra.mxu0 %v3332
        %3379 = vmatprep.subr.bf16.mxu0 0
        %3380 = vmatpush1.bf16.msra.mxu0 %v3333
        %3381 = vmatprep.subr.bf16.mxu0 0
        %3382 = vmatpush1.bf16.msra.mxu0 %v3334
        %3383 = vmatprep.mubr.bf16.mxu0 %v3215
        %3384 = vmatmul.mubr.bf16.gmra.mrb[0].mxu0 %v3214
        %v3385 = vpop.f32.mrb[0].mxu0
        %v3386 = vadd.f32 %v3253, %v3385
        %v3387 = vpop.f32.mrb[0].mxu0
        %v3388 = vpop.f32.mrb[0].mxu0
        %v3389 = vpop.f32.mrb[0].mxu0
        %3390 = vdwg.mxu0
        %v3391 = vmax.f32 %v3386, 0.0
        %v3392 = vsel %vm2595, %v3391, 0.0
        %3393 = vadd.xlane.f32.xlu0 %v3392
        %v3394 = vpop.xlane.xlu0 %3393
        %v3395 = vmul.f32 %v3394, 0.0078125
        %v3396 = vsub.f32 %v3391, %v3395
        %v3397 = vmul.f32 %v3396, %v3396
        %v3398 = vsel %vm2595, %v3397, 0.0
        %3399 = vadd.xlane.f32.xlu0 %v3398
        %v3400 = vpop.xlane.xlu0 %3399
        %v3401 = vmul.f32 %v3400, 0.0078125
        %v3402 = vadd.f32 %v3401, 1e-05
        %v3403 = vrsqrt.pop %v3402
        %v3404 = vmul.f32 %v3396, %v3403
        %v3405 = vld [vmem:[%s943] sm:$0x1]
        %v3407 = vlaneseq
        %v3408 = vshrl.u32 %v3407, 7
        %v3409 = vsub.s32 0, %v3408
        %v3410 = vrot.slane %v3405, %v3409
        %v3412 = vmul.f32 %v3404, %v3410
        %v3413 = vld [vmem:[%s951] sm:$0x1]
        %v3415 = vlaneseq
        %v3416 = vshrl.u32 %v3415, 7
        %v3417 = vsub.s32 0, %v3416
        %v3418 = vrot.slane %v3413, %v3417
        %v3420 = vadd.f32 %v3412, %v3418
        %v3421 = vpack.c.bf16 %v3420, %v3420
        %v3422 = vld [vmem:[%s960] sm:$0xf]
        %v3423 = vld [vmem:[%s960 + $0x4] sm:$0xf]
        %v3424 = vld [vmem:[%s960 + $0x8] sm:$0xf]
        %v3425 = vld [vmem:[%s960 + $0xc] sm:$0xf]
        %v3426 = vld [vmem:[%s960 + $0x10] sm:$0xf]
        %v3427 = vld [vmem:[%s960 + $0x14] sm:$0xf]
        %v3428 = vld [vmem:[%s960 + $0x18] sm:$0xf]
        %v3429 = vld [vmem:[%s960 + $0x1c] sm:$0xf]
        %v3430 = vld [vmem:[%s960 + $0x20] sm:$0xf]
        %v3431 = vld [vmem:[%s960 + $0x24] sm:$0xf]
        %v3432 = vld [vmem:[%s960 + $0x28] sm:$0xf]
        %v3433 = vld [vmem:[%s960 + $0x2c] sm:$0xf]
        %v3434 = vld [vmem:[%s960 + $0x30] sm:$0xf]
        %v3435 = vld [vmem:[%s960 + $0x34] sm:$0xf]
        %v3436 = vld [vmem:[%s960 + $0x38] sm:$0xf]
        %v3437 = vld [vmem:[%s960 + $0x3c] sm:$0xf]
        %v3438 = vld [vmem:[%s968] sm:$0x1]
        %v3440 = vlaneseq
        %v3441 = vshrl.u32 %v3440, 7
        %v3442 = vsub.s32 0, %v3441
        %v3443 = vrot.slane %v3438, %v3442
        %v3461 = vunpack.c.l.b16 %v3422
        %v3462 = vunpack.c.l.b16 %v3423
        %v3463 = vunpack.c.l.b16 %v3424
        %v3464 = vunpack.c.l.b16 %v3425
        %v3465 = vunpack.c.l.b16 %v3426
        %v3466 = vunpack.c.l.b16 %v3427
        %v3467 = vunpack.c.l.b16 %v3428
        %v3468 = vunpack.c.l.b16 %v3429
        %v3469 = vunpack.c.l.b16 %v3430
        %v3470 = vunpack.c.l.b16 %v3431
        %v3471 = vunpack.c.l.b16 %v3432
        %v3472 = vunpack.c.l.b16 %v3433
        %v3473 = vunpack.c.l.b16 %v3434
        %v3474 = vunpack.c.l.b16 %v3435
        %v3475 = vunpack.c.l.b16 %v3436
        %v3476 = vunpack.c.l.b16 %v3437
        %v3477 = vpack.c.b16 %v3462, %v3461
        %v3478 = vpack.c.b16 %v3464, %v3463
        %v3479 = vpack.c.b16 %v3466, %v3465
        %v3480 = vpack.c.b16 %v3468, %v3467
        %v3481 = vpack.c.b16 %v3470, %v3469
        %v3482 = vpack.c.b16 %v3472, %v3471
        %v3483 = vpack.c.b16 %v3474, %v3473
        %v3484 = vpack.c.b16 %v3476, %v3475
        %3493 = vmatprep.subr.bf16.mxu0 0
        %3494 = vmatpush1.bf16.msra.mxu0 %v3477
        %3495 = vmatprep.subr.bf16.mxu0 0
        %3496 = vmatpush1.bf16.msra.mxu0 %v3478
        %3497 = vmatprep.subr.bf16.mxu0 0
        %3498 = vmatpush1.bf16.msra.mxu0 %v3479
        %3499 = vmatprep.subr.bf16.mxu0 0
        %3500 = vmatpush1.bf16.msra.mxu0 %v3480
        %3501 = vmatprep.subr.bf16.mxu0 0
        %3502 = vmatpush1.bf16.msra.mxu0 %v3481
        %3503 = vmatprep.subr.bf16.mxu0 0
        %3504 = vmatpush1.bf16.msra.mxu0 %v3482
        %3505 = vmatprep.subr.bf16.mxu0 0
        %3506 = vmatpush1.bf16.msra.mxu0 %v3483
        %3507 = vmatprep.subr.bf16.mxu0 0
        %3508 = vmatpush1.bf16.msra.mxu0 %v3484
        %3509 = vmatprep.subr.bf16.mxu0 0
        %3510 = vmatpush1.bf16.msra.mxu0 0
        %3511 = vmatprep.subr.bf16.mxu0 0
        %3512 = vmatpush1.bf16.msra.mxu0 0
        %3513 = vmatprep.subr.bf16.mxu0 0
        %3514 = vmatpush1.bf16.msra.mxu0 0
        %3515 = vmatprep.subr.bf16.mxu0 0
        %3516 = vmatpush1.bf16.msra.mxu0 0
        %3517 = vmatprep.subr.bf16.mxu0 0
        %3518 = vmatpush1.bf16.msra.mxu0 0
        %3519 = vmatprep.subr.bf16.mxu0 0
        %3520 = vmatpush1.bf16.msra.mxu0 0
        %3521 = vmatprep.subr.bf16.mxu0 0
        %3522 = vmatpush1.bf16.msra.mxu0 0
        %3523 = vmatprep.subr.bf16.mxu0 0
        %3524 = vmatpush1.bf16.msra.mxu0 0
        %3525 = vmatprep.mubr.bf16.mxu0 0
        %3526 = vmatmul.mubr.bf16.gmra.mrb[0].mxu0 %v3421
        %v3527 = vpop.f32.mrb[0].mxu0
        %v3528 = vadd.f32 %v3443, %v3527
        %v3529 = vpop.f32.mrb[0].mxu0
        %v3530 = vpop.f32.mrb[0].mxu0
        %v3531 = vpop.f32.mrb[0].mxu0
        %3532 = vdwg.mxu0
        %v3533 = vmax.f32 %v3528, 0.0
        %v3534 = vlaneseq
        %v3535 = vand.u32 %v3534, 127
        %vm3536 = vcmp.lt.s32.totalorder %v3535, 100
        %v3537 = vsel %vm3536, 1, 0
        %v3538 = vcvt.s32.f32 %v3537
        %v3539 = vmul.f32 %v3533, %v3538
        %v3540 = vsel %vm2595, %v3539, 0.0
        %3541 = vadd.xlane.f32.xlu0 %v3540
        %v3542 = vpop.xlane.xlu0 %3541
        %v3543 = vmul.f32 %v3542, 0.01
        %v3544 = vsub.f32 %v3533, %v3543
        %v3545 = vmul.f32 %v3544, %v3538
        %v3546 = vmul.f32 %v3545, %v3545
        %v3547 = vsel %vm2595, %v3546, 0.0
        %3548 = vadd.xlane.f32.xlu0 %v3547
        %v3549 = vpop.xlane.xlu0 %3548
        %v3550 = vmul.f32 %v3549, 0.01
        %v3551 = vadd.f32 %v3550, 1e-05
        %v3552 = vrsqrt.pop %v3551
        %v3553 = vmul.f32 %v3545, %v3552
        %v3554 = vld [vmem:[%s976] sm:$0x1]
        %v3556 = vlaneseq
        %v3557 = vshrl.u32 %v3556, 7
        %v3558 = vsub.s32 0, %v3557
        %v3559 = vrot.slane %v3554, %v3558
        %v3561 = vmul.f32 %v3553, %v3559
        %v3562 = vld [vmem:[%s984] sm:$0x1]
        %v3564 = vlaneseq
        %v3565 = vshrl.u32 %v3564, 7
        %v3566 = vsub.s32 0, %v3565
        %v3567 = vrot.slane %v3562, %v3566
        %v3569 = vadd.f32 %v3561, %v3567
        %3570 = vst [vmem:[%s1114] sm:$0x3] %v3569
        %p3571 = scmp.lt.s32.totalorder %s55, 1
        %s3572 = scalar_select %p3571, %s55, 1
        %s3573 = smul.addr %s3572, 2
        %s3574 = scalar_lea.vmem %s17, %s3573
        // Predicated region
        $region153: #{cell_line_graph_forward.1} parent=87 // pred_check
          %p3575 = pneg %p515
        $region154: #{cell_line_graph_forward.1} parent=87 // pred_check_branch
          %3577 = sbr.rel (%p3575) target = $region156
        $region155: #{cell_line_graph_forward.1} parent=87 // pred_region
          _
        $region156: #{cell_line_graph_forward.1} parent=87 // pred_fallthru
          _
      $region88: #{cell_line_graph_forward.1} parent=5 // pred_fallthru
        _
      %p3578 = scmp.le.s32.totalorder 2, %s50
      // Predicated region
      $region157: #{cell_line_graph_forward.1} parent=5 // pred_check
        %p3579 = pneg %p3578
      $region158: #{cell_line_graph_forward.1} parent=5 // pred_check_branch
        %3581 = sbr.rel (%p3579) target = $region160
      $region159: #{cell_line_graph_forward.1} parent=5 // pred_region
        %s3582 = ssub.s32 %s50, 2
        // Predicated region
        $region161: #{cell_line_graph_forward.1} parent=159 // pred_check
          %p3583 = pneg %p521
        $region162: #{cell_line_graph_forward.1} parent=159 // pred_check_branch
          %3585 = sbr.rel (%p3583) target = $region164
        $region163: #{cell_line_graph_forward.1} parent=159 // pred_region
          %p3586 = scmp.lt.s32.totalorder %s56, 1
          %s3587 = scalar_select %p3586, %s56, 1
          %s3588 = smul.addr %s3587, 2
          %s3589 = scalar_lea.vmem %s17, %s3588
        $region164: #{cell_line_graph_forward.1} parent=159 // pred_fallthru
          _
      $region160: #{cell_line_graph_forward.1} parent=5 // pred_fallthru
        _
    $region6: #{cell_line_graph_forward.1} parent=1 // loop_footer
      %s54 = sadd.s32 1, %s50
    $region7: #{cell_line_graph_forward.1} parent=1 // loop_footer_branch
      %49 = sbr.rel target = $region3
    $region8: #{cell_line_graph_forward.1} parent=1 // loop_exit
      _
    %3590 = vsyncpa [#allocation3], 1
    %s3591 = scalar_lea.sflag [#allocation3], 1
    %3592 = vsyncpa %s3591, 1
    %3593 = vsyncpa [#allocation5], 1
    %s3594 = scalar_lea.sflag [#allocation5], 1
    %3595 = vsyncpa %s3594, 1
    %3596 = vsyncpa [#allocation8], 1
    %s3597 = scalar_lea.sflag [#allocation8], 1
    %3598 = vsyncpa %s3597, 1
    %3599 = vsyncpa [#allocation11], 1
    %s3600 = scalar_lea.sflag [#allocation11], 1
    %3601 = vsyncpa %s3600, 1
    %3602 = vsyncpa [#allocation14], 1
    %s3603 = scalar_lea.sflag [#allocation14], 1
    %3604 = vsyncpa %s3603, 1
    %3605 = vsyncpa [#allocation17], 1
    %s3606 = scalar_lea.sflag [#allocation17], 1
    %3607 = vsyncpa %s3606, 1
    %3608 = vsyncpa [#allocation20], 1
    %s3609 = scalar_lea.sflag [#allocation20], 1
    %3610 = vsyncpa %s3609, 1
    %3611 = vsyncpa [#allocation23], 1
    %s3612 = scalar_lea.sflag [#allocation23], 1
    %3613 = vsyncpa %s3612, 1
    %3614 = vsyncpa [#allocation26], 1
    %s3615 = scalar_lea.sflag [#allocation26], 1
    %3616 = vsyncpa %s3615, 1

</llo_original>
